<compile_context>
chip_gen: v5e
topology: v5e:2x2
jax: 0.10.0
libtpu: 0.0.40
codegen_flags: <defaults>
</compile_context>

<pallas_src>
import numpy as np
import jax
import jax.numpy as jnp
from jax import lax
from jax.experimental import pallas as pl
from jax.experimental.pallas import tpu as pltpu

EPS = 1e-5
SLOPE = 0.01          # nn.LeakyReLU() default negative_slope

# Configuration: Encoder_unified(in_img_size=32, intermediateResolutions=[8,8],
# latent_dim=32) with the module's fixed 1 input channel => num_pooling = 2.
IMG = 32
LAT = 32
C1, C2, CI = 32, 64, 8            # stage-1 ch, stage-2 ch, intermediate-conv ch
H1, H2 = 16, 8                    # spatial size after stage 1 / stage 2
K1PAD = 256                       # 5 taps * 36 padded cols = 180 -> zero-pad to 256


# ------------------------------ Pallas kernel ---------------------------------

def _lane_allreduce(v, group):
    """Butterfly sum over lane groups: every lane ends up with the sum of all
    lanes sharing the same (lane % group) -> per-channel totals, already
    broadcast back across the spatial lane groups.  Uses the XLU roll slot."""
    shift = v.shape[1] // 2
    while shift >= group:
        v = v + pltpu.roll(v, shift=shift, axis=1)
        shift //= 2
    return v


def _encoder_kernel(x1_ref, m1_ref, b1_ref, g1_ref, be1_ref,
                    m2_ref, b2_ref, g2_ref, be2_ref, hw_ref, hb_ref, out_ref):
    f32, bf16 = jnp.float32, jnp.bfloat16

    # ---- stage 1: Conv2d(1->32, 5x5, s2, p2) as ONE matmul + LN([16,16]) + LeakyReLU
    # acc1 rows = output rows h in phase order (0,2,..,14, 1,3,..,15); lanes = w*32 + c.
    acc1 = jnp.dot(x1_ref[0], m1_ref[...], preferred_element_type=f32) + b1_ref[...]
    sum1 = _lane_allreduce(jnp.sum(acc1, axis=0, keepdims=True), C1)
    xc1 = acc1 - sum1 * (1.0 / (H1 * H1))
    var1 = _lane_allreduce(jnp.sum(xc1 * xc1, axis=0, keepdims=True), C1) \
        * (1.0 / (H1 * H1))
    y1 = xc1 * lax.rsqrt(var1 + EPS) * g1_ref[...] + be1_ref[...]
    y1 = jnp.where(y1 >= 0.0, y1, SLOPE * y1)

    # ---- stage 2: Conv2d(32->64, 5x5, s2, p2) as 5 row-tap matmuls + LN([8,8]) + LeakyReLU
    # The H padding of the 5x5/s2 conv is realised with zero rows; the W padding
    # is folded into the M2 weights at prep time (pad columns multiply zeros).
    even, odd = y1[0:8], y1[8:16]                    # h = 0,2,..,14  /  1,3,..,15
    zrow = jnp.zeros((1, H1 * C1), f32)
    rows = [jnp.concatenate([zrow, even[0:7]], axis=0),   # tap row i = 0
            jnp.concatenate([zrow, odd[0:7]], axis=0),    # i = 1
            even,                                         # i = 2
            odd,                                          # i = 3
            jnp.concatenate([even[1:8], zrow], axis=0)]   # i = 4
    acc2 = jnp.zeros((H2, H2 * C2), f32)
    for i in range(5):                                   # static loop
        acc2 = acc2 + jnp.dot(rows[i].astype(bf16), m2_ref[i],
                              preferred_element_type=f32)
    acc2 = acc2 + b2_ref[...]                            # rows = oh2, lanes = ow2*64 + c
    sum2 = _lane_allreduce(jnp.sum(acc2, axis=0, keepdims=True), C2)
    xc2 = acc2 - sum2 * (1.0 / (H2 * H2))
    var2 = _lane_allreduce(jnp.sum(xc2 * xc2, axis=0, keepdims=True), C2) \
        * (1.0 / (H2 * H2))
    y2 = xc2 * lax.rsqrt(var2 + EPS) * g2_ref[...] + be2_ref[...]
    y2 = jnp.where(y2 >= 0.0, y2, SLOPE * y2)

    # ---- head: (1x1 intermediate conv -> NCHW flatten -> fc), composed at prep
    # time into one bf16 matmul, + tanh.  Dropout1d(0.1) is an inference identity.
    zfull = jnp.dot(y2.astype(bf16), hw_ref[...], preferred_element_type=f32)  # (8, 8*32)
    z = hb_ref[...]
    for r in range(H2):                                  # pick row r's own column block
        z = z + zfull[r:r + 1, r * LAT:(r + 1) * LAT]
    out_ref[0] = jnp.tanh(z)


# --------------------------- wrapper / param prep -----------------------------

def encoder_forward(kp, img_nchw):
    """img_nchw: (B, 1, 32, 32) -> (latent (B,32), intermediate feature channels)."""
    B = img_nchw.shape[0]
    # Tiny one-time row-phase gather of the raw image (the only XLA-side prep):
    # for kernel-row i, even/odd output rows h read padded input rows 2h+i.
    xp = jnp.pad(img_nchw[:, 0].astype(jnp.float32), ((0, 0), (2, 2), (2, 2)))  # (B,36,36)
    cols = []
    for i in range(5):
        ev = xp[:, i:i + 32:4, :]          # rows 2h+i for h = 0,2,..,14
        od = xp[:, i + 2:i + 32:4, :]      # rows 2h+i for h = 1,3,..,15
        cols.append(jnp.concatenate([ev, od], axis=1))           # (B,16,36)
    x1 = jnp.concatenate(cols, axis=2)                           # (B,16,180)
    x1 = jnp.pad(x1, ((0, 0), (0, 0), (0, K1PAD - 180))).astype(jnp.bfloat16)

    w2d = lambda b: (0, 0)
    w3d = lambda b: (0, 0, 0)
    out = pl.pallas_call(
        _encoder_kernel,
        grid=(B,),
        in_specs=[
            pl.BlockSpec((1, H1, K1PAD), lambda b: (b, 0, 0)),    # per-sample stage-1 rows
            pl.BlockSpec((K1PAD, H1 * C1), w2d),                  # M1  (bf16)
            pl.BlockSpec((1, H1 * C1), w2d),                      # bias1 (lane layout w*32+c)
            pl.BlockSpec((H1, H1 * C1), w2d),                     # LN1 gamma
            pl.BlockSpec((H1, H1 * C1), w2d),                     # LN1 beta
            pl.BlockSpec((5, H1 * C1, H2 * C2), w3d),             # M2  (bf16, per tap row)
            pl.BlockSpec((1, H2 * C2), w2d),                      # bias2
            pl.BlockSpec((H2, H2 * C2), w2d),                     # LN2 gamma
            pl.BlockSpec((H2, H2 * C2), w2d),                     # LN2 beta
            pl.BlockSpec((H2 * C2, H2 * LAT), w2d),               # composed head weight (bf16)
            pl.BlockSpec((1, LAT), w2d),                          # composed head bias
        ],
        out_specs=pl.BlockSpec((1, 1, LAT), lambda b: (b, 0, 0)),
        out_shape=jax.ShapeDtypeStruct((B, 1, LAT), jnp.float32),
        compiler_params=pltpu.CompilerParams(
            dimension_semantics=("parallel",)),
    )(x1, kp["m1"], kp["b1"], kp["g1"], kp["be1"],
      kp["m2"], kp["b2"], kp["g2"], kp["be2"], kp["hw"], kp["hb"])
    return out.reshape(B, LAT), kp["c_int"]


def prep_kernel_params(params):
    """Convert PyTorch-layout params to the kernel's dense matmul operands."""
    w1 = np.asarray(params["conv_w"][0], np.float32)        # (32,1,5,5)  OIHW
    b1 = np.asarray(params["conv_b"][0], np.float32)
    g1 = np.asarray(params["ln_g"][0], np.float32)          # (16,16)
    be1 = np.asarray(params["ln_b"][0], np.float32)
    w2 = np.asarray(params["conv_w"][1], np.float32)        # (64,32,5,5)
    b2 = np.asarray(params["conv_b"][1], np.float32)
    g2 = np.asarray(params["ln_g"][1], np.float32)          # (8,8)
    be2 = np.asarray(params["ln_b"][1], np.float32)
    icw = np.asarray(params["ic_w"], np.float32)[:, :, 0, 0]  # (8,64)
    icb = np.asarray(params["ic_b"], np.float32)
    fcw = np.asarray(params["fc_w"], np.float32)             # (32,512)
    fcb = np.asarray(params["fc_b"], np.float32)

    # Stage 1: one matmul.  M1[(i, wp) -> (ow, c)] realises the 5x5/s2 conv
    # along W for each of the 5 kernel rows.
    m1 = np.zeros((5 * 36, H1 * C1), np.float32)
    for i in range(5):
        for ow in range(H1):
            for j in range(5):
                m1[i * 36 + 2 * ow + j, ow * C1:(ow + 1) * C1] = w1[:, 0, i, j]
    m1 = np.pad(m1, ((0, K1PAD - 5 * 36), (0, 0)))
    hperm = list(range(0, H1, 2)) + list(range(1, H1, 2))    # kernel's output-row order
    b1row = np.tile(b1, H1)[None]
    g1mat = np.repeat(g1[hperm], C1, axis=1)
    be1mat = np.repeat(be1[hperm], C1, axis=1)

    # Stage 2: 5 per-kernel-row matmuls over (w, cin)-flattened rows.
    m2 = np.zeros((5, H1 * C1, H2 * C2), np.float32)
    for i in range(5):
        for ow in range(H2):
            for j in range(5):
                w_ = 2 * ow + j - 2
                if 0 <= w_ < H1:
                    m2[i, w_ * C1:(w_ + 1) * C1, ow * C2:(ow + 1) * C2] = w2[:, :, i, j].T
    b2row = np.tile(b2, H2)[None]
    g2mat = np.repeat(g2, C2, axis=1)
    be2mat = np.repeat(be2, C2, axis=1)

    # Head: fold the 1x1 intermediate conv + PyTorch NCHW flatten + fc into one
    # matmul whose columns are (output-row oh2, latent l).
    F = fcw.reshape(LAT, CI, H2, H2)                               # (l,k,h,w)
    wh = np.einsum("lkhw,kc->hwcl", F, icw)                        # (h, w, c, l)
    hw2 = wh.reshape(H2, H2 * C2, LAT).transpose(1, 0, 2).reshape(H2 * C2, H2 * LAT)
    hb = (fcb + np.einsum("lkhw,k->l", F, icb))[None]

    return dict(
        m1=jnp.asarray(m1, jnp.bfloat16), b1=jnp.asarray(b1row),
        g1=jnp.asarray(g1mat), be1=jnp.asarray(be1mat),
        m2=jnp.asarray(m2, jnp.bfloat16), b2=jnp.asarray(b2row),
        g2=jnp.asarray(g2mat), be2=jnp.asarray(be2mat),
        hw=jnp.asarray(hw2, jnp.bfloat16), hb=jnp.asarray(hb),
        c_int=CI)


# --------------------------- pure-JAX f32 reference ---------------------------

def reference_forward(params, img_nchw):
    """True f32 reference matching the PyTorch module (eval mode)."""
    x = img_nchw.astype(jnp.float32)
    dn = ("NCHW", "OIHW", "NCHW")
    for i in range(2):
        x = lax.conv_general_dilated(x, params["conv_w"][i], (2, 2),
                                     [(2, 2), (2, 2)], dimension_numbers=dn)
        x = x + params["conv_b"][i].reshape(1, -1, 1, 1)
        mean = jnp.mean(x, axis=(2, 3), keepdims=True)
        var = jnp.mean((x - mean) ** 2, axis=(2, 3), keepdims=True)
        x = (x - mean) / jnp.sqrt(var + EPS)
        x = x * params["ln_g"][i][None, None] + params["ln_b"][i][None, None]
        x = jnp.where(x >= 0.0, x, SLOPE * x)
    x = lax.conv_general_dilated(x, params["ic_w"], (1, 1), "SAME",
                                 dimension_numbers=dn)
    x = x + params["ic_b"].reshape(1, -1, 1, 1)
    flat = x.reshape(x.shape[0], -1)                    # NCHW flatten (PyTorch)
    z = flat @ params["fc_w"].T + params["fc_b"]
    return jnp.tanh(z)


# ------------------------------------ init ------------------------------------

def init_params(key):
    keys = iter(jax.random.split(key, 16))

    def rnd(shape, s=0.1):
        return s * jax.random.normal(next(keys), shape, jnp.float32)

    params = dict(conv_w=[], conv_b=[], ln_g=[], ln_b=[])
    prev = 1
    for i in range(2):                                  # num_pooling = 2
        filters = int(min(128, 32 * 2 ** i))
        params["conv_w"].append(rnd((filters, prev, 5, 5)))   # OIHW
        params["conv_b"].append(rnd((filters,)))
        h = IMG // 2 ** (i + 1)
        params["ln_g"].append(1.0 + rnd((h, h), 0.05))        # LayerNorm([H,W])
        params["ln_b"].append(rnd((h, h), 0.05))
        prev = filters
    c_int = prev // 8                                   # 8
    params["ic_w"] = rnd((c_int, prev, 1, 1))           # 1x1 conv OIHW
    params["ic_b"] = rnd((c_int,))
    last_d = c_int * (IMG // 4) ** 2                    # 512
    params["fc_w"] = rnd((LAT, last_d), 0.05)           # Linear (out, in)
    params["fc_b"] = rnd((LAT,), 0.05)
    return params


# ------------------------------------ main -------------------------------------

if __name__ == "__main__":
    key = jax.random.PRNGKey(0)
    pkey, xkey = jax.random.split(key)
    params = init_params(pkey)
    img = jax.random.normal(xkey, (2, 1, IMG, IMG), jnp.float32)

    kp = prep_kernel_params(params)
    z, inter_feat = encoder_forward(kp, img)
    z = jax.block_until_ready(z)
    assert z.shape == (2, LAT), z.shape
    assert inter_feat == CI, inter_feat

    # TODO(synk): Dropout1d(0.1) training-mode channel dropout is stochastic and
    # not modeled; inference mode is the identity (matched here).
    ref = jax.block_until_ready(reference_forward(params, img))
    err = float(jnp.max(jnp.abs(z - ref)))
    # Tolerance is against the TRUE f32 reference (not a bf16-degraded one), so
    # it reflects the genuine bf16-MXU error of the fused kernel.
    assert err < 5e-2, f"max abs err vs f32 reference: {err}"

    print("KERNEL_OK")
</pallas_src>

<mosaic_0001>
module attributes {stable_mosaic.version = 11 : i64} {
  func.func @_encoder_kernel(%arg0: i32, %arg1: memref<1x16x256xbf16, #tpu.memory_space<vmem>>, %arg2: memref<256x512xbf16, #tpu.memory_space<vmem>>, %arg3: memref<1x512xf32, #tpu.memory_space<vmem>>, %arg4: memref<16x512xf32, #tpu.memory_space<vmem>>, %arg5: memref<16x512xf32, #tpu.memory_space<vmem>>, %arg6: memref<5x512x512xbf16, #tpu.memory_space<vmem>>, %arg7: memref<1x512xf32, #tpu.memory_space<vmem>>, %arg8: memref<8x512xf32, #tpu.memory_space<vmem>>, %arg9: memref<8x512xf32, #tpu.memory_space<vmem>>, %arg10: memref<512x256xbf16, #tpu.memory_space<vmem>>, %arg11: memref<1x32xf32, #tpu.memory_space<vmem>>, %arg12: memref<1x1x32xf32, #tpu.memory_space<vmem>>) attributes {dimension_semantics = [#tpu.dimension_semantics<parallel>], iteration_bounds = array<i64: 2>, scalar_prefetch = 0 : i64, scratch_operands = 0 : i64, tpu.core_type = #tpu.core_type<tc>, window_params = [{transform_indices = @transform_0, window_bounds = array<i64: 1, 16, 256>}, {pipeline_mode = #tpu.pipeline_mode<synchronous>, transform_indices = @transform_1, window_bounds = array<i64: 256, 512>}, {pipeline_mode = #tpu.pipeline_mode<synchronous>, transform_indices = @transform_2, window_bounds = array<i64: 1, 512>}, {pipeline_mode = #tpu.pipeline_mode<synchronous>, transform_indices = @transform_3, window_bounds = array<i64: 16, 512>}, {pipeline_mode = #tpu.pipeline_mode<synchronous>, transform_indices = @transform_4, window_bounds = array<i64: 16, 512>}, {pipeline_mode = #tpu.pipeline_mode<synchronous>, transform_indices = @transform_5, window_bounds = array<i64: 5, 512, 512>}, {pipeline_mode = #tpu.pipeline_mode<synchronous>, transform_indices = @transform_6, window_bounds = array<i64: 1, 512>}, {pipeline_mode = #tpu.pipeline_mode<synchronous>, transform_indices = @transform_7, window_bounds = array<i64: 8, 512>}, {pipeline_mode = #tpu.pipeline_mode<synchronous>, transform_indices = @transform_8, window_bounds = array<i64: 8, 512>}, {pipeline_mode = #tpu.pipeline_mode<synchronous>, transform_indices = @transform_9, window_bounds = array<i64: 512, 256>}, {pipeline_mode = #tpu.pipeline_mode<synchronous>, transform_indices = @transform_10, window_bounds = array<i64: 1, 32>}, {transform_indices = @transform_11, window_bounds = array<i64: 1, 1, 32>}]} {
    %c0 = arith.constant 0 : index
    %c0_0 = arith.constant 0 : index
    %c0_1 = arith.constant 0 : index
    %0 = vector.load %arg1[%c0, %c0_0, %c0_1] : memref<1x16x256xbf16, #tpu.memory_space<vmem>>, vector<1x16x256xbf16>
    %1 = vector.shape_cast %0 : vector<1x16x256xbf16> to vector<16x256xbf16>
    %c0_2 = arith.constant 0 : index
    %c0_3 = arith.constant 0 : index
    %2 = vector.load %arg2[%c0_2, %c0_3] : memref<256x512xbf16, #tpu.memory_space<vmem>>, vector<256x512xbf16>
    %cst = arith.constant dense<0.000000e+00> : vector<16x512xf32>
    %3 = tpu.matmul %1, %2, %cst {dimension_numbers = #tpu.dot_dimension_numbers<[1], [0], [0], [1], [0, 0, 1, 1], [], []>} : vector<16x256xbf16>, vector<256x512xbf16>, vector<16x512xf32> -> vector<16x512xf32>
    %c0_4 = arith.constant 0 : index
    %c0_5 = arith.constant 0 : index
    %4 = vector.load %arg3[%c0_4, %c0_5] : memref<1x512xf32, #tpu.memory_space<vmem>>, vector<1x512xf32>
    %5 = vector.broadcast %4 : vector<1x512xf32> to vector<16x512xf32>
    %6 = arith.addf %3, %5 : vector<16x512xf32>
    %cst_6 = arith.constant dense<0.000000e+00> : vector<512xf32>
    %7 = vector.multi_reduction <add>, %6, %cst_6 [0] : vector<16x512xf32> to vector<512xf32>
    %8 = vector.shape_cast %7 : vector<512xf32> to vector<1x512xf32>
    %c256_i32 = arith.constant 256 : i32
    %9 = tpu.dynamic_rotate %8 by %c256_i32 dim 1 : vector<1x512xf32>, i32 -> vector<1x512xf32>
    %10 = arith.addf %8, %9 : vector<1x512xf32>
    %c128_i32 = arith.constant 128 : i32
    %11 = tpu.dynamic_rotate %10 by %c128_i32 dim 1 : vector<1x512xf32>, i32 -> vector<1x512xf32>
    %12 = arith.addf %10, %11 : vector<1x512xf32>
    %c64_i32 = arith.constant 64 : i32
    %13 = tpu.dynamic_rotate %12 by %c64_i32 dim 1 : vector<1x512xf32>, i32 -> vector<1x512xf32>
    %14 = arith.addf %12, %13 : vector<1x512xf32>
    %c32_i32 = arith.constant 32 : i32
    %15 = tpu.dynamic_rotate %14 by %c32_i32 dim 1 : vector<1x512xf32>, i32 -> vector<1x512xf32>
    %16 = arith.addf %14, %15 : vector<1x512xf32>
    %cst_7 = arith.constant 3.906250e-03 : f32
    %17 = vector.broadcast %cst_7 : f32 to vector<1x512xf32>
    %18 = arith.mulf %16, %17 : vector<1x512xf32>
    %19 = vector.broadcast %18 : vector<1x512xf32> to vector<16x512xf32>
    %20 = arith.subf %6, %19 : vector<16x512xf32>
    %21 = arith.mulf %20, %20 : vector<16x512xf32>
    %cst_8 = arith.constant dense<0.000000e+00> : vector<512xf32>
    %22 = vector.multi_reduction <add>, %21, %cst_8 [0] : vector<16x512xf32> to vector<512xf32>
    %23 = vector.shape_cast %22 : vector<512xf32> to vector<1x512xf32>
    %c256_i32_9 = arith.constant 256 : i32
    %24 = tpu.dynamic_rotate %23 by %c256_i32_9 dim 1 : vector<1x512xf32>, i32 -> vector<1x512xf32>
    %25 = arith.addf %23, %24 : vector<1x512xf32>
    %c128_i32_10 = arith.constant 128 : i32
    %26 = tpu.dynamic_rotate %25 by %c128_i32_10 dim 1 : vector<1x512xf32>, i32 -> vector<1x512xf32>
    %27 = arith.addf %25, %26 : vector<1x512xf32>
    %c64_i32_11 = arith.constant 64 : i32
    %28 = tpu.dynamic_rotate %27 by %c64_i32_11 dim 1 : vector<1x512xf32>, i32 -> vector<1x512xf32>
    %29 = arith.addf %27, %28 : vector<1x512xf32>
    %c32_i32_12 = arith.constant 32 : i32
    %30 = tpu.dynamic_rotate %29 by %c32_i32_12 dim 1 : vector<1x512xf32>, i32 -> vector<1x512xf32>
    %31 = arith.addf %29, %30 : vector<1x512xf32>
    %cst_13 = arith.constant 3.906250e-03 : f32
    %32 = vector.broadcast %cst_13 : f32 to vector<1x512xf32>
    %33 = arith.mulf %31, %32 : vector<1x512xf32>
    %cst_14 = arith.constant 9.99999974E-6 : f32
    %34 = vector.broadcast %cst_14 : f32 to vector<1x512xf32>
    %35 = arith.addf %33, %34 : vector<1x512xf32>
    %36 = math.rsqrt %35 : vector<1x512xf32>
    %37 = vector.broadcast %36 : vector<1x512xf32> to vector<16x512xf32>
    %38 = arith.mulf %20, %37 : vector<16x512xf32>
    %c0_15 = arith.constant 0 : index
    %c0_16 = arith.constant 0 : index
    %39 = vector.load %arg4[%c0_15, %c0_16] : memref<16x512xf32, #tpu.memory_space<vmem>>, vector<16x512xf32>
    %40 = arith.mulf %38, %39 : vector<16x512xf32>
    %c0_17 = arith.constant 0 : index
    %c0_18 = arith.constant 0 : index
    %41 = vector.load %arg5[%c0_17, %c0_18] : memref<16x512xf32, #tpu.memory_space<vmem>>, vector<16x512xf32>
    %42 = arith.addf %40, %41 : vector<16x512xf32>
    %cst_19 = arith.constant 0.000000e+00 : f32
    %43 = vector.broadcast %cst_19 : f32 to vector<16x512xf32>
    %44 = arith.cmpf oge, %42, %43 : vector<16x512xf32>
    %cst_20 = arith.constant 0.00999999977 : f32
    %45 = vector.broadcast %cst_20 : f32 to vector<16x512xf32>
    %46 = arith.mulf %45, %42 : vector<16x512xf32>
    %47 = arith.select %44, %42, %46 : vector<16x512xi1>, vector<16x512xf32>
    %48 = vector.extract_strided_slice %47 {offsets = [0, 0], sizes = [8, 512], strides = [1, 1]} : vector<16x512xf32> to vector<8x512xf32>
    %49 = vector.extract_strided_slice %47 {offsets = [8, 0], sizes = [8, 512], strides = [1, 1]} : vector<16x512xf32> to vector<8x512xf32>
    %cst_21 = arith.constant 0.000000e+00 : f32
    %50 = vector.broadcast %cst_21 : f32 to vector<1x512xf32>
    %51 = vector.extract_strided_slice %48 {offsets = [0, 0], sizes = [7, 512], strides = [1, 1]} : vector<8x512xf32> to vector<7x512xf32>
    %52 = tpu.concatenate %50, %51 in 0 : vector<1x512xf32>, vector<7x512xf32> -> vector<8x512xf32>
    %53 = vector.extract_strided_slice %49 {offsets = [0, 0], sizes = [7, 512], strides = [1, 1]} : vector<8x512xf32> to vector<7x512xf32>
    %54 = tpu.concatenate %50, %53 in 0 : vector<1x512xf32>, vector<7x512xf32> -> vector<8x512xf32>
    %55 = vector.extract_strided_slice %48 {offsets = [1, 0], sizes = [7, 512], strides = [1, 1]} : vector<8x512xf32> to vector<7x512xf32>
    %56 = tpu.concatenate %55, %50 in 0 : vector<7x512xf32>, vector<1x512xf32> -> vector<8x512xf32>
    %cst_22 = arith.constant 0.000000e+00 : f32
    %57 = vector.broadcast %cst_22 : f32 to vector<8x512xf32>
    %58 = arith.truncf %52 : vector<8x512xf32> to vector<8x512xbf16>
    %c0_23 = arith.constant 0 : index
    %c0_24 = arith.constant 0 : index
    %c0_25 = arith.constant 0 : index
    %59 = vector.load %arg6[%c0_23, %c0_24, %c0_25] : memref<5x512x512xbf16, #tpu.memory_space<vmem>>, vector<1x512x512xbf16>
    %60 = vector.shape_cast %59 : vector<1x512x512xbf16> to vector<512x512xbf16>
    %cst_26 = arith.constant dense<0.000000e+00> : vector<8x512xf32>
    %61 = tpu.matmul %58, %60, %cst_26 {dimension_numbers = #tpu.dot_dimension_numbers<[1], [0], [0], [1], [0, 0, 1, 1], [], []>} : vector<8x512xbf16>, vector<512x512xbf16>, vector<8x512xf32> -> vector<8x512xf32>
    %62 = arith.addf %57, %61 : vector<8x512xf32>
    %63 = arith.truncf %54 : vector<8x512xf32> to vector<8x512xbf16>
    %c1 = arith.constant 1 : index
    %c0_27 = arith.constant 0 : index
    %c0_28 = arith.constant 0 : index
    %64 = vector.load %arg6[%c1, %c0_27, %c0_28] : memref<5x512x512xbf16, #tpu.memory_space<vmem>>, vector<1x512x512xbf16>
    %65 = vector.shape_cast %64 : vector<1x512x512xbf16> to vector<512x512xbf16>
    %cst_29 = arith.constant dense<0.000000e+00> : vector<8x512xf32>
    %66 = tpu.matmul %63, %65, %cst_29 {dimension_numbers = #tpu.dot_dimension_numbers<[1], [0], [0], [1], [0, 0, 1, 1], [], []>} : vector<8x512xbf16>, vector<512x512xbf16>, vector<8x512xf32> -> vector<8x512xf32>
    %67 = arith.addf %62, %66 : vector<8x512xf32>
    %68 = arith.truncf %48 : vector<8x512xf32> to vector<8x512xbf16>
    %c2 = arith.constant 2 : index
    %c0_30 = arith.constant 0 : index
    %c0_31 = arith.constant 0 : index
    %69 = vector.load %arg6[%c2, %c0_30, %c0_31] : memref<5x512x512xbf16, #tpu.memory_space<vmem>>, vector<1x512x512xbf16>
    %70 = vector.shape_cast %69 : vector<1x512x512xbf16> to vector<512x512xbf16>
    %cst_32 = arith.constant dense<0.000000e+00> : vector<8x512xf32>
    %71 = tpu.matmul %68, %70, %cst_32 {dimension_numbers = #tpu.dot_dimension_numbers<[1], [0], [0], [1], [0, 0, 1, 1], [], []>} : vector<8x512xbf16>, vector<512x512xbf16>, vector<8x512xf32> -> vector<8x512xf32>
    %72 = arith.addf %67, %71 : vector<8x512xf32>
    %73 = arith.truncf %49 : vector<8x512xf32> to vector<8x512xbf16>
    %c3 = arith.constant 3 : index
    %c0_33 = arith.constant 0 : index
    %c0_34 = arith.constant 0 : index
    %74 = vector.load %arg6[%c3, %c0_33, %c0_34] : memref<5x512x512xbf16, #tpu.memory_space<vmem>>, vector<1x512x512xbf16>
    %75 = vector.shape_cast %74 : vector<1x512x512xbf16> to vector<512x512xbf16>
    %cst_35 = arith.constant dense<0.000000e+00> : vector<8x512xf32>
    %76 = tpu.matmul %73, %75, %cst_35 {dimension_numbers = #tpu.dot_dimension_numbers<[1], [0], [0], [1], [0, 0, 1, 1], [], []>} : vector<8x512xbf16>, vector<512x512xbf16>, vector<8x512xf32> -> vector<8x512xf32>
    %77 = arith.addf %72, %76 : vector<8x512xf32>
    %78 = arith.truncf %56 : vector<8x512xf32> to vector<8x512xbf16>
    %c4 = arith.constant 4 : index
    %c0_36 = arith.constant 0 : index
    %c0_37 = arith.constant 0 : index
    %79 = vector.load %arg6[%c4, %c0_36, %c0_37] : memref<5x512x512xbf16, #tpu.memory_space<vmem>>, vector<1x512x512xbf16>
    %80 = vector.shape_cast %79 : vector<1x512x512xbf16> to vector<512x512xbf16>
    %cst_38 = arith.constant dense<0.000000e+00> : vector<8x512xf32>
    %81 = tpu.matmul %78, %80, %cst_38 {dimension_numbers = #tpu.dot_dimension_numbers<[1], [0], [0], [1], [0, 0, 1, 1], [], []>} : vector<8x512xbf16>, vector<512x512xbf16>, vector<8x512xf32> -> vector<8x512xf32>
    %82 = arith.addf %77, %81 : vector<8x512xf32>
    %c0_39 = arith.constant 0 : index
    %c0_40 = arith.constant 0 : index
    %83 = vector.load %arg7[%c0_39, %c0_40] : memref<1x512xf32, #tpu.memory_space<vmem>>, vector<1x512xf32>
    %84 = vector.broadcast %83 : vector<1x512xf32> to vector<8x512xf32>
    %85 = arith.addf %82, %84 : vector<8x512xf32>
    %cst_41 = arith.constant dense<0.000000e+00> : vector<512xf32>
    %86 = vector.multi_reduction <add>, %85, %cst_41 [0] : vector<8x512xf32> to vector<512xf32>
    %87 = vector.shape_cast %86 : vector<512xf32> to vector<1x512xf32>
    %c256_i32_42 = arith.constant 256 : i32
    %88 = tpu.dynamic_rotate %87 by %c256_i32_42 dim 1 : vector<1x512xf32>, i32 -> vector<1x512xf32>
    %89 = arith.addf %87, %88 : vector<1x512xf32>
    %c128_i32_43 = arith.constant 128 : i32
    %90 = tpu.dynamic_rotate %89 by %c128_i32_43 dim 1 : vector<1x512xf32>, i32 -> vector<1x512xf32>
    %91 = arith.addf %89, %90 : vector<1x512xf32>
    %c64_i32_44 = arith.constant 64 : i32
    %92 = tpu.dynamic_rotate %91 by %c64_i32_44 dim 1 : vector<1x512xf32>, i32 -> vector<1x512xf32>
    %93 = arith.addf %91, %92 : vector<1x512xf32>
    %cst_45 = arith.constant 1.562500e-02 : f32
    %94 = vector.broadcast %cst_45 : f32 to vector<1x512xf32>
    %95 = arith.mulf %93, %94 : vector<1x512xf32>
    %96 = vector.broadcast %95 : vector<1x512xf32> to vector<8x512xf32>
    %97 = arith.subf %85, %96 : vector<8x512xf32>
    %98 = arith.mulf %97, %97 : vector<8x512xf32>
    %cst_46 = arith.constant dense<0.000000e+00> : vector<512xf32>
    %99 = vector.multi_reduction <add>, %98, %cst_46 [0] : vector<8x512xf32> to vector<512xf32>
    %100 = vector.shape_cast %99 : vector<512xf32> to vector<1x512xf32>
    %c256_i32_47 = arith.constant 256 : i32
    %101 = tpu.dynamic_rotate %100 by %c256_i32_47 dim 1 : vector<1x512xf32>, i32 -> vector<1x512xf32>
    %102 = arith.addf %100, %101 : vector<1x512xf32>
    %c128_i32_48 = arith.constant 128 : i32
    %103 = tpu.dynamic_rotate %102 by %c128_i32_48 dim 1 : vector<1x512xf32>, i32 -> vector<1x512xf32>
    %104 = arith.addf %102, %103 : vector<1x512xf32>
    %c64_i32_49 = arith.constant 64 : i32
    %105 = tpu.dynamic_rotate %104 by %c64_i32_49 dim 1 : vector<1x512xf32>, i32 -> vector<1x512xf32>
    %106 = arith.addf %104, %105 : vector<1x512xf32>
    %cst_50 = arith.constant 1.562500e-02 : f32
    %107 = vector.broadcast %cst_50 : f32 to vector<1x512xf32>
    %108 = arith.mulf %106, %107 : vector<1x512xf32>
    %cst_51 = arith.constant 9.99999974E-6 : f32
    %109 = vector.broadcast %cst_51 : f32 to vector<1x512xf32>
    %110 = arith.addf %108, %109 : vector<1x512xf32>
    %111 = math.rsqrt %110 : vector<1x512xf32>
    %112 = vector.broadcast %111 : vector<1x512xf32> to vector<8x512xf32>
    %113 = arith.mulf %97, %112 : vector<8x512xf32>
    %c0_52 = arith.constant 0 : index
    %c0_53 = arith.constant 0 : index
    %114 = vector.load %arg8[%c0_52, %c0_53] : memref<8x512xf32, #tpu.memory_space<vmem>>, vector<8x512xf32>
    %115 = arith.mulf %113, %114 : vector<8x512xf32>
    %c0_54 = arith.constant 0 : index
    %c0_55 = arith.constant 0 : index
    %116 = vector.load %arg9[%c0_54, %c0_55] : memref<8x512xf32, #tpu.memory_space<vmem>>, vector<8x512xf32>
    %117 = arith.addf %115, %116 : vector<8x512xf32>
    %cst_56 = arith.constant 0.000000e+00 : f32
    %118 = vector.broadcast %cst_56 : f32 to vector<8x512xf32>
    %119 = arith.cmpf oge, %117, %118 : vector<8x512xf32>
    %cst_57 = arith.constant 0.00999999977 : f32
    %120 = vector.broadcast %cst_57 : f32 to vector<8x512xf32>
    %121 = arith.mulf %120, %117 : vector<8x512xf32>
    %122 = arith.select %119, %117, %121 : vector<8x512xi1>, vector<8x512xf32>
    %123 = arith.truncf %122 : vector<8x512xf32> to vector<8x512xbf16>
    %c0_58 = arith.constant 0 : index
    %c0_59 = arith.constant 0 : index
    %124 = vector.load %arg10[%c0_58, %c0_59] : memref<512x256xbf16, #tpu.memory_space<vmem>>, vector<512x256xbf16>
    %cst_60 = arith.constant dense<0.000000e+00> : vector<8x256xf32>
    %125 = tpu.matmul %123, %124, %cst_60 {dimension_numbers = #tpu.dot_dimension_numbers<[1], [0], [0], [1], [0, 0, 1, 1], [], []>} : vector<8x512xbf16>, vector<512x256xbf16>, vector<8x256xf32> -> vector<8x256xf32>
    %c0_61 = arith.constant 0 : index
    %c0_62 = arith.constant 0 : index
    %126 = vector.load %arg11[%c0_61, %c0_62] : memref<1x32xf32, #tpu.memory_space<vmem>>, vector<1x32xf32>
    %127 = vector.extract_strided_slice %125 {offsets = [0, 0], sizes = [1, 32], strides = [1, 1]} : vector<8x256xf32> to vector<1x32xf32>
    %128 = arith.addf %126, %127 : vector<1x32xf32>
    %129 = vector.extract_strided_slice %125 {offsets = [1, 32], sizes = [1, 32], strides = [1, 1]} : vector<8x256xf32> to vector<1x32xf32>
    %130 = arith.addf %128, %129 : vector<1x32xf32>
    %131 = vector.extract_strided_slice %125 {offsets = [2, 64], sizes = [1, 32], strides = [1, 1]} : vector<8x256xf32> to vector<1x32xf32>
    %132 = arith.addf %130, %131 : vector<1x32xf32>
    %133 = vector.extract_strided_slice %125 {offsets = [3, 96], sizes = [1, 32], strides = [1, 1]} : vector<8x256xf32> to vector<1x32xf32>
    %134 = arith.addf %132, %133 : vector<1x32xf32>
    %135 = vector.extract_strided_slice %125 {offsets = [4, 128], sizes = [1, 32], strides = [1, 1]} : vector<8x256xf32> to vector<1x32xf32>
    %136 = arith.addf %134, %135 : vector<1x32xf32>
    %137 = vector.extract_strided_slice %125 {offsets = [5, 160], sizes = [1, 32], strides = [1, 1]} : vector<8x256xf32> to vector<1x32xf32>
    %138 = arith.addf %136, %137 : vector<1x32xf32>
    %139 = vector.extract_strided_slice %125 {offsets = [6, 192], sizes = [1, 32], strides = [1, 1]} : vector<8x256xf32> to vector<1x32xf32>
    %140 = arith.addf %138, %139 : vector<1x32xf32>
    %141 = vector.extract_strided_slice %125 {offsets = [7, 224], sizes = [1, 32], strides = [1, 1]} : vector<8x256xf32> to vector<1x32xf32>
    %142 = arith.addf %140, %141 : vector<1x32xf32>
    %143 = math.tanh %142 : vector<1x32xf32>
    %c0_63 = arith.constant 0 : index
    %c0_64 = arith.constant 0 : index
    %c0_65 = arith.constant 0 : index
    %144 = vector.load %arg12[%c0_63, %c0_64, %c0_65] : memref<1x1x32xf32, #tpu.memory_space<vmem>>, vector<1x1x32xf32>
    %145 = vector.shape_cast %144 : vector<1x1x32xf32> to vector<1x32xf32>
    %146 = vector.shape_cast %143 : vector<1x32xf32> to vector<1x1x32xf32>
    tpu.vector_store %arg12[%c0_63, %c0_64, %c0_65], %146 {strides = array<i32>} : memref<1x1x32xf32, #tpu.memory_space<vmem>>, vector<1x1x32xf32>,
    return
  }
  func.func @transform_0(%arg0: i32) -> (i32, i32, i32) {
    %c0_i32 = arith.constant 0 : i32
    %c0_i32_0 = arith.constant 0 : i32
    %c0_i32_1 = arith.constant 0 : i32
    return %arg0, %c0_i32, %c0_i32_0 : i32, i32, i32
  }
  func.func @transform_1(%arg0: i32) -> (i32, i32) {
    %c0_i32 = arith.constant 0 : i32
    %c0_i32_0 = arith.constant 0 : i32
    %c0_i32_1 = arith.constant 0 : i32
    return %c0_i32, %c0_i32_0 : i32, i32
  }
  func.func @transform_2(%arg0: i32) -> (i32, i32) {
    %c0_i32 = arith.constant 0 : i32
    %c0_i32_0 = arith.constant 0 : i32
    %c0_i32_1 = arith.constant 0 : i32
    return %c0_i32, %c0_i32_0 : i32, i32
  }
  func.func @transform_3(%arg0: i32) -> (i32, i32) {
    %c0_i32 = arith.constant 0 : i32
    %c0_i32_0 = arith.constant 0 : i32
    %c0_i32_1 = arith.constant 0 : i32
    return %c0_i32, %c0_i32_0 : i32, i32
  }
  func.func @transform_4(%arg0: i32) -> (i32, i32) {
    %c0_i32 = arith.constant 0 : i32
    %c0_i32_0 = arith.constant 0 : i32
    %c0_i32_1 = arith.constant 0 : i32
    return %c0_i32, %c0_i32_0 : i32, i32
  }
  func.func @transform_5(%arg0: i32) -> (i32, i32, i32) {
    %c0_i32 = arith.constant 0 : i32
    %c0_i32_0 = arith.constant 0 : i32
    %c0_i32_1 = arith.constant 0 : i32
    %c0_i32_2 = arith.constant 0 : i32
    return %c0_i32, %c0_i32_0, %c0_i32_1 : i32, i32, i32
  }
  func.func @transform_6(%arg0: i32) -> (i32, i32) {
    %c0_i32 = arith.constant 0 : i32
    %c0_i32_0 = arith.constant 0 : i32
    %c0_i32_1 = arith.constant 0 : i32
    return %c0_i32, %c0_i32_0 : i32, i32
  }
  func.func @transform_7(%arg0: i32) -> (i32, i32) {
    %c0_i32 = arith.constant 0 : i32
    %c0_i32_0 = arith.constant 0 : i32
    %c0_i32_1 = arith.constant 0 : i32
    return %c0_i32, %c0_i32_0 : i32, i32
  }
  func.func @transform_8(%arg0: i32) -> (i32, i32) {
    %c0_i32 = arith.constant 0 : i32
    %c0_i32_0 = arith.constant 0 : i32
    %c0_i32_1 = arith.constant 0 : i32
    return %c0_i32, %c0_i32_0 : i32, i32
  }
  func.func @transform_9(%arg0: i32) -> (i32, i32) {
    %c0_i32 = arith.constant 0 : i32
    %c0_i32_0 = arith.constant 0 : i32
    %c0_i32_1 = arith.constant 0 : i32
    return %c0_i32, %c0_i32_0 : i32, i32
  }
  func.func @transform_10(%arg0: i32) -> (i32, i32) {
    %c0_i32 = arith.constant 0 : i32
    %c0_i32_0 = arith.constant 0 : i32
    %c0_i32_1 = arith.constant 0 : i32
    return %c0_i32, %c0_i32_0 : i32, i32
  }
  func.func @transform_11(%arg0: i32) -> (i32, i32, i32) {
    %c0_i32 = arith.constant 0 : i32
    %c0_i32_0 = arith.constant 0 : i32
    %c0_i32_1 = arith.constant 0 : i32
    return %arg0, %c0_i32, %c0_i32_0 : i32, i32, i32
  }
}

</mosaic_0001>

<llo_original>
// kernel: tpu_custom_call.1
$region0: #{tpu_custom_call.1}
  #allocation0 [shape = 'u32[]', space=smem, size = 0x4, offset = 0x4, fixed_abs, tag = 'smem constant byte address 0x4 - core index']
  #allocation1 [shape = 'u32[72,128]{1,0:T(1,128)}', space=vmem, size = 0x9000, scoped, tag = 'internal scratch']
  %s0 = inlined_call_operand.hbm [shape: bf16[2,16,256], index: 0, kind: input, shape index: {}]
  %s1 = inlined_call_operand.hbm [shape: bf16[256,512], index: 1, kind: input, shape index: {}]
  %s2 = inlined_call_operand.hbm [shape: f32[1,512], index: 2, kind: input, shape index: {}]
  %s3 = inlined_call_operand.hbm [shape: f32[16,512], index: 3, kind: input, shape index: {}]
  %s4 = inlined_call_operand.hbm [shape: f32[16,512], index: 4, kind: input, shape index: {}]
  %s5 = inlined_call_operand.hbm [shape: bf16[5,512,512], index: 5, kind: input, shape index: {}]
  %s6 = inlined_call_operand.hbm [shape: f32[1,512], index: 6, kind: input, shape index: {}]
  %s7 = inlined_call_operand.hbm [shape: f32[8,512], index: 7, kind: input, shape index: {}]
  %s8 = inlined_call_operand.hbm [shape: f32[8,512], index: 8, kind: input, shape index: {}]
  %s9 = inlined_call_operand.hbm [shape: bf16[512,256], index: 9, kind: input, shape index: {}]
  %s10 = inlined_call_operand.hbm [shape: f32[1,32], index: 10, kind: input, shape index: {}]
  %s11 = inlined_call_operand.hbm [shape: f32[2,1,32], index: 11, kind: output, shape index: {}]
  %s12 = sld [smem:[#allocation0]]
  $region121: #{tpu_custom_call.1} parent=0
    _
  %s14 = ssub.s32 1, %s12
  %s15 = scalar_select 0, %s14, %s12
  $region1: #{tpu_custom_call.1} parent=0
    #allocation2 [shape = 'u8[16384]{0}', space=vmem, size = 0x4000, scoped, tag = 'input window, operand 0']
    #allocation3 [shape = 's32[2]{0}', space=sflag, size = 0x8, scoped, tag = 'scoped memory for tpu_custom_call.1']
    #allocation4 [shape = 's32[2]{0}', space=sflag, size = 0x8, scoped, tag = 'scoped memory for tpu_custom_call.1']
    #allocation5 [shape = 'u8[262144]{0}', space=vmem, size = 0x40000, scoped, tag = 'input window, operand 1, single buffered']
    #allocation6 [shape = 's32[1]{0}', space=sflag, size = 0x4, scoped, tag = 'scoped memory for tpu_custom_call.1']
    #allocation7 [shape = 'u8[2048]{0}', space=vmem, size = 0x800, scoped, tag = 'input window, operand 2, single buffered']
    #allocation8 [shape = 'u8[32768]{0}', space=vmem, size = 0x8000, scoped, tag = 'input window, operand 3, single buffered']
    #allocation9 [shape = 's32[1]{0}', space=sflag, size = 0x4, scoped, tag = 'scoped memory for tpu_custom_call.1']
    #allocation10 [shape = 'u8[32768]{0}', space=vmem, size = 0x8000, scoped, tag = 'input window, operand 4, single buffered']
    #allocation11 [shape = 'u8[2621440]{0}', space=vmem, size = 0x280000, scoped, tag = 'input window, operand 5, single buffered']
    #allocation12 [shape = 's32[1]{0}', space=sflag, size = 0x4, scoped, tag = 'scoped memory for tpu_custom_call.1']
    #allocation13 [shape = 'u8[2048]{0}', space=vmem, size = 0x800, scoped, tag = 'input window, operand 6, single buffered']
    #allocation14 [shape = 'u8[16384]{0}', space=vmem, size = 0x4000, scoped, tag = 'input window, operand 7, single buffered']
    #allocation15 [shape = 's32[1]{0}', space=sflag, size = 0x4, scoped, tag = 'scoped memory for tpu_custom_call.1']
    #allocation16 [shape = 'u8[16384]{0}', space=vmem, size = 0x4000, scoped, tag = 'input window, operand 8, single buffered']
    #allocation17 [shape = 'u8[262144]{0}', space=vmem, size = 0x40000, scoped, tag = 'input window, operand 9, single buffered']
    #allocation18 [shape = 's32[1]{0}', space=sflag, size = 0x4, scoped, tag = 'scoped memory for tpu_custom_call.1']
    #allocation19 [shape = 'u8[512]{0}', space=vmem, size = 0x400, scoped, tag = 'input window, operand 10, single buffered']
    #allocation20 [shape = 'u8[1024]{0}', space=vmem, size = 0x400, scoped, tag = 'output window, operand 0']
    %16 = vsyncpa [#allocation3], 0
    %s17 = scalar_lea.sflag [#allocation3], 1
    %18 = vsyncpa %s17, 0
    %19 = vsyncpa [#allocation6], 0
    %20 = vsyncpa [#allocation9], 0
    %21 = vsyncpa [#allocation12], 0
    %22 = vsyncpa [#allocation15], 0
    %23 = vsyncpa [#allocation18], 0
    %24 = vsyncpa [#allocation4], 0
    %s25 = scalar_lea.sflag [#allocation4], 1
    %26 = vsyncpa %s25, 0
    loop: start=0, step=1, limit=4
    $region2: #{tpu_custom_call.1} parent=1 // loop_pre_header
      _
    $region3: #{tpu_custom_call.1} parent=1 // loop_header
      %s28 = sphi 0, %s32
      %p29 = scmp.ge.s32.totalorder %s28, 4
      %s38 = sphi 0, %s40
      %s41 = sphi 0, %s38
      %s42 = sphi 0, %s41
      %s58 = sphi 0, %s42
      %s62 = sphi 0, %s62
      %s64 = sphi 0, %s62
      %s65 = sphi 0, %s64
      %s79 = sphi 0, %s65
      %s83 = sphi 0, %s83
      %s85 = sphi 0, %s83
      %s86 = sphi 0, %s85
      %s100 = sphi 0, %s86
      %s104 = sphi 0, %s104
      %s106 = sphi 0, %s104
      %s107 = sphi 0, %s106
      %s121 = sphi 0, %s107
      %s125 = sphi 0, %s125
      %s127 = sphi 0, %s125
      %s128 = sphi 0, %s127
      %s142 = sphi 0, %s128
      %s146 = sphi 0, %s146
      %s148 = sphi 0, %s146
      %s149 = sphi 0, %s148
      %s163 = sphi 0, %s149
      %s167 = sphi 0, %s167
      %s169 = sphi 0, %s167
      %s170 = sphi 0, %s169
      %s184 = sphi 0, %s170
      %s188 = sphi 0, %s188
      %s190 = sphi 0, %s188
      %s191 = sphi 0, %s190
      %s205 = sphi 0, %s191
      %s209 = sphi 0, %s209
      %s211 = sphi 0, %s209
      %s212 = sphi 0, %s211
      %s226 = sphi 0, %s212
      %s230 = sphi 0, %s230
      %s232 = sphi 0, %s230
      %s233 = sphi 0, %s232
      %s247 = sphi 0, %s233
      %s251 = sphi 0, %s251
      %s253 = sphi 0, %s251
      %s254 = sphi 0, %s253
      %s268 = sphi 0, %s254
      %s274 = sphi 0, %s276
      %s277 = sphi 0, %s274
      %s278 = sphi 0, %s277
      %s294 = sphi 0, %s278
    $region4: #{tpu_custom_call.1} parent=1 // loop_header_branch
      %31 = sbr.rel (%p29) target = $region8
    $region5: #{tpu_custom_call.1} parent=1 // loop_body
      %s33 = ssub.s32 %s28, 1
      %s34 = ssub.s32 %s28, 2
      %s35 = sadd.s32 %s28, 1
      %s36 = ssub.s32 %s28, %s35
      %p37 = scmp.eq.s32.totalorder %s36, 0
      %s39 = sadd.s32 %s38, 1
      %s40 = scalar_select %p37, %s38, %s39
      %p43 = pneg %p37
      %p44 = scmp.eq.s32.totalorder %s28, 1
      %p45 = por %p43, %p44
      %p46 = scmp.ne.s32.totalorder %s38, %s41
      %p47 = scmp.eq.s32.totalorder %s28, 0
      %p48 = por %p46, %p47
      %p49 = scmp.ne.s32.totalorder %s38, %s41
      %p50 = scmp.eq.s32.totalorder %s33, 1
      %p51 = por %p49, %p50
      %p52 = scmp.ne.s32.totalorder %s41, %s42
      %p53 = scmp.eq.s32.totalorder %s33, 0
      %p54 = por %p52, %p53
      %p55 = scmp.ne.s32.totalorder %s41, %s42
      %p56 = scmp.eq.s32.totalorder %s34, 1
      %p57 = por %p55, %p56
      %p59 = scmp.ne.s32.totalorder %s42, %s58
      %p60 = scmp.eq.s32.totalorder %s34, 0
      %p61 = por %p59, %p60
      %s63 = sadd.s32 %s62, 1
      %p66 = scmp.eq.s32.totalorder %s28, 1
      %p67 = scmp.ne.s32.totalorder %s62, %s64
      %p68 = scmp.eq.s32.totalorder %s28, 0
      %p69 = por %p67, %p68
      %p70 = scmp.ne.s32.totalorder %s62, %s64
      %p71 = scmp.eq.s32.totalorder %s33, 1
      %p72 = por %p70, %p71
      %p73 = scmp.ne.s32.totalorder %s64, %s65
      %p74 = scmp.eq.s32.totalorder %s33, 0
      %p75 = por %p73, %p74
      %p76 = scmp.ne.s32.totalorder %s64, %s65
      %p77 = scmp.eq.s32.totalorder %s34, 1
      %p78 = por %p76, %p77
      %p80 = scmp.ne.s32.totalorder %s65, %s79
      %p81 = scmp.eq.s32.totalorder %s34, 0
      %p82 = por %p80, %p81
      %s84 = sadd.s32 %s83, 1
      %p87 = scmp.eq.s32.totalorder %s28, 1
      %p88 = scmp.ne.s32.totalorder %s83, %s85
      %p89 = scmp.eq.s32.totalorder %s28, 0
      %p90 = por %p88, %p89
      %p91 = scmp.ne.s32.totalorder %s83, %s85
      %p92 = scmp.eq.s32.totalorder %s33, 1
      %p93 = por %p91, %p92
      %p94 = scmp.ne.s32.totalorder %s85, %s86
      %p95 = scmp.eq.s32.totalorder %s33, 0
      %p96 = por %p94, %p95
      %p97 = scmp.ne.s32.totalorder %s85, %s86
      %p98 = scmp.eq.s32.totalorder %s34, 1
      %p99 = por %p97, %p98
      %p101 = scmp.ne.s32.totalorder %s86, %s100
      %p102 = scmp.eq.s32.totalorder %s34, 0
      %p103 = por %p101, %p102
      %s105 = sadd.s32 %s104, 1
      %p108 = scmp.eq.s32.totalorder %s28, 1
      %p109 = scmp.ne.s32.totalorder %s104, %s106
      %p110 = scmp.eq.s32.totalorder %s28, 0
      %p111 = por %p109, %p110
      %p112 = scmp.ne.s32.totalorder %s104, %s106
      %p113 = scmp.eq.s32.totalorder %s33, 1
      %p114 = por %p112, %p113
      %p115 = scmp.ne.s32.totalorder %s106, %s107
      %p116 = scmp.eq.s32.totalorder %s33, 0
      %p117 = por %p115, %p116
      %p118 = scmp.ne.s32.totalorder %s106, %s107
      %p119 = scmp.eq.s32.totalorder %s34, 1
      %p120 = por %p118, %p119
      %p122 = scmp.ne.s32.totalorder %s107, %s121
      %p123 = scmp.eq.s32.totalorder %s34, 0
      %p124 = por %p122, %p123
      %s126 = sadd.s32 %s125, 1
      %p129 = scmp.eq.s32.totalorder %s28, 1
      %p130 = scmp.ne.s32.totalorder %s125, %s127
      %p131 = scmp.eq.s32.totalorder %s28, 0
      %p132 = por %p130, %p131
      %p133 = scmp.ne.s32.totalorder %s125, %s127
      %p134 = scmp.eq.s32.totalorder %s33, 1
      %p135 = por %p133, %p134
      %p136 = scmp.ne.s32.totalorder %s127, %s128
      %p137 = scmp.eq.s32.totalorder %s33, 0
      %p138 = por %p136, %p137
      %p139 = scmp.ne.s32.totalorder %s127, %s128
      %p140 = scmp.eq.s32.totalorder %s34, 1
      %p141 = por %p139, %p140
      %p143 = scmp.ne.s32.totalorder %s128, %s142
      %p144 = scmp.eq.s32.totalorder %s34, 0
      %p145 = por %p143, %p144
      %s147 = sadd.s32 %s146, 1
      %p150 = scmp.eq.s32.totalorder %s28, 1
      %p151 = scmp.ne.s32.totalorder %s146, %s148
      %p152 = scmp.eq.s32.totalorder %s28, 0
      %p153 = por %p151, %p152
      %p154 = scmp.ne.s32.totalorder %s146, %s148
      %p155 = scmp.eq.s32.totalorder %s33, 1
      %p156 = por %p154, %p155
      %p157 = scmp.ne.s32.totalorder %s148, %s149
      %p158 = scmp.eq.s32.totalorder %s33, 0
      %p159 = por %p157, %p158
      %p160 = scmp.ne.s32.totalorder %s148, %s149
      %p161 = scmp.eq.s32.totalorder %s34, 1
      %p162 = por %p160, %p161
      %p164 = scmp.ne.s32.totalorder %s149, %s163
      %p165 = scmp.eq.s32.totalorder %s34, 0
      %p166 = por %p164, %p165
      %s168 = sadd.s32 %s167, 1
      %p171 = scmp.eq.s32.totalorder %s28, 1
      %p172 = scmp.ne.s32.totalorder %s167, %s169
      %p173 = scmp.eq.s32.totalorder %s28, 0
      %p174 = por %p172, %p173
      %p175 = scmp.ne.s32.totalorder %s167, %s169
      %p176 = scmp.eq.s32.totalorder %s33, 1
      %p177 = por %p175, %p176
      %p178 = scmp.ne.s32.totalorder %s169, %s170
      %p179 = scmp.eq.s32.totalorder %s33, 0
      %p180 = por %p178, %p179
      %p181 = scmp.ne.s32.totalorder %s169, %s170
      %p182 = scmp.eq.s32.totalorder %s34, 1
      %p183 = por %p181, %p182
      %p185 = scmp.ne.s32.totalorder %s170, %s184
      %p186 = scmp.eq.s32.totalorder %s34, 0
      %p187 = por %p185, %p186
      %s189 = sadd.s32 %s188, 1
      %p192 = scmp.eq.s32.totalorder %s28, 1
      %p193 = scmp.ne.s32.totalorder %s188, %s190
      %p194 = scmp.eq.s32.totalorder %s28, 0
      %p195 = por %p193, %p194
      %p196 = scmp.ne.s32.totalorder %s188, %s190
      %p197 = scmp.eq.s32.totalorder %s33, 1
      %p198 = por %p196, %p197
      %p199 = scmp.ne.s32.totalorder %s190, %s191
      %p200 = scmp.eq.s32.totalorder %s33, 0
      %p201 = por %p199, %p200
      %p202 = scmp.ne.s32.totalorder %s190, %s191
      %p203 = scmp.eq.s32.totalorder %s34, 1
      %p204 = por %p202, %p203
      %p206 = scmp.ne.s32.totalorder %s191, %s205
      %p207 = scmp.eq.s32.totalorder %s34, 0
      %p208 = por %p206, %p207
      %s210 = sadd.s32 %s209, 1
      %p213 = scmp.eq.s32.totalorder %s28, 1
      %p214 = scmp.ne.s32.totalorder %s209, %s211
      %p215 = scmp.eq.s32.totalorder %s28, 0
      %p216 = por %p214, %p215
      %p217 = scmp.ne.s32.totalorder %s209, %s211
      %p218 = scmp.eq.s32.totalorder %s33, 1
      %p219 = por %p217, %p218
      %p220 = scmp.ne.s32.totalorder %s211, %s212
      %p221 = scmp.eq.s32.totalorder %s33, 0
      %p222 = por %p220, %p221
      %p223 = scmp.ne.s32.totalorder %s211, %s212
      %p224 = scmp.eq.s32.totalorder %s34, 1
      %p225 = por %p223, %p224
      %p227 = scmp.ne.s32.totalorder %s212, %s226
      %p228 = scmp.eq.s32.totalorder %s34, 0
      %p229 = por %p227, %p228
      %s231 = sadd.s32 %s230, 1
      %p234 = scmp.eq.s32.totalorder %s28, 1
      %p235 = scmp.ne.s32.totalorder %s230, %s232
      %p236 = scmp.eq.s32.totalorder %s28, 0
      %p237 = por %p235, %p236
      %p238 = scmp.ne.s32.totalorder %s230, %s232
      %p239 = scmp.eq.s32.totalorder %s33, 1
      %p240 = por %p238, %p239
      %p241 = scmp.ne.s32.totalorder %s232, %s233
      %p242 = scmp.eq.s32.totalorder %s33, 0
      %p243 = por %p241, %p242
      %p244 = scmp.ne.s32.totalorder %s232, %s233
      %p245 = scmp.eq.s32.totalorder %s34, 1
      %p246 = por %p244, %p245
      %p248 = scmp.ne.s32.totalorder %s233, %s247
      %p249 = scmp.eq.s32.totalorder %s34, 0
      %p250 = por %p248, %p249
      %s252 = sadd.s32 %s251, 1
      %p255 = scmp.eq.s32.totalorder %s28, 1
      %p256 = scmp.ne.s32.totalorder %s251, %s253
      %p257 = scmp.eq.s32.totalorder %s28, 0
      %p258 = por %p256, %p257
      %p259 = scmp.ne.s32.totalorder %s251, %s253
      %p260 = scmp.eq.s32.totalorder %s33, 1
      %p261 = por %p259, %p260
      %p262 = scmp.ne.s32.totalorder %s253, %s254
      %p263 = scmp.eq.s32.totalorder %s33, 0
      %p264 = por %p262, %p263
      %p265 = scmp.ne.s32.totalorder %s253, %s254
      %p266 = scmp.eq.s32.totalorder %s34, 1
      %p267 = por %p265, %p266
      %p269 = scmp.ne.s32.totalorder %s254, %s268
      %p270 = scmp.eq.s32.totalorder %s34, 0
      %p271 = por %p269, %p270
      %s272 = ssub.s32 %s28, %s35
      %p273 = scmp.eq.s32.totalorder %s272, 0
      %s275 = sadd.s32 %s274, 1
      %s276 = scalar_select %p273, %s274, %s275
      %p279 = pneg %p273
      %p280 = scmp.eq.s32.totalorder %s28, 1
      %p281 = por %p279, %p280
      %p282 = scmp.ne.s32.totalorder %s274, %s277
      %p283 = scmp.eq.s32.totalorder %s28, 0
      %p284 = por %p282, %p283
      %p285 = scmp.ne.s32.totalorder %s274, %s277
      %p286 = scmp.eq.s32.totalorder %s33, 1
      %p287 = por %p285, %p286
      %p288 = scmp.ne.s32.totalorder %s277, %s278
      %p289 = scmp.eq.s32.totalorder %s33, 0
      %p290 = por %p288, %p289
      %p291 = scmp.ne.s32.totalorder %s277, %s278
      %p292 = scmp.eq.s32.totalorder %s34, 1
      %p293 = por %p291, %p292
      %p295 = scmp.ne.s32.totalorder %s278, %s294
      %p296 = scmp.eq.s32.totalorder %s34, 0
      %p297 = por %p295, %p296
      %p298 = scmp.le.s32.totalorder 1, %s28
      %p299 = scmp.lt.s32.totalorder %s28, 3
      %p300 = pnand %p298, %p299
      %p301 = pneg %p300
      // Predicated region
      $region9: #{tpu_custom_call.1} parent=5 // pred_check
        _
      $region10: #{tpu_custom_call.1} parent=5 // pred_check_branch
        %303 = sbr.rel (%p300) target = $region12
      $region11: #{tpu_custom_call.1} parent=5 // pred_region
        %s304 = ssub.s32 %s28, 1
        // Predicated region
        $region13: #{tpu_custom_call.1} parent=11 // pred_check
          %p305 = pneg %p75
        $region14: #{tpu_custom_call.1} parent=11 // pred_check_branch
          %307 = sbr.rel (%p305) target = $region16
        $region15: #{tpu_custom_call.1} parent=11 // pred_region
          %309 = vsyncadd [#allocation6], 0
          %s310 = sshll.u32 %s1, 4
          %s311 = int_to_ptr.hbm [resolvable:$true] %s310
          %s312 = sshll.u32 [#allocation5], 4
          %s313 = int_to_ptr.vmem [resolvable:$true] %s312
          %318 = dma.hbm_to_vmem [thread:$0]  %s311, 8192, %s313, [#allocation6], 256, 256, 16
        $region16: #{tpu_custom_call.1} parent=11 // pred_fallthru
          _
        // Predicated region
        $region17: #{tpu_custom_call.1} parent=11 // pred_check
          %p319 = pneg %p96
        $region18: #{tpu_custom_call.1} parent=11 // pred_check_branch
          %321 = sbr.rel (%p319) target = $region20
        $region19: #{tpu_custom_call.1} parent=11 // pred_region
          %323 = vsyncadd [#allocation6], 0
          %s325 = sshll.u32 %s2, 4
          %s326 = int_to_ptr.hbm [resolvable:$true] %s325
          %s327 = sshll.u32 [#allocation7], 4
          %s328 = int_to_ptr.vmem [resolvable:$true] %s327
          %330 = dma.hbm_to_vmem [thread:$0]  %s326, 64, %s328, [#allocation6]
        $region20: #{tpu_custom_call.1} parent=11 // pred_fallthru
          _
        // Predicated region
        $region21: #{tpu_custom_call.1} parent=11 // pred_check
          %p331 = pneg %p117
        $region22: #{tpu_custom_call.1} parent=11 // pred_check_branch
          %333 = sbr.rel (%p331) target = $region24
        $region23: #{tpu_custom_call.1} parent=11 // pred_region
          %335 = vsyncadd [#allocation9], 0
          %s336 = sshll.u32 %s3, 4
          %s337 = int_to_ptr.hbm [resolvable:$true] %s336
          %s338 = sshll.u32 [#allocation8], 4
          %s339 = int_to_ptr.vmem [resolvable:$true] %s338
          %344 = dma.hbm_to_vmem [thread:$0]  %s337, 1024, %s339, [#allocation9], 512, 512, 32
        $region24: #{tpu_custom_call.1} parent=11 // pred_fallthru
          _
        // Predicated region
        $region25: #{tpu_custom_call.1} parent=11 // pred_check
          %p345 = pneg %p138
        $region26: #{tpu_custom_call.1} parent=11 // pred_check_branch
          %347 = sbr.rel (%p345) target = $region28
        $region27: #{tpu_custom_call.1} parent=11 // pred_region
          %349 = vsyncadd [#allocation9], 0
          %s350 = sshll.u32 %s4, 4
          %s351 = int_to_ptr.hbm [resolvable:$true] %s350
          %s352 = sshll.u32 [#allocation10], 4
          %s353 = int_to_ptr.vmem [resolvable:$true] %s352
          %358 = dma.hbm_to_vmem [thread:$0]  %s351, 1024, %s353, [#allocation9], 512, 512, 32
        $region28: #{tpu_custom_call.1} parent=11 // pred_fallthru
          _
        // Predicated region
        $region29: #{tpu_custom_call.1} parent=11 // pred_check
          %p359 = pneg %p159
        $region30: #{tpu_custom_call.1} parent=11 // pred_check_branch
          %361 = sbr.rel (%p359) target = $region32
        $region31: #{tpu_custom_call.1} parent=11 // pred_region
          %363 = vsyncadd [#allocation12], 0
          %s364 = sshll.u32 %s5, 4
          %s365 = int_to_ptr.hbm [resolvable:$true] %s364
          %s366 = sshll.u32 [#allocation11], 4
          %s367 = int_to_ptr.vmem [resolvable:$true] %s366
          %372 = dma.hbm_to_vmem [thread:$0]  %s365, 81920, %s367, [#allocation12], 256, 256, 16
        $region32: #{tpu_custom_call.1} parent=11 // pred_fallthru
          _
        // Predicated region
        $region33: #{tpu_custom_call.1} parent=11 // pred_check
          %p373 = pneg %p180
        $region34: #{tpu_custom_call.1} parent=11 // pred_check_branch
          %375 = sbr.rel (%p373) target = $region36
        $region35: #{tpu_custom_call.1} parent=11 // pred_region
          %377 = vsyncadd [#allocation12], 0
          %s379 = sshll.u32 %s6, 4
          %s380 = int_to_ptr.hbm [resolvable:$true] %s379
          %s381 = sshll.u32 [#allocation13], 4
          %s382 = int_to_ptr.vmem [resolvable:$true] %s381
          %384 = dma.hbm_to_vmem [thread:$0]  %s380, 64, %s382, [#allocation12]
        $region36: #{tpu_custom_call.1} parent=11 // pred_fallthru
          _
        // Predicated region
        $region37: #{tpu_custom_call.1} parent=11 // pred_check
          %p385 = pneg %p201
        $region38: #{tpu_custom_call.1} parent=11 // pred_check_branch
          %387 = sbr.rel (%p385) target = $region40
        $region39: #{tpu_custom_call.1} parent=11 // pred_region
          %389 = vsyncadd [#allocation15], 0
          %s391 = sshll.u32 %s7, 4
          %s392 = int_to_ptr.hbm [resolvable:$true] %s391
          %s393 = sshll.u32 [#allocation14], 4
          %s394 = int_to_ptr.vmem [resolvable:$true] %s393
          %396 = dma.hbm_to_vmem [thread:$0]  %s392, 512, %s394, [#allocation15]
        $region40: #{tpu_custom_call.1} parent=11 // pred_fallthru
          _
        // Predicated region
        $region41: #{tpu_custom_call.1} parent=11 // pred_check
          %p397 = pneg %p222
        $region42: #{tpu_custom_call.1} parent=11 // pred_check_branch
          %399 = sbr.rel (%p397) target = $region44
        $region43: #{tpu_custom_call.1} parent=11 // pred_region
          %401 = vsyncadd [#allocation15], 0
          %s403 = sshll.u32 %s8, 4
          %s404 = int_to_ptr.hbm [resolvable:$true] %s403
          %s405 = sshll.u32 [#allocation16], 4
          %s406 = int_to_ptr.vmem [resolvable:$true] %s405
          %408 = dma.hbm_to_vmem [thread:$0]  %s404, 512, %s406, [#allocation15]
        $region44: #{tpu_custom_call.1} parent=11 // pred_fallthru
          _
        // Predicated region
        $region45: #{tpu_custom_call.1} parent=11 // pred_check
          %p409 = pneg %p243
        $region46: #{tpu_custom_call.1} parent=11 // pred_check_branch
          %411 = sbr.rel (%p409) target = $region48
        $region47: #{tpu_custom_call.1} parent=11 // pred_region
          %413 = vsyncadd [#allocation18], 0
          %s414 = sshll.u32 %s9, 4
          %s415 = int_to_ptr.hbm [resolvable:$true] %s414
          %s416 = sshll.u32 [#allocation17], 4
          %s417 = int_to_ptr.vmem [resolvable:$true] %s416
          %422 = dma.hbm_to_vmem [thread:$0]  %s415, 8192, %s417, [#allocation18], 128, 128, 8
        $region48: #{tpu_custom_call.1} parent=11 // pred_fallthru
          _
        // Predicated region
        $region49: #{tpu_custom_call.1} parent=11 // pred_check
          %p423 = pneg %p264
        $region50: #{tpu_custom_call.1} parent=11 // pred_check_branch
          %425 = sbr.rel (%p423) target = $region52
        $region51: #{tpu_custom_call.1} parent=11 // pred_region
          %427 = vsyncadd [#allocation18], 0
          %s429 = sshll.u32 %s10, 4
          %s430 = int_to_ptr.hbm [resolvable:$true] %s429
          %s431 = sshll.u32 [#allocation19], 4
          %s432 = int_to_ptr.vmem [resolvable:$true] %s431
          %434 = dma.hbm_to_vmem [thread:$0]  %s430, 16, %s432, [#allocation18]
        $region52: #{tpu_custom_call.1} parent=11 // pred_fallthru
          _
      $region12: #{tpu_custom_call.1} parent=5 // pred_fallthru
        _
      %p435 = scmp.lt.s32.totalorder %s28, 2
      // Predicated region
      $region53: #{tpu_custom_call.1} parent=5 // pred_check
        %p436 = pneg %p435
      $region54: #{tpu_custom_call.1} parent=5 // pred_check_branch
        %438 = sbr.rel (%p436) target = $region56
      $region55: #{tpu_custom_call.1} parent=5 // pred_region
        // Predicated region
        $region57: #{tpu_custom_call.1} parent=55 // pred_check
          %p439 = pneg %p48
        $region58: #{tpu_custom_call.1} parent=55 // pred_check_branch
          %441 = sbr.rel (%p439) target = $region60
        $region59: #{tpu_custom_call.1} parent=55 // pred_region
          %s442 = sand.u32 %s38, 1
          %s443 = scalar_lea.sflag [#allocation3], %s442
          %s444 = sand.u32 %s38, 1
          %s445 = smul.addr %s444, 16
          %s446 = scalar_lea.vmem [#allocation2], %s445
          %448 = vsyncadd %s443, 0
          %s449 = smul.addr %s28, 4
          %s450 = smul.addr %s449, 4
          %s451 = scalar_lea.hbm %s0, %s450
          %s452 = sshll.u32 %s451, 4
          %s453 = int_to_ptr.hbm [resolvable:$true] %s452
          %s454 = sshll.u32 %s446, 4
          %s455 = int_to_ptr.vmem [resolvable:$true] %s454
          %460 = dma.hbm_to_vmem [thread:$0]  %s453, 256, %s455, %s443, 128, 128, 8
        $region60: #{tpu_custom_call.1} parent=55 // pred_fallthru
          _
      $region56: #{tpu_custom_call.1} parent=5 // pred_fallthru
        _
      %p461 = scmp.le.s32.totalorder 1, %s28
      %p462 = scmp.lt.s32.totalorder %s28, 3
      %p463 = pnand %p461, %p462
      %p464 = pneg %p463
      // Predicated region
      $region61: #{tpu_custom_call.1} parent=5 // pred_check
        _
      $region62: #{tpu_custom_call.1} parent=5 // pred_check_branch
        %466 = sbr.rel (%p463) target = $region64
      $region63: #{tpu_custom_call.1} parent=5 // pred_region
        %s467 = ssub.s32 %s28, 1
        %s468 = sand.u32 %s41, 1
        %s469 = scalar_lea.sflag [#allocation3], %s468
        %s470 = sand.u32 %s41, 1
        %s471 = smul.addr %s470, 16
        %s472 = scalar_lea.vmem [#allocation2], %s471
        // Predicated region
        $region65: #{tpu_custom_call.1} parent=63 // pred_check
          %p473 = pneg %p54
        $region66: #{tpu_custom_call.1} parent=63 // pred_check_branch
          %475 = sbr.rel (%p473) target = $region68
        $region67: #{tpu_custom_call.1} parent=63 // pred_region
          %477 = dma.done %s469, 256
        $region68: #{tpu_custom_call.1} parent=63 // pred_fallthru
          _
        // Predicated region
        $region69: #{tpu_custom_call.1} parent=63 // pred_check
          %p478 = pneg %p75
        $region70: #{tpu_custom_call.1} parent=63 // pred_check_branch
          %480 = sbr.rel (%p478) target = $region72
        $region71: #{tpu_custom_call.1} parent=63 // pred_region
          %482 = dma.done [#allocation6], 8192
        $region72: #{tpu_custom_call.1} parent=63 // pred_fallthru
          _
        // Predicated region
        $region73: #{tpu_custom_call.1} parent=63 // pred_check
          %p483 = pneg %p96
        $region74: #{tpu_custom_call.1} parent=63 // pred_check_branch
          %485 = sbr.rel (%p483) target = $region76
        $region75: #{tpu_custom_call.1} parent=63 // pred_region
          %487 = dma.done [#allocation6], 64
        $region76: #{tpu_custom_call.1} parent=63 // pred_fallthru
          _
        // Predicated region
        $region77: #{tpu_custom_call.1} parent=63 // pred_check
          %p488 = pneg %p117
        $region78: #{tpu_custom_call.1} parent=63 // pred_check_branch
          %490 = sbr.rel (%p488) target = $region80
        $region79: #{tpu_custom_call.1} parent=63 // pred_region
          %492 = dma.done [#allocation9], 1024
        $region80: #{tpu_custom_call.1} parent=63 // pred_fallthru
          _
        // Predicated region
        $region81: #{tpu_custom_call.1} parent=63 // pred_check
          %p493 = pneg %p138
        $region82: #{tpu_custom_call.1} parent=63 // pred_check_branch
          %495 = sbr.rel (%p493) target = $region84
        $region83: #{tpu_custom_call.1} parent=63 // pred_region
          %497 = dma.done [#allocation9], 1024
        $region84: #{tpu_custom_call.1} parent=63 // pred_fallthru
          _
        // Predicated region
        $region85: #{tpu_custom_call.1} parent=63 // pred_check
          %p498 = pneg %p159
        $region86: #{tpu_custom_call.1} parent=63 // pred_check_branch
          %500 = sbr.rel (%p498) target = $region88
        $region87: #{tpu_custom_call.1} parent=63 // pred_region
          %502 = dma.done [#allocation12], 81920
        $region88: #{tpu_custom_call.1} parent=63 // pred_fallthru
          _
        // Predicated region
        $region89: #{tpu_custom_call.1} parent=63 // pred_check
          %p503 = pneg %p180
        $region90: #{tpu_custom_call.1} parent=63 // pred_check_branch
          %505 = sbr.rel (%p503) target = $region92
        $region91: #{tpu_custom_call.1} parent=63 // pred_region
          %507 = dma.done [#allocation12], 64
        $region92: #{tpu_custom_call.1} parent=63 // pred_fallthru
          _
        // Predicated region
        $region93: #{tpu_custom_call.1} parent=63 // pred_check
          %p508 = pneg %p201
        $region94: #{tpu_custom_call.1} parent=63 // pred_check_branch
          %510 = sbr.rel (%p508) target = $region96
        $region95: #{tpu_custom_call.1} parent=63 // pred_region
          %512 = dma.done [#allocation15], 512
        $region96: #{tpu_custom_call.1} parent=63 // pred_fallthru
          _
        // Predicated region
        $region97: #{tpu_custom_call.1} parent=63 // pred_check
          %p513 = pneg %p222
        $region98: #{tpu_custom_call.1} parent=63 // pred_check_branch
          %515 = sbr.rel (%p513) target = $region100
        $region99: #{tpu_custom_call.1} parent=63 // pred_region
          %517 = dma.done [#allocation15], 512
        $region100: #{tpu_custom_call.1} parent=63 // pred_fallthru
          _
        // Predicated region
        $region101: #{tpu_custom_call.1} parent=63 // pred_check
          %p518 = pneg %p243
        $region102: #{tpu_custom_call.1} parent=63 // pred_check_branch
          %520 = sbr.rel (%p518) target = $region104
        $region103: #{tpu_custom_call.1} parent=63 // pred_region
          %522 = dma.done [#allocation18], 8192
        $region104: #{tpu_custom_call.1} parent=63 // pred_fallthru
          _
        // Predicated region
        $region105: #{tpu_custom_call.1} parent=63 // pred_check
          %p523 = pneg %p264
        $region106: #{tpu_custom_call.1} parent=63 // pred_check_branch
          %525 = sbr.rel (%p523) target = $region108
        $region107: #{tpu_custom_call.1} parent=63 // pred_region
          %527 = dma.done [#allocation18], 16
        $region108: #{tpu_custom_call.1} parent=63 // pred_fallthru
          _
        %s528 = sand.u32 %s41, 1
        %s529 = scalar_lea.sflag [#allocation3], %s528
        %s530 = sand.u32 %s41, 1
        %s531 = smul.addr %s530, 16
        %s532 = scalar_lea.vmem [#allocation2], %s531
        %p533 = pneg %p54
        %p534 = pneg %p51
        %p535 = pneg %p75
        %p536 = pneg %p72
        %p537 = pneg %p96
        %p538 = pneg %p93
        %p539 = pneg %p117
        %p540 = pneg %p114
        %p541 = pneg %p138
        %p542 = pneg %p135
        %p543 = pneg %p159
        %p544 = pneg %p156
        %p545 = pneg %p180
        %p546 = pneg %p177
        %p547 = pneg %p201
        %p548 = pneg %p198
        %p549 = pneg %p222
        %p550 = pneg %p219
        %p551 = pneg %p243
        %p552 = pneg %p240
        %p553 = pneg %p264
        %p554 = pneg %p261
        %p555 = pneg %p290
        %p556 = pneg %p287
        %s557 = sand.u32 %s277, 1
        %s558 = scalar_lea.sflag [#allocation4], %s557
        %s559 = sand.u32 %s277, 1
        %s560 = scalar_lea.vmem [#allocation20], %s559
        %v561 = vld [vmem:[%s472] sm:$0xff]
        %v562 = vld [vmem:[%s472 + $0x8] sm:$0xff]
        %v563 = vld [vmem:[#allocation5] sm:$0xff]
        %v564 = vld [vmem:[#allocation5 + $0x8] sm:$0xff]
        %v565 = vld [vmem:[#allocation5 + $0x10] sm:$0xff]
        %v566 = vld [vmem:[#allocation5 + $0x18] sm:$0xff]
        %v567 = vld [vmem:[#allocation5 + $0x20] sm:$0xff]
        %v568 = vld [vmem:[#allocation5 + $0x28] sm:$0xff]
        %v569 = vld [vmem:[#allocation5 + $0x30] sm:$0xff]
        %v570 = vld [vmem:[#allocation5 + $0x38] sm:$0xff]
        %v571 = vld [vmem:[#allocation5 + $0x40] sm:$0xff]
        %v572 = vld [vmem:[#allocation5 + $0x48] sm:$0xff]
        %v573 = vld [vmem:[#allocation5 + $0x50] sm:$0xff]
        %v574 = vld [vmem:[#allocation5 + $0x58] sm:$0xff]
        %v575 = vld [vmem:[#allocation5 + $0x60] sm:$0xff]
        %v576 = vld [vmem:[#allocation5 + $0x68] sm:$0xff]
        %v577 = vld [vmem:[#allocation5 + $0x70] sm:$0xff]
        %v578 = vld [vmem:[#allocation5 + $0x78] sm:$0xff]
        %v579 = vld [vmem:[#allocation5 + $0x80] sm:$0xff]
        %v580 = vld [vmem:[#allocation5 + $0x88] sm:$0xff]
        %v581 = vld [vmem:[#allocation5 + $0x90] sm:$0xff]
        %v582 = vld [vmem:[#allocation5 + $0x98] sm:$0xff]
        %v583 = vld [vmem:[#allocation5 + $0xa0] sm:$0xff]
        %v584 = vld [vmem:[#allocation5 + $0xa8] sm:$0xff]
        %v585 = vld [vmem:[#allocation5 + $0xb0] sm:$0xff]
        %v586 = vld [vmem:[#allocation5 + $0xb8] sm:$0xff]
        %v587 = vld [vmem:[#allocation5 + $0xc0] sm:$0xff]
        %v588 = vld [vmem:[#allocation5 + $0xc8] sm:$0xff]
        %v589 = vld [vmem:[#allocation5 + $0xd0] sm:$0xff]
        %v590 = vld [vmem:[#allocation5 + $0xd8] sm:$0xff]
        %v591 = vld [vmem:[#allocation5 + $0xe0] sm:$0xff]
        %v592 = vld [vmem:[#allocation5 + $0xe8] sm:$0xff]
        %v593 = vld [vmem:[#allocation5 + $0xf0] sm:$0xff]
        %v594 = vld [vmem:[#allocation5 + $0xf8] sm:$0xff]
        %v595 = vld [vmem:[#allocation5 + $0x100] sm:$0xff]
        %v596 = vld [vmem:[#allocation5 + $0x108] sm:$0xff]
        %v597 = vld [vmem:[#allocation5 + $0x110] sm:$0xff]
        %v598 = vld [vmem:[#allocation5 + $0x118] sm:$0xff]
        %v599 = vld [vmem:[#allocation5 + $0x120] sm:$0xff]
        %v600 = vld [vmem:[#allocation5 + $0x128] sm:$0xff]
        %v601 = vld [vmem:[#allocation5 + $0x130] sm:$0xff]
        %v602 = vld [vmem:[#allocation5 + $0x138] sm:$0xff]
        %v603 = vld [vmem:[#allocation5 + $0x140] sm:$0xff]
        %v604 = vld [vmem:[#allocation5 + $0x148] sm:$0xff]
        %v605 = vld [vmem:[#allocation5 + $0x150] sm:$0xff]
        %v606 = vld [vmem:[#allocation5 + $0x158] sm:$0xff]
        %v607 = vld [vmem:[#allocation5 + $0x160] sm:$0xff]
        %v608 = vld [vmem:[#allocation5 + $0x168] sm:$0xff]
        %v609 = vld [vmem:[#allocation5 + $0x170] sm:$0xff]
        %v610 = vld [vmem:[#allocation5 + $0x178] sm:$0xff]
        %v611 = vld [vmem:[#allocation5 + $0x180] sm:$0xff]
        %v612 = vld [vmem:[#allocation5 + $0x188] sm:$0xff]
        %v613 = vld [vmem:[#allocation5 + $0x190] sm:$0xff]
        %v614 = vld [vmem:[#allocation5 + $0x198] sm:$0xff]
        %v615 = vld [vmem:[#allocation5 + $0x1a0] sm:$0xff]
        %v616 = vld [vmem:[#allocation5 + $0x1a8] sm:$0xff]
        %v617 = vld [vmem:[#allocation5 + $0x1b0] sm:$0xff]
        %v618 = vld [vmem:[#allocation5 + $0x1b8] sm:$0xff]
        %v619 = vld [vmem:[#allocation5 + $0x1c0] sm:$0xff]
        %v620 = vld [vmem:[#allocation5 + $0x1c8] sm:$0xff]
        %v621 = vld [vmem:[#allocation5 + $0x1d0] sm:$0xff]
        %v622 = vld [vmem:[#allocation5 + $0x1d8] sm:$0xff]
        %v623 = vld [vmem:[#allocation5 + $0x1e0] sm:$0xff]
        %v624 = vld [vmem:[#allocation5 + $0x1e8] sm:$0xff]
        %v625 = vld [vmem:[#allocation5 + $0x1f0] sm:$0xff]
        %v626 = vld [vmem:[#allocation5 + $0x1f8] sm:$0xff]
        %v627 = vld [vmem:[#allocation7] sm:$0xf]
        %v629 = vperm.slane %v627, 0
        %v630 = vperm.slane %v627, 1
        %v631 = vperm.slane %v627, 2
        %v632 = vperm.slane %v627, 3
        %v639 = vunpack.c.l.b16 %v561
        %v640 = vunpack.c.h.b16 %v561
        %v641 = vunpack.c.l.b16 %v562
        %v642 = vunpack.c.h.b16 %v562
        %v643 = vpack.c.b16 %v641, %v639
        %v644 = vpack.c.b16 %v642, %v640
        %v711 = vunpack.c.l.b16 %v563
        %v712 = vunpack.c.h.b16 %v563
        %v713 = vunpack.c.l.b16 %v564
        %v714 = vunpack.c.h.b16 %v564
        %v715 = vunpack.c.l.b16 %v565
        %v716 = vunpack.c.h.b16 %v565
        %v717 = vunpack.c.l.b16 %v566
        %v718 = vunpack.c.h.b16 %v566
        %v719 = vunpack.c.l.b16 %v567
        %v720 = vunpack.c.h.b16 %v567
        %v721 = vunpack.c.l.b16 %v568
        %v722 = vunpack.c.h.b16 %v568
        %v723 = vunpack.c.l.b16 %v569
        %v724 = vunpack.c.h.b16 %v569
        %v725 = vunpack.c.l.b16 %v570
        %v726 = vunpack.c.h.b16 %v570
        %v727 = vunpack.c.l.b16 %v571
        %v728 = vunpack.c.h.b16 %v571
        %v729 = vunpack.c.l.b16 %v572
        %v730 = vunpack.c.h.b16 %v572
        %v731 = vunpack.c.l.b16 %v573
        %v732 = vunpack.c.h.b16 %v573
        %v733 = vunpack.c.l.b16 %v574
        %v734 = vunpack.c.h.b16 %v574
        %v735 = vunpack.c.l.b16 %v575
        %v736 = vunpack.c.h.b16 %v575
        %v737 = vunpack.c.l.b16 %v576
        %v738 = vunpack.c.h.b16 %v576
        %v739 = vunpack.c.l.b16 %v577
        %v740 = vunpack.c.h.b16 %v577
        %v741 = vunpack.c.l.b16 %v578
        %v742 = vunpack.c.h.b16 %v578
        %v743 = vunpack.c.l.b16 %v579
        %v744 = vunpack.c.h.b16 %v579
        %v745 = vunpack.c.l.b16 %v580
        %v746 = vunpack.c.h.b16 %v580
        %v747 = vunpack.c.l.b16 %v581
        %v748 = vunpack.c.h.b16 %v581
        %v749 = vunpack.c.l.b16 %v582
        %v750 = vunpack.c.h.b16 %v582
        %v751 = vunpack.c.l.b16 %v583
        %v752 = vunpack.c.h.b16 %v583
        %v753 = vunpack.c.l.b16 %v584
        %v754 = vunpack.c.h.b16 %v584
        %v755 = vunpack.c.l.b16 %v585
        %v756 = vunpack.c.h.b16 %v585
        %v757 = vunpack.c.l.b16 %v586
        %v758 = vunpack.c.h.b16 %v586
        %v759 = vunpack.c.l.b16 %v587
        %v760 = vunpack.c.h.b16 %v587
        %v761 = vunpack.c.l.b16 %v588
        %v762 = vunpack.c.h.b16 %v588
        %v763 = vunpack.c.l.b16 %v589
        %v764 = vunpack.c.h.b16 %v589
        %v765 = vunpack.c.l.b16 %v590
        %v766 = vunpack.c.h.b16 %v590
        %v767 = vunpack.c.l.b16 %v591
        %v768 = vunpack.c.h.b16 %v591
        %v769 = vunpack.c.l.b16 %v592
        %v770 = vunpack.c.h.b16 %v592
        %v771 = vunpack.c.l.b16 %v593
        %v772 = vunpack.c.h.b16 %v593
        %v773 = vunpack.c.l.b16 %v594
        %v774 = vunpack.c.h.b16 %v594
        %v775 = vunpack.c.l.b16 %v595
        %v776 = vunpack.c.h.b16 %v595
        %v777 = vunpack.c.l.b16 %v596
        %v778 = vunpack.c.h.b16 %v596
        %v779 = vunpack.c.l.b16 %v597
        %v780 = vunpack.c.h.b16 %v597
        %v781 = vunpack.c.l.b16 %v598
        %v782 = vunpack.c.h.b16 %v598
        %v783 = vunpack.c.l.b16 %v599
        %v784 = vunpack.c.h.b16 %v599
        %v785 = vunpack.c.l.b16 %v600
        %v786 = vunpack.c.h.b16 %v600
        %v787 = vunpack.c.l.b16 %v601
        %v788 = vunpack.c.h.b16 %v601
        %v789 = vunpack.c.l.b16 %v602
        %v790 = vunpack.c.h.b16 %v602
        %v791 = vunpack.c.l.b16 %v603
        %v792 = vunpack.c.h.b16 %v603
        %v793 = vunpack.c.l.b16 %v604
        %v794 = vunpack.c.h.b16 %v604
        %v795 = vunpack.c.l.b16 %v605
        %v796 = vunpack.c.h.b16 %v605
        %v797 = vunpack.c.l.b16 %v606
        %v798 = vunpack.c.h.b16 %v606
        %v799 = vunpack.c.l.b16 %v607
        %v800 = vunpack.c.h.b16 %v607
        %v801 = vunpack.c.l.b16 %v608
        %v802 = vunpack.c.h.b16 %v608
        %v803 = vunpack.c.l.b16 %v609
        %v804 = vunpack.c.h.b16 %v609
        %v805 = vunpack.c.l.b16 %v610
        %v806 = vunpack.c.h.b16 %v610
        %v807 = vunpack.c.l.b16 %v611
        %v808 = vunpack.c.h.b16 %v611
        %v809 = vunpack.c.l.b16 %v612
        %v810 = vunpack.c.h.b16 %v612
        %v811 = vunpack.c.l.b16 %v613
        %v812 = vunpack.c.h.b16 %v613
        %v813 = vunpack.c.l.b16 %v614
        %v814 = vunpack.c.h.b16 %v614
        %v815 = vunpack.c.l.b16 %v615
        %v816 = vunpack.c.h.b16 %v615
        %v817 = vunpack.c.l.b16 %v616
        %v818 = vunpack.c.h.b16 %v616
        %v819 = vunpack.c.l.b16 %v617
        %v820 = vunpack.c.h.b16 %v617
        %v821 = vunpack.c.l.b16 %v618
        %v822 = vunpack.c.h.b16 %v618
        %v823 = vunpack.c.l.b16 %v619
        %v824 = vunpack.c.h.b16 %v619
        %v825 = vunpack.c.l.b16 %v620
        %v826 = vunpack.c.h.b16 %v620
        %v827 = vunpack.c.l.b16 %v621
        %v828 = vunpack.c.h.b16 %v621
        %v829 = vunpack.c.l.b16 %v622
        %v830 = vunpack.c.h.b16 %v622
        %v831 = vunpack.c.l.b16 %v623
        %v832 = vunpack.c.h.b16 %v623
        %v833 = vunpack.c.l.b16 %v624
        %v834 = vunpack.c.h.b16 %v624
        %v835 = vunpack.c.l.b16 %v625
        %v836 = vunpack.c.h.b16 %v625
        %v837 = vunpack.c.l.b16 %v626
        %v838 = vunpack.c.h.b16 %v626
        %v839 = vpack.c.b16 %v715, %v711
        %v840 = vpack.c.b16 %v716, %v712
        %v841 = vpack.c.b16 %v717, %v713
        %v842 = vpack.c.b16 %v718, %v714
        %v843 = vpack.c.b16 %v723, %v719
        %v844 = vpack.c.b16 %v724, %v720
        %v845 = vpack.c.b16 %v725, %v721
        %v846 = vpack.c.b16 %v726, %v722
        %v847 = vpack.c.b16 %v731, %v727
        %v848 = vpack.c.b16 %v732, %v728
        %v849 = vpack.c.b16 %v733, %v729
        %v850 = vpack.c.b16 %v734, %v730
        %v851 = vpack.c.b16 %v739, %v735
        %v852 = vpack.c.b16 %v740, %v736
        %v853 = vpack.c.b16 %v741, %v737
        %v854 = vpack.c.b16 %v742, %v738
        %v855 = vpack.c.b16 %v747, %v743
        %v856 = vpack.c.b16 %v748, %v744
        %v857 = vpack.c.b16 %v749, %v745
        %v858 = vpack.c.b16 %v750, %v746
        %v859 = vpack.c.b16 %v755, %v751
        %v860 = vpack.c.b16 %v756, %v752
        %v861 = vpack.c.b16 %v757, %v753
        %v862 = vpack.c.b16 %v758, %v754
        %v863 = vpack.c.b16 %v763, %v759
        %v864 = vpack.c.b16 %v764, %v760
        %v865 = vpack.c.b16 %v765, %v761
        %v866 = vpack.c.b16 %v766, %v762
        %v867 = vpack.c.b16 %v771, %v767
        %v868 = vpack.c.b16 %v772, %v768
        %v869 = vpack.c.b16 %v773, %v769
        %v870 = vpack.c.b16 %v774, %v770
        %v871 = vpack.c.b16 %v779, %v775
        %v872 = vpack.c.b16 %v780, %v776
        %v873 = vpack.c.b16 %v781, %v777
        %v874 = vpack.c.b16 %v782, %v778
        %v875 = vpack.c.b16 %v787, %v783
        %v876 = vpack.c.b16 %v788, %v784
        %v877 = vpack.c.b16 %v789, %v785
        %v878 = vpack.c.b16 %v790, %v786
        %v879 = vpack.c.b16 %v795, %v791
        %v880 = vpack.c.b16 %v796, %v792
        %v881 = vpack.c.b16 %v797, %v793
        %v882 = vpack.c.b16 %v798, %v794
        %v883 = vpack.c.b16 %v803, %v799
        %v884 = vpack.c.b16 %v804, %v800
        %v885 = vpack.c.b16 %v805, %v801
        %v886 = vpack.c.b16 %v806, %v802
        %v887 = vpack.c.b16 %v811, %v807
        %v888 = vpack.c.b16 %v812, %v808
        %v889 = vpack.c.b16 %v813, %v809
        %v890 = vpack.c.b16 %v814, %v810
        %v891 = vpack.c.b16 %v819, %v815
        %v892 = vpack.c.b16 %v820, %v816
        %v893 = vpack.c.b16 %v821, %v817
        %v894 = vpack.c.b16 %v822, %v818
        %v895 = vpack.c.b16 %v827, %v823
        %v896 = vpack.c.b16 %v828, %v824
        %v897 = vpack.c.b16 %v829, %v825
        %v898 = vpack.c.b16 %v830, %v826
        %v899 = vpack.c.b16 %v835, %v831
        %v900 = vpack.c.b16 %v836, %v832
        %v901 = vpack.c.b16 %v837, %v833
        %v902 = vpack.c.b16 %v838, %v834
        %967 = vmatpush.bf16.msra.mxu0 %v867
        %968 = vmatpush.bf16.msra.mxu0 %v863
        %969 = vmatpush.bf16.msra.mxu0 %v859
        %970 = vmatpush.bf16.msra.mxu0 %v855
        %971 = vmatpush.bf16.msra.mxu0 %v851
        %972 = vmatpush.bf16.msra.mxu0 %v847
        %973 = vmatpush.bf16.msra.mxu0 %v843
        %974 = vmatpush.bf16.msra.mxu0 %v839
        %975 = vmatmul.bf16.gmra.mxu0 %v643
        %v976 = vpop.f32.mrf.mxu0
        %v977 = vadd.f32 %v629, %v976
        %v978 = vpop.f32.mrf.mxu0
        %v979 = vadd.f32 %v629, %v978
        %980 = vdwg.mxu0
        %981 = vmatpush.bf16.msra.mxu0 %v899
        %982 = vmatpush.bf16.msra.mxu0 %v895
        %983 = vmatpush.bf16.msra.mxu0 %v891
        %984 = vmatpush.bf16.msra.mxu0 %v887
        %985 = vmatpush.bf16.msra.mxu0 %v883
        %986 = vmatpush.bf16.msra.mxu0 %v879
        %987 = vmatpush.bf16.msra.mxu0 %v875
        %988 = vmatpush.bf16.msra.mxu0 %v871
        %989 = vmatmul.bf16.gmra.mxu0 %v644
        %v990 = vpop.f32.mrf.mxu0
        %v991 = vadd.f32 %v977, %v990
        %v992 = vpop.f32.mrf.mxu0
        %v993 = vadd.f32 %v979, %v992
        %994 = vdwg.mxu0
        %995 = vmatpush.bf16.msra.mxu0 %v868
        %996 = vmatpush.bf16.msra.mxu0 %v864
        %997 = vmatpush.bf16.msra.mxu0 %v860
        %998 = vmatpush.bf16.msra.mxu0 %v856
        %999 = vmatpush.bf16.msra.mxu0 %v852
        %1000 = vmatpush.bf16.msra.mxu0 %v848
        %1001 = vmatpush.bf16.msra.mxu0 %v844
        %1002 = vmatpush.bf16.msra.mxu0 %v840
        %1003 = vmatmul.bf16.gmra.mxu0 %v643
        %v1004 = vpop.f32.mrf.mxu0
        %v1005 = vadd.f32 %v630, %v1004
        %v1006 = vpop.f32.mrf.mxu0
        %v1007 = vadd.f32 %v630, %v1006
        %1008 = vdwg.mxu0
        %1009 = vmatpush.bf16.msra.mxu0 %v900
        %1010 = vmatpush.bf16.msra.mxu0 %v896
        %1011 = vmatpush.bf16.msra.mxu0 %v892
        %1012 = vmatpush.bf16.msra.mxu0 %v888
        %1013 = vmatpush.bf16.msra.mxu0 %v884
        %1014 = vmatpush.bf16.msra.mxu0 %v880
        %1015 = vmatpush.bf16.msra.mxu0 %v876
        %1016 = vmatpush.bf16.msra.mxu0 %v872
        %1017 = vmatmul.bf16.gmra.mxu0 %v644
        %v1018 = vpop.f32.mrf.mxu0
        %v1019 = vadd.f32 %v1005, %v1018
        %v1020 = vpop.f32.mrf.mxu0
        %v1021 = vadd.f32 %v1007, %v1020
        %1022 = vdwg.mxu0
        %1023 = vmatpush.bf16.msra.mxu0 %v869
        %1024 = vmatpush.bf16.msra.mxu0 %v865
        %1025 = vmatpush.bf16.msra.mxu0 %v861
        %1026 = vmatpush.bf16.msra.mxu0 %v857
        %1027 = vmatpush.bf16.msra.mxu0 %v853
        %1028 = vmatpush.bf16.msra.mxu0 %v849
        %1029 = vmatpush.bf16.msra.mxu0 %v845
        %1030 = vmatpush.bf16.msra.mxu0 %v841
        %1031 = vmatmul.bf16.gmra.mxu0 %v643
        %v1032 = vpop.f32.mrf.mxu0
        %v1033 = vadd.f32 %v631, %v1032
        %v1034 = vpop.f32.mrf.mxu0
        %v1035 = vadd.f32 %v631, %v1034
        %1036 = vdwg.mxu0
        %1037 = vmatpush.bf16.msra.mxu0 %v901
        %1038 = vmatpush.bf16.msra.mxu0 %v897
        %1039 = vmatpush.bf16.msra.mxu0 %v893
        %1040 = vmatpush.bf16.msra.mxu0 %v889
        %1041 = vmatpush.bf16.msra.mxu0 %v885
        %1042 = vmatpush.bf16.msra.mxu0 %v881
        %1043 = vmatpush.bf16.msra.mxu0 %v877
        %1044 = vmatpush.bf16.msra.mxu0 %v873
        %1045 = vmatmul.bf16.gmra.mxu0 %v644
        %v1046 = vpop.f32.mrf.mxu0
        %v1047 = vadd.f32 %v1033, %v1046
        %v1048 = vpop.f32.mrf.mxu0
        %v1049 = vadd.f32 %v1035, %v1048
        %1050 = vdwg.mxu0
        %1051 = vmatpush.bf16.msra.mxu0 %v870
        %1052 = vmatpush.bf16.msra.mxu0 %v866
        %1053 = vmatpush.bf16.msra.mxu0 %v862
        %1054 = vmatpush.bf16.msra.mxu0 %v858
        %1055 = vmatpush.bf16.msra.mxu0 %v854
        %1056 = vmatpush.bf16.msra.mxu0 %v850
        %1057 = vmatpush.bf16.msra.mxu0 %v846
        %1058 = vmatpush.bf16.msra.mxu0 %v842
        %1059 = vmatmul.bf16.gmra.mxu0 %v643
        %v1060 = vpop.f32.mrf.mxu0
        %v1061 = vadd.f32 %v632, %v1060
        %v1062 = vpop.f32.mrf.mxu0
        %v1063 = vadd.f32 %v632, %v1062
        %1064 = vdwg.mxu0
        %1065 = vmatpush.bf16.msra.mxu0 %v902
        %1066 = vmatpush.bf16.msra.mxu0 %v898
        %1067 = vmatpush.bf16.msra.mxu0 %v894
        %1068 = vmatpush.bf16.msra.mxu0 %v890
        %1069 = vmatpush.bf16.msra.mxu0 %v886
        %1070 = vmatpush.bf16.msra.mxu0 %v882
        %1071 = vmatpush.bf16.msra.mxu0 %v878
        %1072 = vmatpush.bf16.msra.mxu0 %v874
        %1073 = vmatmul.bf16.gmra.mxu0 %v644
        %v1074 = vpop.f32.mrf.mxu0
        %v1075 = vadd.f32 %v1061, %v1074
        %v1076 = vpop.f32.mrf.mxu0
        %v1077 = vadd.f32 %v1063, %v1076
        %1078 = vdwg.mxu0
        %v1079 = vadd.f32 %v991, %v993
        %v1080 = vrot.slane %v1079, 4
        %v1081 = vadd.f32 %v1079, %v1080
        %v1082 = vrot.slane %v1081, 2
        %v1083 = vadd.f32 %v1081, %v1082
        %v1084 = vrot.slane %v1083, 1
        %v1085 = vadd.f32 %v1083, %v1084
        %v1086 = vadd.f32 %v1019, %v1021
        %v1087 = vrot.slane %v1086, 4
        %v1088 = vadd.f32 %v1086, %v1087
        %v1089 = vrot.slane %v1088, 2
        %v1090 = vadd.f32 %v1088, %v1089
        %v1091 = vrot.slane %v1090, 1
        %v1092 = vadd.f32 %v1090, %v1091
        %v1093 = vadd.f32 %v1047, %v1049
        %v1094 = vrot.slane %v1093, 4
        %v1095 = vadd.f32 %v1093, %v1094
        %v1096 = vrot.slane %v1095, 2
        %v1097 = vadd.f32 %v1095, %v1096
        %v1098 = vrot.slane %v1097, 1
        %v1099 = vadd.f32 %v1097, %v1098
        %v1100 = vadd.f32 %v1075, %v1077
        %v1101 = vrot.slane %v1100, 4
        %v1102 = vadd.f32 %v1100, %v1101
        %v1103 = vrot.slane %v1102, 2
        %v1104 = vadd.f32 %v1102, %v1103
        %v1105 = vrot.slane %v1104, 1
        %v1106 = vadd.f32 %v1104, %v1105
        %v1107 = vadd.f32 %v1085, %v1099
        %v1108 = vadd.f32 %v1092, %v1106
        %v1109 = vadd.f32 %v1107, %v1108
        %1110 = vrot.lane.b32.xlu0 %v1109, 64
        %v1111 = vpop.permute.xlu0 %1110
        %v1112 = vlaneseq
        %v1113 = vand.u32 %v1112, 127
        %v1114 = vadd.f32 %v1109, %v1111
        %1115 = vrot.lane.b32.xlu0 %v1114, 32
        %v1116 = vpop.permute.xlu0 %1115
        %v1117 = vadd.f32 %v1114, %v1116
        %v1118 = vmul.f32 %v1117, 0.00390625
        %v1119 = vperm.slane %v1118, 0
        %v1120 = vsub.f32 %v991, %v1119
        %v1121 = vsub.f32 %v1019, %v1119
        %v1122 = vsub.f32 %v1047, %v1119
        %v1123 = vsub.f32 %v1075, %v1119
        %v1124 = vsub.f32 %v993, %v1119
        %v1125 = vsub.f32 %v1021, %v1119
        %v1126 = vsub.f32 %v1049, %v1119
        %v1127 = vsub.f32 %v1077, %v1119
        %v1128 = vmul.f32 %v1120, %v1120
        %v1129 = vmul.f32 %v1121, %v1121
        %v1130 = vmul.f32 %v1122, %v1122
        %v1131 = vmul.f32 %v1123, %v1123
        %v1132 = vmul.f32 %v1124, %v1124
        %v1133 = vmul.f32 %v1125, %v1125
        %v1134 = vmul.f32 %v1126, %v1126
        %v1135 = vmul.f32 %v1127, %v1127
        %v1136 = vadd.f32 %v1128, %v1132
        %v1137 = vrot.slane %v1136, 4
        %v1138 = vadd.f32 %v1136, %v1137
        %v1139 = vrot.slane %v1138, 2
        %v1140 = vadd.f32 %v1138, %v1139
        %v1141 = vrot.slane %v1140, 1
        %v1142 = vadd.f32 %v1140, %v1141
        %v1143 = vadd.f32 %v1129, %v1133
        %v1144 = vrot.slane %v1143, 4
        %v1145 = vadd.f32 %v1143, %v1144
        %v1146 = vrot.slane %v1145, 2
        %v1147 = vadd.f32 %v1145, %v1146
        %v1148 = vrot.slane %v1147, 1
        %v1149 = vadd.f32 %v1147, %v1148
        %v1150 = vadd.f32 %v1130, %v1134
        %v1151 = vrot.slane %v1150, 4
        %v1152 = vadd.f32 %v1150, %v1151
        %v1153 = vrot.slane %v1152, 2
        %v1154 = vadd.f32 %v1152, %v1153
        %v1155 = vrot.slane %v1154, 1
        %v1156 = vadd.f32 %v1154, %v1155
        %v1157 = vadd.f32 %v1131, %v1135
        %v1158 = vrot.slane %v1157, 4
        %v1159 = vadd.f32 %v1157, %v1158
        %v1160 = vrot.slane %v1159, 2
        %v1161 = vadd.f32 %v1159, %v1160
        %v1162 = vrot.slane %v1161, 1
        %v1163 = vadd.f32 %v1161, %v1162
        %v1164 = vadd.f32 %v1142, %v1156
        %v1165 = vadd.f32 %v1149, %v1163
        %v1166 = vadd.f32 %v1164, %v1165
        %1167 = vrot.lane.b32.xlu0 %v1166, 64
        %v1168 = vpop.permute.xlu0 %1167
        %v1169 = vadd.f32 %v1166, %v1168
        %1170 = vrot.lane.b32.xlu0 %v1169, 32
        %v1171 = vpop.permute.xlu0 %1170
        %v1172 = vadd.f32 %v1169, %v1171
        %v1173 = vmul.f32 %v1172, 0.00390625
        %v1174 = vadd.f32 %v1173, 1e-05
        %v1175 = vrsqrt.pop %v1174
        %v1176 = vmul.f32 %v1175, %v1174
        %v1177 = vmul.f32 %v1176, %v1175
        %v1178 = vmul.f32 0.5, %v1177
        %v1179 = vsub.f32 1.5, %v1178
        %v1180 = vmul.f32 %v1175, %v1179
        %vm1181 = vweird.f32 %v1174
        %vm1182 = vweird.f32 %v1175
        %vm1183 = vmor %vm1181, %vm1182
        %v1184 = vsel %vm1183, %v1175, %v1180
        %v1185 = vperm.slane %v1184, 0
        %v1186 = vmul.f32 %v1120, %v1185
        %v1187 = vmul.f32 %v1121, %v1185
        %v1188 = vmul.f32 %v1122, %v1185
        %v1189 = vmul.f32 %v1123, %v1185
        %v1190 = vmul.f32 %v1124, %v1185
        %v1191 = vmul.f32 %v1125, %v1185
        %v1192 = vmul.f32 %v1126, %v1185
        %v1193 = vmul.f32 %v1127, %v1185
        %v1194 = vld [vmem:[#allocation8] sm:$0xff]
        %v1195 = vld [vmem:[#allocation8 + $0x8] sm:$0xff]
        %v1196 = vld [vmem:[#allocation8 + $0x10] sm:$0xff]
        %v1197 = vld [vmem:[#allocation8 + $0x18] sm:$0xff]
        %v1198 = vld [vmem:[#allocation8 + $0x20] sm:$0xff]
        %v1199 = vld [vmem:[#allocation8 + $0x28] sm:$0xff]
        %v1200 = vld [vmem:[#allocation8 + $0x30] sm:$0xff]
        %v1201 = vld [vmem:[#allocation8 + $0x38] sm:$0xff]
        %v1202 = vmul.f32 %v1186, %v1194
        %v1203 = vmul.f32 %v1187, %v1195
        %v1204 = vmul.f32 %v1188, %v1196
        %v1205 = vmul.f32 %v1189, %v1197
        %v1206 = vmul.f32 %v1190, %v1198
        %v1207 = vmul.f32 %v1191, %v1199
        %v1208 = vmul.f32 %v1192, %v1200
        %v1209 = vmul.f32 %v1193, %v1201
        %v1210 = vld [vmem:[#allocation10] sm:$0xff]
        %v1211 = vld [vmem:[#allocation10 + $0x8] sm:$0xff]
        %v1212 = vld [vmem:[#allocation10 + $0x10] sm:$0xff]
        %v1213 = vld [vmem:[#allocation10 + $0x18] sm:$0xff]
        %v1214 = vld [vmem:[#allocation10 + $0x20] sm:$0xff]
        %v1215 = vld [vmem:[#allocation10 + $0x28] sm:$0xff]
        %v1216 = vld [vmem:[#allocation10 + $0x30] sm:$0xff]
        %v1217 = vld [vmem:[#allocation10 + $0x38] sm:$0xff]
        %v1218 = vadd.f32 %v1202, %v1210
        %v1219 = vadd.f32 %v1203, %v1211
        %v1220 = vadd.f32 %v1204, %v1212
        %v1221 = vadd.f32 %v1205, %v1213
        %v1222 = vadd.f32 %v1206, %v1214
        %v1223 = vadd.f32 %v1207, %v1215
        %v1224 = vadd.f32 %v1208, %v1216
        %v1225 = vadd.f32 %v1209, %v1217
        %vm1226 = vcmp.ge.f32.partialorder %v1218, 0.0
        %vm1227 = vcmp.ge.f32.partialorder %v1219, 0.0
        %vm1228 = vcmp.ge.f32.partialorder %v1220, 0.0
        %vm1229 = vcmp.ge.f32.partialorder %v1221, 0.0
        %vm1230 = vcmp.ge.f32.partialorder %v1222, 0.0
        %vm1231 = vcmp.ge.f32.partialorder %v1223, 0.0
        %vm1232 = vcmp.ge.f32.partialorder %v1224, 0.0
        %vm1233 = vcmp.ge.f32.partialorder %v1225, 0.0
        %v1234 = vmul.f32 %v1218, 0.01
        %v1235 = vmul.f32 %v1219, 0.01
        %v1236 = vmul.f32 %v1220, 0.01
        %v1237 = vmul.f32 %v1221, 0.01
        %v1238 = vmul.f32 %v1222, 0.01
        %v1239 = vmul.f32 %v1223, 0.01
        %v1240 = vmul.f32 %v1224, 0.01
        %v1241 = vmul.f32 %v1225, 0.01
        %v1242 = vsel %vm1226, %v1218, %v1234
        %v1243 = vsel %vm1227, %v1219, %v1235
        %v1244 = vsel %vm1228, %v1220, %v1236
        %v1245 = vsel %vm1229, %v1221, %v1237
        %v1246 = vsel %vm1230, %v1222, %v1238
        %v1247 = vsel %vm1231, %v1223, %v1239
        %v1248 = vsel %vm1232, %v1224, %v1240
        %v1249 = vsel %vm1233, %v1225, %v1241
        %v1254 = vrot.slane %v1242, 7
        %v1255 = vrot.slane %v1243, 7
        %v1256 = vrot.slane %v1244, 7
        %v1257 = vrot.slane %v1245, 7
        %vm1262 = vcmask 1040384
        %v1263 = vsel %vm1262, 0.0, %v1254
        %v1264 = vsel %vm1262, 0.0, %v1255
        %v1265 = vsel %vm1262, 0.0, %v1256
        %v1266 = vsel %vm1262, 0.0, %v1257
        %v1271 = vrot.slane %v1246, 7
        %v1272 = vrot.slane %v1247, 7
        %v1273 = vrot.slane %v1248, 7
        %v1274 = vrot.slane %v1249, 7
        %v1279 = vsel %vm1262, 0.0, %v1271
        %v1280 = vsel %vm1262, 0.0, %v1272
        %v1281 = vsel %vm1262, 0.0, %v1273
        %v1282 = vsel %vm1262, 0.0, %v1274
        %v1283 = vrot.slane %v1242, 1
        %v1284 = vrot.slane %v1243, 1
        %v1285 = vrot.slane %v1244, 1
        %v1286 = vrot.slane %v1245, 1
        %vm1291 = vcmask 1046528
        %v1292 = vsel %vm1291, %v1283, 0.0
        %v1293 = vsel %vm1291, %v1284, 0.0
        %v1294 = vsel %vm1291, %v1285, 0.0
        %v1295 = vsel %vm1291, %v1286, 0.0
        %v1296 = vpack.c.bf16 %v1263, %v1263
        %v1297 = vpack.c.bf16 %v1264, %v1264
        %v1298 = vpack.c.bf16 %v1265, %v1265
        %v1299 = vpack.c.bf16 %v1266, %v1266
        %v1300 = vld [vmem:[#allocation11] sm:$0xff]
        %v1301 = vld [vmem:[#allocation11 + $0x8] sm:$0xff]
        %v1302 = vld [vmem:[#allocation11 + $0x10] sm:$0xff]
        %v1303 = vld [vmem:[#allocation11 + $0x18] sm:$0xff]
        %v1304 = vld [vmem:[#allocation11 + $0x20] sm:$0xff]
        %v1305 = vld [vmem:[#allocation11 + $0x28] sm:$0xff]
        %v1306 = vld [vmem:[#allocation11 + $0x30] sm:$0xff]
        %v1307 = vld [vmem:[#allocation11 + $0x38] sm:$0xff]
        %v1308 = vld [vmem:[#allocation11 + $0x40] sm:$0xff]
        %v1309 = vld [vmem:[#allocation11 + $0x48] sm:$0xff]
        %v1310 = vld [vmem:[#allocation11 + $0x50] sm:$0xff]
        %v1311 = vld [vmem:[#allocation11 + $0x58] sm:$0xff]
        %v1312 = vld [vmem:[#allocation11 + $0x60] sm:$0xff]
        %v1313 = vld [vmem:[#allocation11 + $0x68] sm:$0xff]
        %v1314 = vld [vmem:[#allocation11 + $0x70] sm:$0xff]
        %v1315 = vld [vmem:[#allocation11 + $0x78] sm:$0xff]
        %v1316 = vld [vmem:[#allocation11 + $0x80] sm:$0xff]
        %v1317 = vld [vmem:[#allocation11 + $0x88] sm:$0xff]
        %v1318 = vld [vmem:[#allocation11 + $0x90] sm:$0xff]
        %v1319 = vld [vmem:[#allocation11 + $0x98] sm:$0xff]
        %v1320 = vld [vmem:[#allocation11 + $0xa0] sm:$0xff]
        %v1321 = vld [vmem:[#allocation11 + $0xa8] sm:$0xff]
        %v1322 = vld [vmem:[#allocation11 + $0xb0] sm:$0xff]
        %v1323 = vld [vmem:[#allocation11 + $0xb8] sm:$0xff]
        %v1324 = vld [vmem:[#allocation11 + $0xc0] sm:$0xff]
        %v1325 = vld [vmem:[#allocation11 + $0xc8] sm:$0xff]
        %v1326 = vld [vmem:[#allocation11 + $0xd0] sm:$0xff]
        %v1327 = vld [vmem:[#allocation11 + $0xd8] sm:$0xff]
        %v1328 = vld [vmem:[#allocation11 + $0xe0] sm:$0xff]
        %v1329 = vld [vmem:[#allocation11 + $0xe8] sm:$0xff]
        %v1330 = vld [vmem:[#allocation11 + $0xf0] sm:$0xff]
        %v1331 = vld [vmem:[#allocation11 + $0xf8] sm:$0xff]
        %v1332 = vld [vmem:[#allocation11 + $0x100] sm:$0xff]
        %v1333 = vld [vmem:[#allocation11 + $0x108] sm:$0xff]
        %v1334 = vld [vmem:[#allocation11 + $0x110] sm:$0xff]
        %v1335 = vld [vmem:[#allocation11 + $0x118] sm:$0xff]
        %v1336 = vld [vmem:[#allocation11 + $0x120] sm:$0xff]
        %v1337 = vld [vmem:[#allocation11 + $0x128] sm:$0xff]
        %v1338 = vld [vmem:[#allocation11 + $0x130] sm:$0xff]
        %v1339 = vld [vmem:[#allocation11 + $0x138] sm:$0xff]
        %v1340 = vld [vmem:[#allocation11 + $0x140] sm:$0xff]
        %v1341 = vld [vmem:[#allocation11 + $0x148] sm:$0xff]
        %v1342 = vld [vmem:[#allocation11 + $0x150] sm:$0xff]
        %v1343 = vld [vmem:[#allocation11 + $0x158] sm:$0xff]
        %v1344 = vld [vmem:[#allocation11 + $0x160] sm:$0xff]
        %v1345 = vld [vmem:[#allocation11 + $0x168] sm:$0xff]
        %v1346 = vld [vmem:[#allocation11 + $0x170] sm:$0xff]
        %v1347 = vld [vmem:[#allocation11 + $0x178] sm:$0xff]
        %v1348 = vld [vmem:[#allocation11 + $0x180] sm:$0xff]
        %v1349 = vld [vmem:[#allocation11 + $0x188] sm:$0xff]
        %v1350 = vld [vmem:[#allocation11 + $0x190] sm:$0xff]
        %v1351 = vld [vmem:[#allocation11 + $0x198] sm:$0xff]
        %v1352 = vld [vmem:[#allocation11 + $0x1a0] sm:$0xff]
        %v1353 = vld [vmem:[#allocation11 + $0x1a8] sm:$0xff]
        %v1354 = vld [vmem:[#allocation11 + $0x1b0] sm:$0xff]
        %v1355 = vld [vmem:[#allocation11 + $0x1b8] sm:$0xff]
        %v1356 = vld [vmem:[#allocation11 + $0x1c0] sm:$0xff]
        %v1357 = vld [vmem:[#allocation11 + $0x1c8] sm:$0xff]
        %v1358 = vld [vmem:[#allocation11 + $0x1d0] sm:$0xff]
        %v1359 = vld [vmem:[#allocation11 + $0x1d8] sm:$0xff]
        %v1360 = vld [vmem:[#allocation11 + $0x1e0] sm:$0xff]
        %v1361 = vld [vmem:[#allocation11 + $0x1e8] sm:$0xff]
        %v1362 = vld [vmem:[#allocation11 + $0x1f0] sm:$0xff]
        %v1363 = vld [vmem:[#allocation11 + $0x1f8] sm:$0xff]
        %v1364 = vld [vmem:[#allocation11 + $0x200] sm:$0xff]
        %v1365 = vld [vmem:[#allocation11 + $0x208] sm:$0xff]
        %v1366 = vld [vmem:[#allocation11 + $0x210] sm:$0xff]
        %v1367 = vld [vmem:[#allocation11 + $0x218] sm:$0xff]
        %v1368 = vld [vmem:[#allocation11 + $0x220] sm:$0xff]
        %v1369 = vld [vmem:[#allocation11 + $0x228] sm:$0xff]
        %v1370 = vld [vmem:[#allocation11 + $0x230] sm:$0xff]
        %v1371 = vld [vmem:[#allocation11 + $0x238] sm:$0xff]
        %v1372 = vld [vmem:[#allocation11 + $0x240] sm:$0xff]
        %v1373 = vld [vmem:[#allocation11 + $0x248] sm:$0xff]
        %v1374 = vld [vmem:[#allocation11 + $0x250] sm:$0xff]
        %v1375 = vld [vmem:[#allocation11 + $0x258] sm:$0xff]
        %v1376 = vld [vmem:[#allocation11 + $0x260] sm:$0xff]
        %v1377 = vld [vmem:[#allocation11 + $0x268] sm:$0xff]
        %v1378 = vld [vmem:[#allocation11 + $0x270] sm:$0xff]
        %v1379 = vld [vmem:[#allocation11 + $0x278] sm:$0xff]
        %v1380 = vld [vmem:[#allocation11 + $0x280] sm:$0xff]
        %v1381 = vld [vmem:[#allocation11 + $0x288] sm:$0xff]
        %v1382 = vld [vmem:[#allocation11 + $0x290] sm:$0xff]
        %v1383 = vld [vmem:[#allocation11 + $0x298] sm:$0xff]
        %v1384 = vld [vmem:[#allocation11 + $0x2a0] sm:$0xff]
        %v1385 = vld [vmem:[#allocation11 + $0x2a8] sm:$0xff]
        %v1386 = vld [vmem:[#allocation11 + $0x2b0] sm:$0xff]
        %v1387 = vld [vmem:[#allocation11 + $0x2b8] sm:$0xff]
        %v1388 = vld [vmem:[#allocation11 + $0x2c0] sm:$0xff]
        %v1389 = vld [vmem:[#allocation11 + $0x2c8] sm:$0xff]
        %v1390 = vld [vmem:[#allocation11 + $0x2d0] sm:$0xff]
        %v1391 = vld [vmem:[#allocation11 + $0x2d8] sm:$0xff]
        %v1392 = vld [vmem:[#allocation11 + $0x2e0] sm:$0xff]
        %v1393 = vld [vmem:[#allocation11 + $0x2e8] sm:$0xff]
        %v1394 = vld [vmem:[#allocation11 + $0x2f0] sm:$0xff]
        %v1395 = vld [vmem:[#allocation11 + $0x2f8] sm:$0xff]
        %v1396 = vld [vmem:[#allocation11 + $0x300] sm:$0xff]
        %v1397 = vld [vmem:[#allocation11 + $0x308] sm:$0xff]
        %v1398 = vld [vmem:[#allocation11 + $0x310] sm:$0xff]
        %v1399 = vld [vmem:[#allocation11 + $0x318] sm:$0xff]
        %v1400 = vld [vmem:[#allocation11 + $0x320] sm:$0xff]
        %v1401 = vld [vmem:[#allocation11 + $0x328] sm:$0xff]
        %v1402 = vld [vmem:[#allocation11 + $0x330] sm:$0xff]
        %v1403 = vld [vmem:[#allocation11 + $0x338] sm:$0xff]
        %v1404 = vld [vmem:[#allocation11 + $0x340] sm:$0xff]
        %v1405 = vld [vmem:[#allocation11 + $0x348] sm:$0xff]
        %v1406 = vld [vmem:[#allocation11 + $0x350] sm:$0xff]
        %v1407 = vld [vmem:[#allocation11 + $0x358] sm:$0xff]
        %v1408 = vld [vmem:[#allocation11 + $0x360] sm:$0xff]
        %v1409 = vld [vmem:[#allocation11 + $0x368] sm:$0xff]
        %v1410 = vld [vmem:[#allocation11 + $0x370] sm:$0xff]
        %v1411 = vld [vmem:[#allocation11 + $0x378] sm:$0xff]
        %v1412 = vld [vmem:[#allocation11 + $0x380] sm:$0xff]
        %v1413 = vld [vmem:[#allocation11 + $0x388] sm:$0xff]
        %v1414 = vld [vmem:[#allocation11 + $0x390] sm:$0xff]
        %v1415 = vld [vmem:[#allocation11 + $0x398] sm:$0xff]
        %v1416 = vld [vmem:[#allocation11 + $0x3a0] sm:$0xff]
        %v1417 = vld [vmem:[#allocation11 + $0x3a8] sm:$0xff]
        %v1418 = vld [vmem:[#allocation11 + $0x3b0] sm:$0xff]
        %v1419 = vld [vmem:[#allocation11 + $0x3b8] sm:$0xff]
        %v1420 = vld [vmem:[#allocation11 + $0x3c0] sm:$0xff]
        %v1421 = vld [vmem:[#allocation11 + $0x3c8] sm:$0xff]
        %v1422 = vld [vmem:[#allocation11 + $0x3d0] sm:$0xff]
        %v1423 = vld [vmem:[#allocation11 + $0x3d8] sm:$0xff]
        %v1424 = vld [vmem:[#allocation11 + $0x3e0] sm:$0xff]
        %v1425 = vld [vmem:[#allocation11 + $0x3e8] sm:$0xff]
        %v1426 = vld [vmem:[#allocation11 + $0x3f0] sm:$0xff]
        %v1427 = vld [vmem:[#allocation11 + $0x3f8] sm:$0xff]
        %v1428 = vpack.c.bf16 %v1279, %v1279
        %v1429 = vpack.c.bf16 %v1280, %v1280
        %v1430 = vpack.c.bf16 %v1281, %v1281
        %v1431 = vpack.c.bf16 %v1282, %v1282
        %s1432 = scalar_lea.vmem [#allocation11], 1024
        %v1433 = vld [vmem:[%s1432] sm:$0xff]
        %v1434 = vld [vmem:[%s1432 + $0x8] sm:$0xff]
        %v1435 = vld [vmem:[%s1432 + $0x10] sm:$0xff]
        %v1436 = vld [vmem:[%s1432 + $0x18] sm:$0xff]
        %v1437 = vld [vmem:[%s1432 + $0x20] sm:$0xff]
        %v1438 = vld [vmem:[%s1432 + $0x28] sm:$0xff]
        %v1439 = vld [vmem:[%s1432 + $0x30] sm:$0xff]
        %v1440 = vld [vmem:[%s1432 + $0x38] sm:$0xff]
        %v1441 = vld [vmem:[%s1432 + $0x40] sm:$0xff]
        %v1442 = vld [vmem:[%s1432 + $0x48] sm:$0xff]
        %v1443 = vld [vmem:[%s1432 + $0x50] sm:$0xff]
        %v1444 = vld [vmem:[%s1432 + $0x58] sm:$0xff]
        %v1445 = vld [vmem:[%s1432 + $0x60] sm:$0xff]
        %v1446 = vld [vmem:[%s1432 + $0x68] sm:$0xff]
        %v1447 = vld [vmem:[%s1432 + $0x70] sm:$0xff]
        %v1448 = vld [vmem:[%s1432 + $0x78] sm:$0xff]
        %v1449 = vld [vmem:[%s1432 + $0x80] sm:$0xff]
        %v1450 = vld [vmem:[%s1432 + $0x88] sm:$0xff]
        %v1451 = vld [vmem:[%s1432 + $0x90] sm:$0xff]
        %v1452 = vld [vmem:[%s1432 + $0x98] sm:$0xff]
        %v1453 = vld [vmem:[%s1432 + $0xa0] sm:$0xff]
        %v1454 = vld [vmem:[%s1432 + $0xa8] sm:$0xff]
        %v1455 = vld [vmem:[%s1432 + $0xb0] sm:$0xff]
        %v1456 = vld [vmem:[%s1432 + $0xb8] sm:$0xff]
        %v1457 = vld [vmem:[%s1432 + $0xc0] sm:$0xff]
        %v1458 = vld [vmem:[%s1432 + $0xc8] sm:$0xff]
        %v1459 = vld [vmem:[%s1432 + $0xd0] sm:$0xff]
        %v1460 = vld [vmem:[%s1432 + $0xd8] sm:$0xff]
        %v1461 = vld [vmem:[%s1432 + $0xe0] sm:$0xff]
        %v1462 = vld [vmem:[%s1432 + $0xe8] sm:$0xff]
        %v1463 = vld [vmem:[%s1432 + $0xf0] sm:$0xff]
        %v1464 = vld [vmem:[%s1432 + $0xf8] sm:$0xff]
        %v1465 = vld [vmem:[%s1432 + $0x100] sm:$0xff]
        %v1466 = vld [vmem:[%s1432 + $0x108] sm:$0xff]
        %v1467 = vld [vmem:[%s1432 + $0x110] sm:$0xff]
        %v1468 = vld [vmem:[%s1432 + $0x118] sm:$0xff]
        %v1469 = vld [vmem:[%s1432 + $0x120] sm:$0xff]
        %v1470 = vld [vmem:[%s1432 + $0x128] sm:$0xff]
        %v1471 = vld [vmem:[%s1432 + $0x130] sm:$0xff]
        %v1472 = vld [vmem:[%s1432 + $0x138] sm:$0xff]
        %v1473 = vld [vmem:[%s1432 + $0x140] sm:$0xff]
        %v1474 = vld [vmem:[%s1432 + $0x148] sm:$0xff]
        %v1475 = vld [vmem:[%s1432 + $0x150] sm:$0xff]
        %v1476 = vld [vmem:[%s1432 + $0x158] sm:$0xff]
        %v1477 = vld [vmem:[%s1432 + $0x160] sm:$0xff]
        %v1478 = vld [vmem:[%s1432 + $0x168] sm:$0xff]
        %v1479 = vld [vmem:[%s1432 + $0x170] sm:$0xff]
        %v1480 = vld [vmem:[%s1432 + $0x178] sm:$0xff]
        %v1481 = vld [vmem:[%s1432 + $0x180] sm:$0xff]
        %v1482 = vld [vmem:[%s1432 + $0x188] sm:$0xff]
        %v1483 = vld [vmem:[%s1432 + $0x190] sm:$0xff]
        %v1484 = vld [vmem:[%s1432 + $0x198] sm:$0xff]
        %v1485 = vld [vmem:[%s1432 + $0x1a0] sm:$0xff]
        %v1486 = vld [vmem:[%s1432 + $0x1a8] sm:$0xff]
        %v1487 = vld [vmem:[%s1432 + $0x1b0] sm:$0xff]
        %v1488 = vld [vmem:[%s1432 + $0x1b8] sm:$0xff]
        %v1489 = vld [vmem:[%s1432 + $0x1c0] sm:$0xff]
        %v1490 = vld [vmem:[%s1432 + $0x1c8] sm:$0xff]
        %v1491 = vld [vmem:[%s1432 + $0x1d0] sm:$0xff]
        %v1492 = vld [vmem:[%s1432 + $0x1d8] sm:$0xff]
        %v1493 = vld [vmem:[%s1432 + $0x1e0] sm:$0xff]
        %v1494 = vld [vmem:[%s1432 + $0x1e8] sm:$0xff]
        %v1495 = vld [vmem:[%s1432 + $0x1f0] sm:$0xff]
        %v1496 = vld [vmem:[%s1432 + $0x1f8] sm:$0xff]
        %v1497 = vld [vmem:[%s1432 + $0x200] sm:$0xff]
        %v1498 = vld [vmem:[%s1432 + $0x208] sm:$0xff]
        %v1499 = vld [vmem:[%s1432 + $0x210] sm:$0xff]
        %v1500 = vld [vmem:[%s1432 + $0x218] sm:$0xff]
        %v1501 = vld [vmem:[%s1432 + $0x220] sm:$0xff]
        %v1502 = vld [vmem:[%s1432 + $0x228] sm:$0xff]
        %v1503 = vld [vmem:[%s1432 + $0x230] sm:$0xff]
        %v1504 = vld [vmem:[%s1432 + $0x238] sm:$0xff]
        %v1505 = vld [vmem:[%s1432 + $0x240] sm:$0xff]
        %v1506 = vld [vmem:[%s1432 + $0x248] sm:$0xff]
        %v1507 = vld [vmem:[%s1432 + $0x250] sm:$0xff]
        %v1508 = vld [vmem:[%s1432 + $0x258] sm:$0xff]
        %v1509 = vld [vmem:[%s1432 + $0x260] sm:$0xff]
        %v1510 = vld [vmem:[%s1432 + $0x268] sm:$0xff]
        %v1511 = vld [vmem:[%s1432 + $0x270] sm:$0xff]
        %v1512 = vld [vmem:[%s1432 + $0x278] sm:$0xff]
        %v1513 = vld [vmem:[%s1432 + $0x280] sm:$0xff]
        %v1514 = vld [vmem:[%s1432 + $0x288] sm:$0xff]
        %v1515 = vld [vmem:[%s1432 + $0x290] sm:$0xff]
        %v1516 = vld [vmem:[%s1432 + $0x298] sm:$0xff]
        %v1517 = vld [vmem:[%s1432 + $0x2a0] sm:$0xff]
        %v1518 = vld [vmem:[%s1432 + $0x2a8] sm:$0xff]
        %v1519 = vld [vmem:[%s1432 + $0x2b0] sm:$0xff]
        %v1520 = vld [vmem:[%s1432 + $0x2b8] sm:$0xff]
        %v1521 = vld [vmem:[%s1432 + $0x2c0] sm:$0xff]
        %v1522 = vld [vmem:[%s1432 + $0x2c8] sm:$0xff]
        %v1523 = vld [vmem:[%s1432 + $0x2d0] sm:$0xff]
        %v1524 = vld [vmem:[%s1432 + $0x2d8] sm:$0xff]
        %v1525 = vld [vmem:[%s1432 + $0x2e0] sm:$0xff]
        %v1526 = vld [vmem:[%s1432 + $0x2e8] sm:$0xff]
        %v1527 = vld [vmem:[%s1432 + $0x2f0] sm:$0xff]
        %v1528 = vld [vmem:[%s1432 + $0x2f8] sm:$0xff]
        %v1529 = vld [vmem:[%s1432 + $0x300] sm:$0xff]
        %v1530 = vld [vmem:[%s1432 + $0x308] sm:$0xff]
        %v1531 = vld [vmem:[%s1432 + $0x310] sm:$0xff]
        %v1532 = vld [vmem:[%s1432 + $0x318] sm:$0xff]
        %v1533 = vld [vmem:[%s1432 + $0x320] sm:$0xff]
        %v1534 = vld [vmem:[%s1432 + $0x328] sm:$0xff]
        %v1535 = vld [vmem:[%s1432 + $0x330] sm:$0xff]
        %v1536 = vld [vmem:[%s1432 + $0x338] sm:$0xff]
        %v1537 = vld [vmem:[%s1432 + $0x340] sm:$0xff]
        %v1538 = vld [vmem:[%s1432 + $0x348] sm:$0xff]
        %v1539 = vld [vmem:[%s1432 + $0x350] sm:$0xff]
        %v1540 = vld [vmem:[%s1432 + $0x358] sm:$0xff]
        %v1541 = vld [vmem:[%s1432 + $0x360] sm:$0xff]
        %v1542 = vld [vmem:[%s1432 + $0x368] sm:$0xff]
        %v1543 = vld [vmem:[%s1432 + $0x370] sm:$0xff]
        %v1544 = vld [vmem:[%s1432 + $0x378] sm:$0xff]
        %v1545 = vld [vmem:[%s1432 + $0x380] sm:$0xff]
        %v1546 = vld [vmem:[%s1432 + $0x388] sm:$0xff]
        %v1547 = vld [vmem:[%s1432 + $0x390] sm:$0xff]
        %v1548 = vld [vmem:[%s1432 + $0x398] sm:$0xff]
        %v1549 = vld [vmem:[%s1432 + $0x3a0] sm:$0xff]
        %v1550 = vld [vmem:[%s1432 + $0x3a8] sm:$0xff]
        %v1551 = vld [vmem:[%s1432 + $0x3b0] sm:$0xff]
        %v1552 = vld [vmem:[%s1432 + $0x3b8] sm:$0xff]
        %v1553 = vld [vmem:[%s1432 + $0x3c0] sm:$0xff]
        %v1554 = vld [vmem:[%s1432 + $0x3c8] sm:$0xff]
        %v1555 = vld [vmem:[%s1432 + $0x3d0] sm:$0xff]
        %v1556 = vld [vmem:[%s1432 + $0x3d8] sm:$0xff]
        %v1557 = vld [vmem:[%s1432 + $0x3e0] sm:$0xff]
        %v1558 = vld [vmem:[%s1432 + $0x3e8] sm:$0xff]
        %v1559 = vld [vmem:[%s1432 + $0x3f0] sm:$0xff]
        %v1560 = vld [vmem:[%s1432 + $0x3f8] sm:$0xff]
        %v1689 = vunpack.c.l.b16 %v1433
        %v1690 = vunpack.c.h.b16 %v1433
        %v1691 = vunpack.c.l.b16 %v1434
        %v1692 = vunpack.c.h.b16 %v1434
        %v1693 = vunpack.c.l.b16 %v1435
        %v1694 = vunpack.c.h.b16 %v1435
        %v1695 = vunpack.c.l.b16 %v1436
        %v1696 = vunpack.c.h.b16 %v1436
        %v1697 = vunpack.c.l.b16 %v1437
        %v1698 = vunpack.c.h.b16 %v1437
        %v1699 = vunpack.c.l.b16 %v1438
        %v1700 = vunpack.c.h.b16 %v1438
        %v1701 = vunpack.c.l.b16 %v1439
        %v1702 = vunpack.c.h.b16 %v1439
        %v1703 = vunpack.c.l.b16 %v1440
        %v1704 = vunpack.c.h.b16 %v1440
        %v1705 = vunpack.c.l.b16 %v1441
        %v1706 = vunpack.c.h.b16 %v1441
        %v1707 = vunpack.c.l.b16 %v1442
        %v1708 = vunpack.c.h.b16 %v1442
        %v1709 = vunpack.c.l.b16 %v1443
        %v1710 = vunpack.c.h.b16 %v1443
        %v1711 = vunpack.c.l.b16 %v1444
        %v1712 = vunpack.c.h.b16 %v1444
        %v1713 = vunpack.c.l.b16 %v1445
        %v1714 = vunpack.c.h.b16 %v1445
        %v1715 = vunpack.c.l.b16 %v1446
        %v1716 = vunpack.c.h.b16 %v1446
        %v1717 = vunpack.c.l.b16 %v1447
        %v1718 = vunpack.c.h.b16 %v1447
        %v1719 = vunpack.c.l.b16 %v1448
        %v1720 = vunpack.c.h.b16 %v1448
        %v1721 = vunpack.c.l.b16 %v1449
        %v1722 = vunpack.c.h.b16 %v1449
        %v1723 = vunpack.c.l.b16 %v1450
        %v1724 = vunpack.c.h.b16 %v1450
        %v1725 = vunpack.c.l.b16 %v1451
        %v1726 = vunpack.c.h.b16 %v1451
        %v1727 = vunpack.c.l.b16 %v1452
        %v1728 = vunpack.c.h.b16 %v1452
        %v1729 = vunpack.c.l.b16 %v1453
        %v1730 = vunpack.c.h.b16 %v1453
        %v1731 = vunpack.c.l.b16 %v1454
        %v1732 = vunpack.c.h.b16 %v1454
        %v1733 = vunpack.c.l.b16 %v1455
        %v1734 = vunpack.c.h.b16 %v1455
        %v1735 = vunpack.c.l.b16 %v1456
        %v1736 = vunpack.c.h.b16 %v1456
        %v1737 = vunpack.c.l.b16 %v1457
        %v1738 = vunpack.c.h.b16 %v1457
        %v1739 = vunpack.c.l.b16 %v1458
        %v1740 = vunpack.c.h.b16 %v1458
        %v1741 = vunpack.c.l.b16 %v1459
        %v1742 = vunpack.c.h.b16 %v1459
        %v1743 = vunpack.c.l.b16 %v1460
        %v1744 = vunpack.c.h.b16 %v1460
        %v1745 = vunpack.c.l.b16 %v1461
        %v1746 = vunpack.c.h.b16 %v1461
        %v1747 = vunpack.c.l.b16 %v1462
        %v1748 = vunpack.c.h.b16 %v1462
        %v1749 = vunpack.c.l.b16 %v1463
        %v1750 = vunpack.c.h.b16 %v1463
        %v1751 = vunpack.c.l.b16 %v1464
        %v1752 = vunpack.c.h.b16 %v1464
        %v1753 = vunpack.c.l.b16 %v1465
        %v1754 = vunpack.c.h.b16 %v1465
        %v1755 = vunpack.c.l.b16 %v1466
        %v1756 = vunpack.c.h.b16 %v1466
        %v1757 = vunpack.c.l.b16 %v1467
        %v1758 = vunpack.c.h.b16 %v1467
        %v1759 = vunpack.c.l.b16 %v1468
        %v1760 = vunpack.c.h.b16 %v1468
        %v1761 = vunpack.c.l.b16 %v1469
        %v1762 = vunpack.c.h.b16 %v1469
        %v1763 = vunpack.c.l.b16 %v1470
        %v1764 = vunpack.c.h.b16 %v1470
        %v1765 = vunpack.c.l.b16 %v1471
        %v1766 = vunpack.c.h.b16 %v1471
        %v1767 = vunpack.c.l.b16 %v1472
        %v1768 = vunpack.c.h.b16 %v1472
        %v1769 = vunpack.c.l.b16 %v1473
        %v1770 = vunpack.c.h.b16 %v1473
        %v1771 = vunpack.c.l.b16 %v1474
        %v1772 = vunpack.c.h.b16 %v1474
        %v1773 = vunpack.c.l.b16 %v1475
        %v1774 = vunpack.c.h.b16 %v1475
        %v1775 = vunpack.c.l.b16 %v1476
        %v1776 = vunpack.c.h.b16 %v1476
        %v1777 = vunpack.c.l.b16 %v1477
        %v1778 = vunpack.c.h.b16 %v1477
        %v1779 = vunpack.c.l.b16 %v1478
        %v1780 = vunpack.c.h.b16 %v1478
        %v1781 = vunpack.c.l.b16 %v1479
        %v1782 = vunpack.c.h.b16 %v1479
        %v1783 = vunpack.c.l.b16 %v1480
        %v1784 = vunpack.c.h.b16 %v1480
        %v1785 = vunpack.c.l.b16 %v1481
        %v1786 = vunpack.c.h.b16 %v1481
        %v1787 = vunpack.c.l.b16 %v1482
        %v1788 = vunpack.c.h.b16 %v1482
        %v1789 = vunpack.c.l.b16 %v1483
        %v1790 = vunpack.c.h.b16 %v1483
        %v1791 = vunpack.c.l.b16 %v1484
        %v1792 = vunpack.c.h.b16 %v1484
        %v1793 = vunpack.c.l.b16 %v1485
        %v1794 = vunpack.c.h.b16 %v1485
        %v1795 = vunpack.c.l.b16 %v1486
        %v1796 = vunpack.c.h.b16 %v1486
        %v1797 = vunpack.c.l.b16 %v1487
        %v1798 = vunpack.c.h.b16 %v1487
        %v1799 = vunpack.c.l.b16 %v1488
        %v1800 = vunpack.c.h.b16 %v1488
        %v1801 = vunpack.c.l.b16 %v1489
        %v1802 = vunpack.c.h.b16 %v1489
        %v1803 = vunpack.c.l.b16 %v1490
        %v1804 = vunpack.c.h.b16 %v1490
        %v1805 = vunpack.c.l.b16 %v1491
        %v1806 = vunpack.c.h.b16 %v1491
        %v1807 = vunpack.c.l.b16 %v1492
        %v1808 = vunpack.c.h.b16 %v1492
        %v1809 = vunpack.c.l.b16 %v1493
        %v1810 = vunpack.c.h.b16 %v1493
        %v1811 = vunpack.c.l.b16 %v1494
        %v1812 = vunpack.c.h.b16 %v1494
        %v1813 = vunpack.c.l.b16 %v1495
        %v1814 = vunpack.c.h.b16 %v1495
        %v1815 = vunpack.c.l.b16 %v1496
        %v1816 = vunpack.c.h.b16 %v1496
        %v1817 = vunpack.c.l.b16 %v1497
        %v1818 = vunpack.c.h.b16 %v1497
        %v1819 = vunpack.c.l.b16 %v1498
        %v1820 = vunpack.c.h.b16 %v1498
        %v1821 = vunpack.c.l.b16 %v1499
        %v1822 = vunpack.c.h.b16 %v1499
        %v1823 = vunpack.c.l.b16 %v1500
        %v1824 = vunpack.c.h.b16 %v1500
        %v1825 = vunpack.c.l.b16 %v1501
        %v1826 = vunpack.c.h.b16 %v1501
        %v1827 = vunpack.c.l.b16 %v1502
        %v1828 = vunpack.c.h.b16 %v1502
        %v1829 = vunpack.c.l.b16 %v1503
        %v1830 = vunpack.c.h.b16 %v1503
        %v1831 = vunpack.c.l.b16 %v1504
        %v1832 = vunpack.c.h.b16 %v1504
        %v1833 = vunpack.c.l.b16 %v1505
        %v1834 = vunpack.c.h.b16 %v1505
        %v1835 = vunpack.c.l.b16 %v1506
        %v1836 = vunpack.c.h.b16 %v1506
        %v1837 = vunpack.c.l.b16 %v1507
        %v1838 = vunpack.c.h.b16 %v1507
        %v1839 = vunpack.c.l.b16 %v1508
        %v1840 = vunpack.c.h.b16 %v1508
        %v1841 = vunpack.c.l.b16 %v1509
        %v1842 = vunpack.c.h.b16 %v1509
        %v1843 = vunpack.c.l.b16 %v1510
        %v1844 = vunpack.c.h.b16 %v1510
        %v1845 = vunpack.c.l.b16 %v1511
        %v1846 = vunpack.c.h.b16 %v1511
        %v1847 = vunpack.c.l.b16 %v1512
        %v1848 = vunpack.c.h.b16 %v1512
        %v1849 = vunpack.c.l.b16 %v1513
        %v1850 = vunpack.c.h.b16 %v1513
        %v1851 = vunpack.c.l.b16 %v1514
        %v1852 = vunpack.c.h.b16 %v1514
        %v1853 = vunpack.c.l.b16 %v1515
        %v1854 = vunpack.c.h.b16 %v1515
        %v1855 = vunpack.c.l.b16 %v1516
        %v1856 = vunpack.c.h.b16 %v1516
        %v1857 = vunpack.c.l.b16 %v1517
        %v1858 = vunpack.c.h.b16 %v1517
        %v1859 = vunpack.c.l.b16 %v1518
        %v1860 = vunpack.c.h.b16 %v1518
        %v1861 = vunpack.c.l.b16 %v1519
        %v1862 = vunpack.c.h.b16 %v1519
        %v1863 = vunpack.c.l.b16 %v1520
        %v1864 = vunpack.c.h.b16 %v1520
        %v1865 = vunpack.c.l.b16 %v1521
        %v1866 = vunpack.c.h.b16 %v1521
        %v1867 = vunpack.c.l.b16 %v1522
        %v1868 = vunpack.c.h.b16 %v1522
        %v1869 = vunpack.c.l.b16 %v1523
        %v1870 = vunpack.c.h.b16 %v1523
        %v1871 = vunpack.c.l.b16 %v1524
        %v1872 = vunpack.c.h.b16 %v1524
        %v1873 = vunpack.c.l.b16 %v1525
        %v1874 = vunpack.c.h.b16 %v1525
        %v1875 = vunpack.c.l.b16 %v1526
        %v1876 = vunpack.c.h.b16 %v1526
        %v1877 = vunpack.c.l.b16 %v1527
        %v1878 = vunpack.c.h.b16 %v1527
        %v1879 = vunpack.c.l.b16 %v1528
        %v1880 = vunpack.c.h.b16 %v1528
        %v1881 = vunpack.c.l.b16 %v1529
        %v1882 = vunpack.c.h.b16 %v1529
        %v1883 = vunpack.c.l.b16 %v1530
        %v1884 = vunpack.c.h.b16 %v1530
        %v1885 = vunpack.c.l.b16 %v1531
        %v1886 = vunpack.c.h.b16 %v1531
        %v1887 = vunpack.c.l.b16 %v1532
        %v1888 = vunpack.c.h.b16 %v1532
        %v1889 = vunpack.c.l.b16 %v1533
        %v1890 = vunpack.c.h.b16 %v1533
        %v1891 = vunpack.c.l.b16 %v1534
        %v1892 = vunpack.c.h.b16 %v1534
        %v1893 = vunpack.c.l.b16 %v1535
        %v1894 = vunpack.c.h.b16 %v1535
        %v1895 = vunpack.c.l.b16 %v1536
        %v1896 = vunpack.c.h.b16 %v1536
        %v1897 = vunpack.c.l.b16 %v1537
        %v1898 = vunpack.c.h.b16 %v1537
        %v1899 = vunpack.c.l.b16 %v1538
        %v1900 = vunpack.c.h.b16 %v1538
        %v1901 = vunpack.c.l.b16 %v1539
        %v1902 = vunpack.c.h.b16 %v1539
        %v1903 = vunpack.c.l.b16 %v1540
        %v1904 = vunpack.c.h.b16 %v1540
        %v1905 = vunpack.c.l.b16 %v1541
        %v1906 = vunpack.c.h.b16 %v1541
        %v1907 = vunpack.c.l.b16 %v1542
        %v1908 = vunpack.c.h.b16 %v1542
        %v1909 = vunpack.c.l.b16 %v1543
        %v1910 = vunpack.c.h.b16 %v1543
        %v1911 = vunpack.c.l.b16 %v1544
        %v1912 = vunpack.c.h.b16 %v1544
        %v1913 = vunpack.c.l.b16 %v1545
        %v1914 = vunpack.c.h.b16 %v1545
        %v1915 = vunpack.c.l.b16 %v1546
        %v1916 = vunpack.c.h.b16 %v1546
        %v1917 = vunpack.c.l.b16 %v1547
        %v1918 = vunpack.c.h.b16 %v1547
        %v1919 = vunpack.c.l.b16 %v1548
        %v1920 = vunpack.c.h.b16 %v1548
        %v1921 = vunpack.c.l.b16 %v1549
        %v1922 = vunpack.c.h.b16 %v1549
        %v1923 = vunpack.c.l.b16 %v1550
        %v1924 = vunpack.c.h.b16 %v1550
        %v1925 = vunpack.c.l.b16 %v1551
        %v1926 = vunpack.c.h.b16 %v1551
        %v1927 = vunpack.c.l.b16 %v1552
        %v1928 = vunpack.c.h.b16 %v1552
        %v1929 = vunpack.c.l.b16 %v1553
        %v1930 = vunpack.c.h.b16 %v1553
        %v1931 = vunpack.c.l.b16 %v1554
        %v1932 = vunpack.c.h.b16 %v1554
        %v1933 = vunpack.c.l.b16 %v1555
        %v1934 = vunpack.c.h.b16 %v1555
        %v1935 = vunpack.c.l.b16 %v1556
        %v1936 = vunpack.c.h.b16 %v1556
        %v1937 = vunpack.c.l.b16 %v1557
        %v1938 = vunpack.c.h.b16 %v1557
        %v1939 = vunpack.c.l.b16 %v1558
        %v1940 = vunpack.c.h.b16 %v1558
        %v1941 = vunpack.c.l.b16 %v1559
        %v1942 = vunpack.c.h.b16 %v1559
        %v1943 = vunpack.c.l.b16 %v1560
        %v1944 = vunpack.c.h.b16 %v1560
        %v1945 = vpack.c.b16 %v1693, %v1689
        %v1946 = vpack.c.b16 %v1694, %v1690
        %v1947 = vpack.c.b16 %v1695, %v1691
        %v1948 = vpack.c.b16 %v1696, %v1692
        %v1949 = vpack.c.b16 %v1701, %v1697
        %v1950 = vpack.c.b16 %v1702, %v1698
        %v1951 = vpack.c.b16 %v1703, %v1699
        %v1952 = vpack.c.b16 %v1704, %v1700
        %v1953 = vpack.c.b16 %v1709, %v1705
        %v1954 = vpack.c.b16 %v1710, %v1706
        %v1955 = vpack.c.b16 %v1711, %v1707
        %v1956 = vpack.c.b16 %v1712, %v1708
        %v1957 = vpack.c.b16 %v1717, %v1713
        %v1958 = vpack.c.b16 %v1718, %v1714
        %v1959 = vpack.c.b16 %v1719, %v1715
        %v1960 = vpack.c.b16 %v1720, %v1716
        %v1961 = vpack.c.b16 %v1725, %v1721
        %v1962 = vpack.c.b16 %v1726, %v1722
        %v1963 = vpack.c.b16 %v1727, %v1723
        %v1964 = vpack.c.b16 %v1728, %v1724
        %v1965 = vpack.c.b16 %v1733, %v1729
        %v1966 = vpack.c.b16 %v1734, %v1730
        %v1967 = vpack.c.b16 %v1735, %v1731
        %v1968 = vpack.c.b16 %v1736, %v1732
        %v1969 = vpack.c.b16 %v1741, %v1737
        %v1970 = vpack.c.b16 %v1742, %v1738
        %v1971 = vpack.c.b16 %v1743, %v1739
        %v1972 = vpack.c.b16 %v1744, %v1740
        %v1973 = vpack.c.b16 %v1749, %v1745
        %v1974 = vpack.c.b16 %v1750, %v1746
        %v1975 = vpack.c.b16 %v1751, %v1747
        %v1976 = vpack.c.b16 %v1752, %v1748
        %v1977 = vpack.c.b16 %v1757, %v1753
        %v1978 = vpack.c.b16 %v1758, %v1754
        %v1979 = vpack.c.b16 %v1759, %v1755
        %v1980 = vpack.c.b16 %v1760, %v1756
        %v1981 = vpack.c.b16 %v1765, %v1761
        %v1982 = vpack.c.b16 %v1766, %v1762
        %v1983 = vpack.c.b16 %v1767, %v1763
        %v1984 = vpack.c.b16 %v1768, %v1764
        %v1985 = vpack.c.b16 %v1773, %v1769
        %v1986 = vpack.c.b16 %v1774, %v1770
        %v1987 = vpack.c.b16 %v1775, %v1771
        %v1988 = vpack.c.b16 %v1776, %v1772
        %v1989 = vpack.c.b16 %v1781, %v1777
        %v1990 = vpack.c.b16 %v1782, %v1778
        %v1991 = vpack.c.b16 %v1783, %v1779
        %v1992 = vpack.c.b16 %v1784, %v1780
        %v1993 = vpack.c.b16 %v1789, %v1785
        %v1994 = vpack.c.b16 %v1790, %v1786
        %v1995 = vpack.c.b16 %v1791, %v1787
        %v1996 = vpack.c.b16 %v1792, %v1788
        %v1997 = vpack.c.b16 %v1797, %v1793
        %v1998 = vpack.c.b16 %v1798, %v1794
        %v1999 = vpack.c.b16 %v1799, %v1795
        %v2000 = vpack.c.b16 %v1800, %v1796
        %v2001 = vpack.c.b16 %v1805, %v1801
        %v2002 = vpack.c.b16 %v1806, %v1802
        %v2003 = vpack.c.b16 %v1807, %v1803
        %v2004 = vpack.c.b16 %v1808, %v1804
        %v2005 = vpack.c.b16 %v1813, %v1809
        %v2006 = vpack.c.b16 %v1814, %v1810
        %v2007 = vpack.c.b16 %v1815, %v1811
        %v2008 = vpack.c.b16 %v1816, %v1812
        %v2009 = vpack.c.b16 %v1821, %v1817
        %v2010 = vpack.c.b16 %v1822, %v1818
        %v2011 = vpack.c.b16 %v1823, %v1819
        %v2012 = vpack.c.b16 %v1824, %v1820
        %v2013 = vpack.c.b16 %v1829, %v1825
        %v2014 = vpack.c.b16 %v1830, %v1826
        %v2015 = vpack.c.b16 %v1831, %v1827
        %v2016 = vpack.c.b16 %v1832, %v1828
        %v2017 = vpack.c.b16 %v1837, %v1833
        %v2018 = vpack.c.b16 %v1838, %v1834
        %v2019 = vpack.c.b16 %v1839, %v1835
        %v2020 = vpack.c.b16 %v1840, %v1836
        %v2021 = vpack.c.b16 %v1845, %v1841
        %v2022 = vpack.c.b16 %v1846, %v1842
        %v2023 = vpack.c.b16 %v1847, %v1843
        %v2024 = vpack.c.b16 %v1848, %v1844
        %v2025 = vpack.c.b16 %v1853, %v1849
        %v2026 = vpack.c.b16 %v1854, %v1850
        %v2027 = vpack.c.b16 %v1855, %v1851
        %v2028 = vpack.c.b16 %v1856, %v1852
        %v2029 = vpack.c.b16 %v1861, %v1857
        %v2030 = vpack.c.b16 %v1862, %v1858
        %v2031 = vpack.c.b16 %v1863, %v1859
        %v2032 = vpack.c.b16 %v1864, %v1860
        %v2033 = vpack.c.b16 %v1869, %v1865
        %v2034 = vpack.c.b16 %v1870, %v1866
        %v2035 = vpack.c.b16 %v1871, %v1867
        %v2036 = vpack.c.b16 %v1872, %v1868
        %v2037 = vpack.c.b16 %v1877, %v1873
        %v2038 = vpack.c.b16 %v1878, %v1874
        %v2039 = vpack.c.b16 %v1879, %v1875
        %v2040 = vpack.c.b16 %v1880, %v1876
        %v2041 = vpack.c.b16 %v1885, %v1881
        %v2042 = vpack.c.b16 %v1886, %v1882
        %v2043 = vpack.c.b16 %v1887, %v1883
        %v2044 = vpack.c.b16 %v1888, %v1884
        %v2045 = vpack.c.b16 %v1893, %v1889
        %v2046 = vpack.c.b16 %v1894, %v1890
        %v2047 = vpack.c.b16 %v1895, %v1891
        %v2048 = vpack.c.b16 %v1896, %v1892
        %v2049 = vpack.c.b16 %v1901, %v1897
        %v2050 = vpack.c.b16 %v1902, %v1898
        %v2051 = vpack.c.b16 %v1903, %v1899
        %v2052 = vpack.c.b16 %v1904, %v1900
        %v2053 = vpack.c.b16 %v1909, %v1905
        %v2054 = vpack.c.b16 %v1910, %v1906
        %v2055 = vpack.c.b16 %v1911, %v1907
        %v2056 = vpack.c.b16 %v1912, %v1908
        %v2057 = vpack.c.b16 %v1917, %v1913
        %v2058 = vpack.c.b16 %v1918, %v1914
        %v2059 = vpack.c.b16 %v1919, %v1915
        %v2060 = vpack.c.b16 %v1920, %v1916
        %v2061 = vpack.c.b16 %v1925, %v1921
        %v2062 = vpack.c.b16 %v1926, %v1922
        %v2063 = vpack.c.b16 %v1927, %v1923
        %v2064 = vpack.c.b16 %v1928, %v1924
        %v2065 = vpack.c.b16 %v1933, %v1929
        %v2066 = vpack.c.b16 %v1934, %v1930
        %v2067 = vpack.c.b16 %v1935, %v1931
        %v2068 = vpack.c.b16 %v1936, %v1932
        %v2069 = vpack.c.b16 %v1941, %v1937
        %v2070 = vpack.c.b16 %v1942, %v1938
        %v2071 = vpack.c.b16 %v1943, %v1939
        %v2072 = vpack.c.b16 %v1944, %v1940
        %2201 = vmatpush.bf16.msra.mxu0 %v1973
        %2202 = vmatpush.bf16.msra.mxu0 %v1969
        %2203 = vmatpush.bf16.msra.mxu0 %v1965
        %2204 = vmatpush.bf16.msra.mxu0 %v1961
        %2205 = vmatpush.bf16.msra.mxu0 %v1957
        %2206 = vmatpush.bf16.msra.mxu0 %v1953
        %2207 = vmatpush.bf16.msra.mxu0 %v1949
        %2208 = vmatpush.bf16.msra.mxu0 %v1945
        %2209 = vmatmul.bf16.gmra.mxu0 %v1428
        %v2210 = vpop.f32.mrf.mxu0
        %v2211 = vadd.f32 0.0, %v2210
        %v2212 = vpop.f32.mrf.mxu0
        %2213 = vdwg.mxu0
        %2214 = vmatpush.bf16.msra.mxu0 %v2005
        %2215 = vmatpush.bf16.msra.mxu0 %v2001
        %2216 = vmatpush.bf16.msra.mxu0 %v1997
        %2217 = vmatpush.bf16.msra.mxu0 %v1993
        %2218 = vmatpush.bf16.msra.mxu0 %v1989
        %2219 = vmatpush.bf16.msra.mxu0 %v1985
        %2220 = vmatpush.bf16.msra.mxu0 %v1981
        %2221 = vmatpush.bf16.msra.mxu0 %v1977
        %2222 = vmatmul.bf16.gmra.mxu0 %v1429
        %v2223 = vpop.f32.mrf.mxu0
        %v2224 = vadd.f32 %v2211, %v2223
        %v2225 = vpop.f32.mrf.mxu0
        %2226 = vdwg.mxu0
        %2227 = vmatpush.bf16.msra.mxu0 %v2037
        %2228 = vmatpush.bf16.msra.mxu0 %v2033
        %2229 = vmatpush.bf16.msra.mxu0 %v2029
        %2230 = vmatpush.bf16.msra.mxu0 %v2025
        %2231 = vmatpush.bf16.msra.mxu0 %v2021
        %2232 = vmatpush.bf16.msra.mxu0 %v2017
        %2233 = vmatpush.bf16.msra.mxu0 %v2013
        %2234 = vmatpush.bf16.msra.mxu0 %v2009
        %2235 = vmatmul.bf16.gmra.mxu0 %v1430
        %v2236 = vpop.f32.mrf.mxu0
        %v2237 = vadd.f32 %v2224, %v2236
        %v2238 = vpop.f32.mrf.mxu0
        %2239 = vdwg.mxu0
        %2240 = vmatpush.bf16.msra.mxu0 %v2069
        %2241 = vmatpush.bf16.msra.mxu0 %v2065
        %2242 = vmatpush.bf16.msra.mxu0 %v2061
        %2243 = vmatpush.bf16.msra.mxu0 %v2057
        %2244 = vmatpush.bf16.msra.mxu0 %v2053
        %2245 = vmatpush.bf16.msra.mxu0 %v2049
        %2246 = vmatpush.bf16.msra.mxu0 %v2045
        %2247 = vmatpush.bf16.msra.mxu0 %v2041
        %2248 = vmatmul.bf16.gmra.mxu0 %v1431
        %v2249 = vpop.f32.mrf.mxu0
        %v2250 = vadd.f32 %v2237, %v2249
        %v2251 = vpop.f32.mrf.mxu0
        %2252 = vdwg.mxu0
        %2253 = vmatpush.bf16.msra.mxu0 %v1974
        %2254 = vmatpush.bf16.msra.mxu0 %v1970
        %2255 = vmatpush.bf16.msra.mxu0 %v1966
        %2256 = vmatpush.bf16.msra.mxu0 %v1962
        %2257 = vmatpush.bf16.msra.mxu0 %v1958
        %2258 = vmatpush.bf16.msra.mxu0 %v1954
        %2259 = vmatpush.bf16.msra.mxu0 %v1950
        %2260 = vmatpush.bf16.msra.mxu0 %v1946
        %2261 = vmatmul.bf16.gmra.mxu0 %v1428
        %v2262 = vpop.f32.mrf.mxu0
        %v2263 = vadd.f32 0.0, %v2262
        %v2264 = vpop.f32.mrf.mxu0
        %2265 = vdwg.mxu0
        %2266 = vmatpush.bf16.msra.mxu0 %v2006
        %2267 = vmatpush.bf16.msra.mxu0 %v2002
        %2268 = vmatpush.bf16.msra.mxu0 %v1998
        %2269 = vmatpush.bf16.msra.mxu0 %v1994
        %2270 = vmatpush.bf16.msra.mxu0 %v1990
        %2271 = vmatpush.bf16.msra.mxu0 %v1986
        %2272 = vmatpush.bf16.msra.mxu0 %v1982
        %2273 = vmatpush.bf16.msra.mxu0 %v1978
        %2274 = vmatmul.bf16.gmra.mxu0 %v1429
        %v2275 = vpop.f32.mrf.mxu0
        %v2276 = vadd.f32 %v2263, %v2275
        %v2277 = vpop.f32.mrf.mxu0
        %2278 = vdwg.mxu0
        %2279 = vmatpush.bf16.msra.mxu0 %v2038
        %2280 = vmatpush.bf16.msra.mxu0 %v2034
        %2281 = vmatpush.bf16.msra.mxu0 %v2030
        %2282 = vmatpush.bf16.msra.mxu0 %v2026
        %2283 = vmatpush.bf16.msra.mxu0 %v2022
        %2284 = vmatpush.bf16.msra.mxu0 %v2018
        %2285 = vmatpush.bf16.msra.mxu0 %v2014
        %2286 = vmatpush.bf16.msra.mxu0 %v2010
        %2287 = vmatmul.bf16.gmra.mxu0 %v1430
        %v2288 = vpop.f32.mrf.mxu0
        %v2289 = vadd.f32 %v2276, %v2288
        %v2290 = vpop.f32.mrf.mxu0
        %2291 = vdwg.mxu0
        %2292 = vmatpush.bf16.msra.mxu0 %v2070
        %2293 = vmatpush.bf16.msra.mxu0 %v2066
        %2294 = vmatpush.bf16.msra.mxu0 %v2062
        %2295 = vmatpush.bf16.msra.mxu0 %v2058
        %2296 = vmatpush.bf16.msra.mxu0 %v2054
        %2297 = vmatpush.bf16.msra.mxu0 %v2050
        %2298 = vmatpush.bf16.msra.mxu0 %v2046
        %2299 = vmatpush.bf16.msra.mxu0 %v2042
        %2300 = vmatmul.bf16.gmra.mxu0 %v1431
        %v2301 = vpop.f32.mrf.mxu0
        %v2302 = vadd.f32 %v2289, %v2301
        %v2303 = vpop.f32.mrf.mxu0
        %2304 = vdwg.mxu0
        %2305 = vmatpush.bf16.msra.mxu0 %v1975
        %2306 = vmatpush.bf16.msra.mxu0 %v1971
        %2307 = vmatpush.bf16.msra.mxu0 %v1967
        %2308 = vmatpush.bf16.msra.mxu0 %v1963
        %2309 = vmatpush.bf16.msra.mxu0 %v1959
        %2310 = vmatpush.bf16.msra.mxu0 %v1955
        %2311 = vmatpush.bf16.msra.mxu0 %v1951
        %2312 = vmatpush.bf16.msra.mxu0 %v1947
        %2313 = vmatmul.bf16.gmra.mxu0 %v1428
        %v2314 = vpop.f32.mrf.mxu0
        %v2315 = vadd.f32 0.0, %v2314
        %v2316 = vpop.f32.mrf.mxu0
        %2317 = vdwg.mxu0
        %2318 = vmatpush.bf16.msra.mxu0 %v2007
        %2319 = vmatpush.bf16.msra.mxu0 %v2003
        %2320 = vmatpush.bf16.msra.mxu0 %v1999
        %2321 = vmatpush.bf16.msra.mxu0 %v1995
        %2322 = vmatpush.bf16.msra.mxu0 %v1991
        %2323 = vmatpush.bf16.msra.mxu0 %v1987
        %2324 = vmatpush.bf16.msra.mxu0 %v1983
        %2325 = vmatpush.bf16.msra.mxu0 %v1979
        %2326 = vmatmul.bf16.gmra.mxu0 %v1429
        %v2327 = vpop.f32.mrf.mxu0
        %v2328 = vadd.f32 %v2315, %v2327
        %v2329 = vpop.f32.mrf.mxu0
        %2330 = vdwg.mxu0
        %2331 = vmatpush.bf16.msra.mxu0 %v2039
        %2332 = vmatpush.bf16.msra.mxu0 %v2035
        %2333 = vmatpush.bf16.msra.mxu0 %v2031
        %2334 = vmatpush.bf16.msra.mxu0 %v2027
        %2335 = vmatpush.bf16.msra.mxu0 %v2023
        %2336 = vmatpush.bf16.msra.mxu0 %v2019
        %2337 = vmatpush.bf16.msra.mxu0 %v2015
        %2338 = vmatpush.bf16.msra.mxu0 %v2011
        %2339 = vmatmul.bf16.gmra.mxu0 %v1430
        %v2340 = vpop.f32.mrf.mxu0
        %v2341 = vadd.f32 %v2328, %v2340
        %v2342 = vpop.f32.mrf.mxu0
        %2343 = vdwg.mxu0
        %2344 = vmatpush.bf16.msra.mxu0 %v2071
        %2345 = vmatpush.bf16.msra.mxu0 %v2067
        %2346 = vmatpush.bf16.msra.mxu0 %v2063
        %2347 = vmatpush.bf16.msra.mxu0 %v2059
        %2348 = vmatpush.bf16.msra.mxu0 %v2055
        %2349 = vmatpush.bf16.msra.mxu0 %v2051
        %2350 = vmatpush.bf16.msra.mxu0 %v2047
        %2351 = vmatpush.bf16.msra.mxu0 %v2043
        %2352 = vmatmul.bf16.gmra.mxu0 %v1431
        %v2353 = vpop.f32.mrf.mxu0
        %v2354 = vadd.f32 %v2341, %v2353
        %v2355 = vpop.f32.mrf.mxu0
        %2356 = vdwg.mxu0
        %2357 = vmatpush.bf16.msra.mxu0 %v1976
        %2358 = vmatpush.bf16.msra.mxu0 %v1972
        %2359 = vmatpush.bf16.msra.mxu0 %v1968
        %2360 = vmatpush.bf16.msra.mxu0 %v1964
        %2361 = vmatpush.bf16.msra.mxu0 %v1960
        %2362 = vmatpush.bf16.msra.mxu0 %v1956
        %2363 = vmatpush.bf16.msra.mxu0 %v1952
        %2364 = vmatpush.bf16.msra.mxu0 %v1948
        %2365 = vmatmul.bf16.gmra.mxu0 %v1428
        %v2366 = vpop.f32.mrf.mxu0
        %v2367 = vadd.f32 0.0, %v2366
        %v2368 = vpop.f32.mrf.mxu0
        %2369 = vdwg.mxu0
        %2370 = vmatpush.bf16.msra.mxu0 %v2008
        %2371 = vmatpush.bf16.msra.mxu0 %v2004
        %2372 = vmatpush.bf16.msra.mxu0 %v2000
        %2373 = vmatpush.bf16.msra.mxu0 %v1996
        %2374 = vmatpush.bf16.msra.mxu0 %v1992
        %2375 = vmatpush.bf16.msra.mxu0 %v1988
        %2376 = vmatpush.bf16.msra.mxu0 %v1984
        %2377 = vmatpush.bf16.msra.mxu0 %v1980
        %2378 = vmatmul.bf16.gmra.mxu0 %v1429
        %v2379 = vpop.f32.mrf.mxu0
        %v2380 = vadd.f32 %v2367, %v2379
        %v2381 = vpop.f32.mrf.mxu0
        %2382 = vdwg.mxu0
        %2383 = vmatpush.bf16.msra.mxu0 %v2040
        %2384 = vmatpush.bf16.msra.mxu0 %v2036
        %2385 = vmatpush.bf16.msra.mxu0 %v2032
        %2386 = vmatpush.bf16.msra.mxu0 %v2028
        %2387 = vmatpush.bf16.msra.mxu0 %v2024
        %2388 = vmatpush.bf16.msra.mxu0 %v2020
        %2389 = vmatpush.bf16.msra.mxu0 %v2016
        %2390 = vmatpush.bf16.msra.mxu0 %v2012
        %2391 = vmatmul.bf16.gmra.mxu0 %v1430
        %v2392 = vpop.f32.mrf.mxu0
        %v2393 = vadd.f32 %v2380, %v2392
        %v2394 = vpop.f32.mrf.mxu0
        %2395 = vdwg.mxu0
        %2396 = vmatpush.bf16.msra.mxu0 %v2072
        %2397 = vmatpush.bf16.msra.mxu0 %v2068
        %2398 = vmatpush.bf16.msra.mxu0 %v2064
        %2399 = vmatpush.bf16.msra.mxu0 %v2060
        %2400 = vmatpush.bf16.msra.mxu0 %v2056
        %2401 = vmatpush.bf16.msra.mxu0 %v2052
        %2402 = vmatpush.bf16.msra.mxu0 %v2048
        %2403 = vmatpush.bf16.msra.mxu0 %v2044
        %2404 = vmatmul.bf16.gmra.mxu0 %v1431
        %v2405 = vpop.f32.mrf.mxu0
        %v2406 = vadd.f32 %v2393, %v2405
        %v2407 = vpop.f32.mrf.mxu0
        %2408 = vdwg.mxu0
        %v2537 = vunpack.c.l.b16 %v1300
        %v2538 = vunpack.c.h.b16 %v1300
        %v2539 = vunpack.c.l.b16 %v1301
        %v2540 = vunpack.c.h.b16 %v1301
        %v2541 = vunpack.c.l.b16 %v1302
        %v2542 = vunpack.c.h.b16 %v1302
        %v2543 = vunpack.c.l.b16 %v1303
        %v2544 = vunpack.c.h.b16 %v1303
        %v2545 = vunpack.c.l.b16 %v1304
        %v2546 = vunpack.c.h.b16 %v1304
        %v2547 = vunpack.c.l.b16 %v1305
        %v2548 = vunpack.c.h.b16 %v1305
        %v2549 = vunpack.c.l.b16 %v1306
        %v2550 = vunpack.c.h.b16 %v1306
        %v2551 = vunpack.c.l.b16 %v1307
        %v2552 = vunpack.c.h.b16 %v1307
        %v2553 = vunpack.c.l.b16 %v1308
        %v2554 = vunpack.c.h.b16 %v1308
        %v2555 = vunpack.c.l.b16 %v1309
        %v2556 = vunpack.c.h.b16 %v1309
        %v2557 = vunpack.c.l.b16 %v1310
        %v2558 = vunpack.c.h.b16 %v1310
        %v2559 = vunpack.c.l.b16 %v1311
        %v2560 = vunpack.c.h.b16 %v1311
        %v2561 = vunpack.c.l.b16 %v1312
        %v2562 = vunpack.c.h.b16 %v1312
        %v2563 = vunpack.c.l.b16 %v1313
        %v2564 = vunpack.c.h.b16 %v1313
        %v2565 = vunpack.c.l.b16 %v1314
        %v2566 = vunpack.c.h.b16 %v1314
        %v2567 = vunpack.c.l.b16 %v1315
        %v2568 = vunpack.c.h.b16 %v1315
        %v2569 = vunpack.c.l.b16 %v1316
        %v2570 = vunpack.c.h.b16 %v1316
        %v2571 = vunpack.c.l.b16 %v1317
        %v2572 = vunpack.c.h.b16 %v1317
        %v2573 = vunpack.c.l.b16 %v1318
        %v2574 = vunpack.c.h.b16 %v1318
        %v2575 = vunpack.c.l.b16 %v1319
        %v2576 = vunpack.c.h.b16 %v1319
        %v2577 = vunpack.c.l.b16 %v1320
        %v2578 = vunpack.c.h.b16 %v1320
        %v2579 = vunpack.c.l.b16 %v1321
        %v2580 = vunpack.c.h.b16 %v1321
        %v2581 = vunpack.c.l.b16 %v1322
        %v2582 = vunpack.c.h.b16 %v1322
        %v2583 = vunpack.c.l.b16 %v1323
        %v2584 = vunpack.c.h.b16 %v1323
        %v2585 = vunpack.c.l.b16 %v1324
        %v2586 = vunpack.c.h.b16 %v1324
        %v2587 = vunpack.c.l.b16 %v1325
        %v2588 = vunpack.c.h.b16 %v1325
        %v2589 = vunpack.c.l.b16 %v1326
        %v2590 = vunpack.c.h.b16 %v1326
        %v2591 = vunpack.c.l.b16 %v1327
        %v2592 = vunpack.c.h.b16 %v1327
        %v2593 = vunpack.c.l.b16 %v1328
        %v2594 = vunpack.c.h.b16 %v1328
        %v2595 = vunpack.c.l.b16 %v1329
        %v2596 = vunpack.c.h.b16 %v1329
        %v2597 = vunpack.c.l.b16 %v1330
        %v2598 = vunpack.c.h.b16 %v1330
        %v2599 = vunpack.c.l.b16 %v1331
        %v2600 = vunpack.c.h.b16 %v1331
        %v2601 = vunpack.c.l.b16 %v1332
        %v2602 = vunpack.c.h.b16 %v1332
        %v2603 = vunpack.c.l.b16 %v1333
        %v2604 = vunpack.c.h.b16 %v1333
        %v2605 = vunpack.c.l.b16 %v1334
        %v2606 = vunpack.c.h.b16 %v1334
        %v2607 = vunpack.c.l.b16 %v1335
        %v2608 = vunpack.c.h.b16 %v1335
        %v2609 = vunpack.c.l.b16 %v1336
        %v2610 = vunpack.c.h.b16 %v1336
        %v2611 = vunpack.c.l.b16 %v1337
        %v2612 = vunpack.c.h.b16 %v1337
        %v2613 = vunpack.c.l.b16 %v1338
        %v2614 = vunpack.c.h.b16 %v1338
        %v2615 = vunpack.c.l.b16 %v1339
        %v2616 = vunpack.c.h.b16 %v1339
        %v2617 = vunpack.c.l.b16 %v1340
        %v2618 = vunpack.c.h.b16 %v1340
        %v2619 = vunpack.c.l.b16 %v1341
        %v2620 = vunpack.c.h.b16 %v1341
        %v2621 = vunpack.c.l.b16 %v1342
        %v2622 = vunpack.c.h.b16 %v1342
        %v2623 = vunpack.c.l.b16 %v1343
        %v2624 = vunpack.c.h.b16 %v1343
        %v2625 = vunpack.c.l.b16 %v1344
        %v2626 = vunpack.c.h.b16 %v1344
        %v2627 = vunpack.c.l.b16 %v1345
        %v2628 = vunpack.c.h.b16 %v1345
        %v2629 = vunpack.c.l.b16 %v1346
        %v2630 = vunpack.c.h.b16 %v1346
        %v2631 = vunpack.c.l.b16 %v1347
        %v2632 = vunpack.c.h.b16 %v1347
        %v2633 = vunpack.c.l.b16 %v1348
        %v2634 = vunpack.c.h.b16 %v1348
        %v2635 = vunpack.c.l.b16 %v1349
        %v2636 = vunpack.c.h.b16 %v1349
        %v2637 = vunpack.c.l.b16 %v1350
        %v2638 = vunpack.c.h.b16 %v1350
        %v2639 = vunpack.c.l.b16 %v1351
        %v2640 = vunpack.c.h.b16 %v1351
        %v2641 = vunpack.c.l.b16 %v1352
        %v2642 = vunpack.c.h.b16 %v1352
        %v2643 = vunpack.c.l.b16 %v1353
        %v2644 = vunpack.c.h.b16 %v1353
        %v2645 = vunpack.c.l.b16 %v1354
        %v2646 = vunpack.c.h.b16 %v1354
        %v2647 = vunpack.c.l.b16 %v1355
        %v2648 = vunpack.c.h.b16 %v1355
        %v2649 = vunpack.c.l.b16 %v1356
        %v2650 = vunpack.c.h.b16 %v1356
        %v2651 = vunpack.c.l.b16 %v1357
        %v2652 = vunpack.c.h.b16 %v1357
        %v2653 = vunpack.c.l.b16 %v1358
        %v2654 = vunpack.c.h.b16 %v1358
        %v2655 = vunpack.c.l.b16 %v1359
        %v2656 = vunpack.c.h.b16 %v1359
        %v2657 = vunpack.c.l.b16 %v1360
        %v2658 = vunpack.c.h.b16 %v1360
        %v2659 = vunpack.c.l.b16 %v1361
        %v2660 = vunpack.c.h.b16 %v1361
        %v2661 = vunpack.c.l.b16 %v1362
        %v2662 = vunpack.c.h.b16 %v1362
        %v2663 = vunpack.c.l.b16 %v1363
        %v2664 = vunpack.c.h.b16 %v1363
        %v2665 = vunpack.c.l.b16 %v1364
        %v2666 = vunpack.c.h.b16 %v1364
        %v2667 = vunpack.c.l.b16 %v1365
        %v2668 = vunpack.c.h.b16 %v1365
        %v2669 = vunpack.c.l.b16 %v1366
        %v2670 = vunpack.c.h.b16 %v1366
        %v2671 = vunpack.c.l.b16 %v1367
        %v2672 = vunpack.c.h.b16 %v1367
        %v2673 = vunpack.c.l.b16 %v1368
        %v2674 = vunpack.c.h.b16 %v1368
        %v2675 = vunpack.c.l.b16 %v1369
        %v2676 = vunpack.c.h.b16 %v1369
        %v2677 = vunpack.c.l.b16 %v1370
        %v2678 = vunpack.c.h.b16 %v1370
        %v2679 = vunpack.c.l.b16 %v1371
        %v2680 = vunpack.c.h.b16 %v1371
        %v2681 = vunpack.c.l.b16 %v1372
        %v2682 = vunpack.c.h.b16 %v1372
        %v2683 = vunpack.c.l.b16 %v1373
        %v2684 = vunpack.c.h.b16 %v1373
        %v2685 = vunpack.c.l.b16 %v1374
        %v2686 = vunpack.c.h.b16 %v1374
        %v2687 = vunpack.c.l.b16 %v1375
        %v2688 = vunpack.c.h.b16 %v1375
        %v2689 = vunpack.c.l.b16 %v1376
        %v2690 = vunpack.c.h.b16 %v1376
        %v2691 = vunpack.c.l.b16 %v1377
        %v2692 = vunpack.c.h.b16 %v1377
        %v2693 = vunpack.c.l.b16 %v1378
        %v2694 = vunpack.c.h.b16 %v1378
        %v2695 = vunpack.c.l.b16 %v1379
        %v2696 = vunpack.c.h.b16 %v1379
        %v2697 = vunpack.c.l.b16 %v1380
        %v2698 = vunpack.c.h.b16 %v1380
        %v2699 = vunpack.c.l.b16 %v1381
        %v2700 = vunpack.c.h.b16 %v1381
        %v2701 = vunpack.c.l.b16 %v1382
        %v2702 = vunpack.c.h.b16 %v1382
        %v2703 = vunpack.c.l.b16 %v1383
        %v2704 = vunpack.c.h.b16 %v1383
        %v2705 = vunpack.c.l.b16 %v1384
        %v2706 = vunpack.c.h.b16 %v1384
        %v2707 = vunpack.c.l.b16 %v1385
        %v2708 = vunpack.c.h.b16 %v1385
        %v2709 = vunpack.c.l.b16 %v1386
        %v2710 = vunpack.c.h.b16 %v1386
        %v2711 = vunpack.c.l.b16 %v1387
        %v2712 = vunpack.c.h.b16 %v1387
        %v2713 = vunpack.c.l.b16 %v1388
        %v2714 = vunpack.c.h.b16 %v1388
        %v2715 = vunpack.c.l.b16 %v1389
        %v2716 = vunpack.c.h.b16 %v1389
        %v2717 = vunpack.c.l.b16 %v1390
        %v2718 = vunpack.c.h.b16 %v1390
        %v2719 = vunpack.c.l.b16 %v1391
        %v2720 = vunpack.c.h.b16 %v1391
        %v2721 = vunpack.c.l.b16 %v1392
        %v2722 = vunpack.c.h.b16 %v1392
        %v2723 = vunpack.c.l.b16 %v1393
        %v2724 = vunpack.c.h.b16 %v1393
        %v2725 = vunpack.c.l.b16 %v1394
        %v2726 = vunpack.c.h.b16 %v1394
        %v2727 = vunpack.c.l.b16 %v1395
        %v2728 = vunpack.c.h.b16 %v1395
        %v2729 = vunpack.c.l.b16 %v1396
        %v2730 = vunpack.c.h.b16 %v1396
        %v2731 = vunpack.c.l.b16 %v1397
        %v2732 = vunpack.c.h.b16 %v1397
        %v2733 = vunpack.c.l.b16 %v1398
        %v2734 = vunpack.c.h.b16 %v1398
        %v2735 = vunpack.c.l.b16 %v1399
        %v2736 = vunpack.c.h.b16 %v1399
        %v2737 = vunpack.c.l.b16 %v1400
        %v2738 = vunpack.c.h.b16 %v1400
        %v2739 = vunpack.c.l.b16 %v1401
        %v2740 = vunpack.c.h.b16 %v1401
        %v2741 = vunpack.c.l.b16 %v1402
        %v2742 = vunpack.c.h.b16 %v1402
        %v2743 = vunpack.c.l.b16 %v1403
        %v2744 = vunpack.c.h.b16 %v1403
        %v2745 = vunpack.c.l.b16 %v1404
        %v2746 = vunpack.c.h.b16 %v1404
        %v2747 = vunpack.c.l.b16 %v1405
        %v2748 = vunpack.c.h.b16 %v1405
        %v2749 = vunpack.c.l.b16 %v1406
        %v2750 = vunpack.c.h.b16 %v1406
        %v2751 = vunpack.c.l.b16 %v1407
        %v2752 = vunpack.c.h.b16 %v1407
        %v2753 = vunpack.c.l.b16 %v1408
        %v2754 = vunpack.c.h.b16 %v1408
        %v2755 = vunpack.c.l.b16 %v1409
        %v2756 = vunpack.c.h.b16 %v1409
        %v2757 = vunpack.c.l.b16 %v1410
        %v2758 = vunpack.c.h.b16 %v1410
        %v2759 = vunpack.c.l.b16 %v1411
        %v2760 = vunpack.c.h.b16 %v1411
        %v2761 = vunpack.c.l.b16 %v1412
        %v2762 = vunpack.c.h.b16 %v1412
        %v2763 = vunpack.c.l.b16 %v1413
        %v2764 = vunpack.c.h.b16 %v1413
        %v2765 = vunpack.c.l.b16 %v1414
        %v2766 = vunpack.c.h.b16 %v1414
        %v2767 = vunpack.c.l.b16 %v1415
        %v2768 = vunpack.c.h.b16 %v1415
        %v2769 = vunpack.c.l.b16 %v1416
        %v2770 = vunpack.c.h.b16 %v1416
        %v2771 = vunpack.c.l.b16 %v1417
        %v2772 = vunpack.c.h.b16 %v1417
        %v2773 = vunpack.c.l.b16 %v1418
        %v2774 = vunpack.c.h.b16 %v1418
        %v2775 = vunpack.c.l.b16 %v1419
        %v2776 = vunpack.c.h.b16 %v1419
        %v2777 = vunpack.c.l.b16 %v1420
        %v2778 = vunpack.c.h.b16 %v1420
        %v2779 = vunpack.c.l.b16 %v1421
        %v2780 = vunpack.c.h.b16 %v1421
        %v2781 = vunpack.c.l.b16 %v1422
        %v2782 = vunpack.c.h.b16 %v1422
        %v2783 = vunpack.c.l.b16 %v1423
        %v2784 = vunpack.c.h.b16 %v1423
        %v2785 = vunpack.c.l.b16 %v1424
        %v2786 = vunpack.c.h.b16 %v1424
        %v2787 = vunpack.c.l.b16 %v1425
        %v2788 = vunpack.c.h.b16 %v1425
        %v2789 = vunpack.c.l.b16 %v1426
        %v2790 = vunpack.c.h.b16 %v1426
        %v2791 = vunpack.c.l.b16 %v1427
        %v2792 = vunpack.c.h.b16 %v1427
        %v2793 = vpack.c.b16 %v2541, %v2537
        %v2794 = vpack.c.b16 %v2542, %v2538
        %v2795 = vpack.c.b16 %v2543, %v2539
        %v2796 = vpack.c.b16 %v2544, %v2540
        %v2797 = vpack.c.b16 %v2549, %v2545
        %v2798 = vpack.c.b16 %v2550, %v2546
        %v2799 = vpack.c.b16 %v2551, %v2547
        %v2800 = vpack.c.b16 %v2552, %v2548
        %v2801 = vpack.c.b16 %v2557, %v2553
        %v2802 = vpack.c.b16 %v2558, %v2554
        %v2803 = vpack.c.b16 %v2559, %v2555
        %v2804 = vpack.c.b16 %v2560, %v2556
        %v2805 = vpack.c.b16 %v2565, %v2561
        %v2806 = vpack.c.b16 %v2566, %v2562
        %v2807 = vpack.c.b16 %v2567, %v2563
        %v2808 = vpack.c.b16 %v2568, %v2564
        %v2809 = vpack.c.b16 %v2573, %v2569
        %v2810 = vpack.c.b16 %v2574, %v2570
        %v2811 = vpack.c.b16 %v2575, %v2571
        %v2812 = vpack.c.b16 %v2576, %v2572
        %v2813 = vpack.c.b16 %v2581, %v2577
        %v2814 = vpack.c.b16 %v2582, %v2578
        %v2815 = vpack.c.b16 %v2583, %v2579
        %v2816 = vpack.c.b16 %v2584, %v2580
        %v2817 = vpack.c.b16 %v2589, %v2585
        %v2818 = vpack.c.b16 %v2590, %v2586
        %v2819 = vpack.c.b16 %v2591, %v2587
        %v2820 = vpack.c.b16 %v2592, %v2588
        %v2821 = vpack.c.b16 %v2597, %v2593
        %v2822 = vpack.c.b16 %v2598, %v2594
        %v2823 = vpack.c.b16 %v2599, %v2595
        %v2824 = vpack.c.b16 %v2600, %v2596
        %v2825 = vpack.c.b16 %v2605, %v2601
        %v2826 = vpack.c.b16 %v2606, %v2602
        %v2827 = vpack.c.b16 %v2607, %v2603
        %v2828 = vpack.c.b16 %v2608, %v2604
        %v2829 = vpack.c.b16 %v2613, %v2609
        %v2830 = vpack.c.b16 %v2614, %v2610
        %v2831 = vpack.c.b16 %v2615, %v2611
        %v2832 = vpack.c.b16 %v2616, %v2612
        %v2833 = vpack.c.b16 %v2621, %v2617
        %v2834 = vpack.c.b16 %v2622, %v2618
        %v2835 = vpack.c.b16 %v2623, %v2619
        %v2836 = vpack.c.b16 %v2624, %v2620
        %v2837 = vpack.c.b16 %v2629, %v2625
        %v2838 = vpack.c.b16 %v2630, %v2626
        %v2839 = vpack.c.b16 %v2631, %v2627
        %v2840 = vpack.c.b16 %v2632, %v2628
        %v2841 = vpack.c.b16 %v2637, %v2633
        %v2842 = vpack.c.b16 %v2638, %v2634
        %v2843 = vpack.c.b16 %v2639, %v2635
        %v2844 = vpack.c.b16 %v2640, %v2636
        %v2845 = vpack.c.b16 %v2645, %v2641
        %v2846 = vpack.c.b16 %v2646, %v2642
        %v2847 = vpack.c.b16 %v2647, %v2643
        %v2848 = vpack.c.b16 %v2648, %v2644
        %v2849 = vpack.c.b16 %v2653, %v2649
        %v2850 = vpack.c.b16 %v2654, %v2650
        %v2851 = vpack.c.b16 %v2655, %v2651
        %v2852 = vpack.c.b16 %v2656, %v2652
        %v2853 = vpack.c.b16 %v2661, %v2657
        %v2854 = vpack.c.b16 %v2662, %v2658
        %v2855 = vpack.c.b16 %v2663, %v2659
        %v2856 = vpack.c.b16 %v2664, %v2660
        %v2857 = vpack.c.b16 %v2669, %v2665
        %v2858 = vpack.c.b16 %v2670, %v2666
        %v2859 = vpack.c.b16 %v2671, %v2667
        %v2860 = vpack.c.b16 %v2672, %v2668
        %v2861 = vpack.c.b16 %v2677, %v2673
        %v2862 = vpack.c.b16 %v2678, %v2674
        %v2863 = vpack.c.b16 %v2679, %v2675
        %v2864 = vpack.c.b16 %v2680, %v2676
        %v2865 = vpack.c.b16 %v2685, %v2681
        %v2866 = vpack.c.b16 %v2686, %v2682
        %v2867 = vpack.c.b16 %v2687, %v2683
        %v2868 = vpack.c.b16 %v2688, %v2684
        %v2869 = vpack.c.b16 %v2693, %v2689
        %v2870 = vpack.c.b16 %v2694, %v2690
        %v2871 = vpack.c.b16 %v2695, %v2691
        %v2872 = vpack.c.b16 %v2696, %v2692
        %v2873 = vpack.c.b16 %v2701, %v2697
        %v2874 = vpack.c.b16 %v2702, %v2698
        %v2875 = vpack.c.b16 %v2703, %v2699
        %v2876 = vpack.c.b16 %v2704, %v2700
        %v2877 = vpack.c.b16 %v2709, %v2705
        %v2878 = vpack.c.b16 %v2710, %v2706
        %v2879 = vpack.c.b16 %v2711, %v2707
        %v2880 = vpack.c.b16 %v2712, %v2708
        %v2881 = vpack.c.b16 %v2717, %v2713
        %v2882 = vpack.c.b16 %v2718, %v2714
        %v2883 = vpack.c.b16 %v2719, %v2715
        %v2884 = vpack.c.b16 %v2720, %v2716
        %v2885 = vpack.c.b16 %v2725, %v2721
        %v2886 = vpack.c.b16 %v2726, %v2722
        %v2887 = vpack.c.b16 %v2727, %v2723
        %v2888 = vpack.c.b16 %v2728, %v2724
        %v2889 = vpack.c.b16 %v2733, %v2729
        %v2890 = vpack.c.b16 %v2734, %v2730
        %v2891 = vpack.c.b16 %v2735, %v2731
        %v2892 = vpack.c.b16 %v2736, %v2732
        %v2893 = vpack.c.b16 %v2741, %v2737
        %v2894 = vpack.c.b16 %v2742, %v2738
        %v2895 = vpack.c.b16 %v2743, %v2739
        %v2896 = vpack.c.b16 %v2744, %v2740
        %v2897 = vpack.c.b16 %v2749, %v2745
        %v2898 = vpack.c.b16 %v2750, %v2746
        %v2899 = vpack.c.b16 %v2751, %v2747
        %v2900 = vpack.c.b16 %v2752, %v2748
        %v2901 = vpack.c.b16 %v2757, %v2753
        %v2902 = vpack.c.b16 %v2758, %v2754
        %v2903 = vpack.c.b16 %v2759, %v2755
        %v2904 = vpack.c.b16 %v2760, %v2756
        %v2905 = vpack.c.b16 %v2765, %v2761
        %v2906 = vpack.c.b16 %v2766, %v2762
        %v2907 = vpack.c.b16 %v2767, %v2763
        %v2908 = vpack.c.b16 %v2768, %v2764
        %v2909 = vpack.c.b16 %v2773, %v2769
        %v2910 = vpack.c.b16 %v2774, %v2770
        %v2911 = vpack.c.b16 %v2775, %v2771
        %v2912 = vpack.c.b16 %v2776, %v2772
        %v2913 = vpack.c.b16 %v2781, %v2777
        %v2914 = vpack.c.b16 %v2782, %v2778
        %v2915 = vpack.c.b16 %v2783, %v2779
        %v2916 = vpack.c.b16 %v2784, %v2780
        %v2917 = vpack.c.b16 %v2789, %v2785
        %v2918 = vpack.c.b16 %v2790, %v2786
        %v2919 = vpack.c.b16 %v2791, %v2787
        %v2920 = vpack.c.b16 %v2792, %v2788
        %3049 = vmatpush.bf16.msra.mxu0 %v2821
        %3050 = vmatpush.bf16.msra.mxu0 %v2817
        %3051 = vmatpush.bf16.msra.mxu0 %v2813
        %3052 = vmatpush.bf16.msra.mxu0 %v2809
        %3053 = vmatpush.bf16.msra.mxu0 %v2805
        %3054 = vmatpush.bf16.msra.mxu0 %v2801
        %3055 = vmatpush.bf16.msra.mxu0 %v2797
        %3056 = vmatpush.bf16.msra.mxu0 %v2793
        %3057 = vmatmul.bf16.gmra.mxu0 %v1296
        %v3058 = vpop.f32.mrf.mxu0
        %v3059 = vadd.f32 %v2250, %v3058
        %v3060 = vpop.f32.mrf.mxu0
        %3061 = vdwg.mxu0
        %3062 = vmatpush.bf16.msra.mxu0 %v2853
        %3063 = vmatpush.bf16.msra.mxu0 %v2849
        %3064 = vmatpush.bf16.msra.mxu0 %v2845
        %3065 = vmatpush.bf16.msra.mxu0 %v2841
        %3066 = vmatpush.bf16.msra.mxu0 %v2837
        %3067 = vmatpush.bf16.msra.mxu0 %v2833
        %3068 = vmatpush.bf16.msra.mxu0 %v2829
        %3069 = vmatpush.bf16.msra.mxu0 %v2825
        %3070 = vmatmul.bf16.gmra.mxu0 %v1297
        %v3071 = vpop.f32.mrf.mxu0
        %v3072 = vadd.f32 %v3059, %v3071
        %v3073 = vpop.f32.mrf.mxu0
        %3074 = vdwg.mxu0
        %3075 = vmatpush.bf16.msra.mxu0 %v2885
        %3076 = vmatpush.bf16.msra.mxu0 %v2881
        %3077 = vmatpush.bf16.msra.mxu0 %v2877
        %3078 = vmatpush.bf16.msra.mxu0 %v2873
        %3079 = vmatpush.bf16.msra.mxu0 %v2869
        %3080 = vmatpush.bf16.msra.mxu0 %v2865
        %3081 = vmatpush.bf16.msra.mxu0 %v2861
        %3082 = vmatpush.bf16.msra.mxu0 %v2857
        %3083 = vmatmul.bf16.gmra.mxu0 %v1298
        %v3084 = vpop.f32.mrf.mxu0
        %v3085 = vadd.f32 %v3072, %v3084
        %v3086 = vpop.f32.mrf.mxu0
        %3087 = vdwg.mxu0
        %3088 = vmatpush.bf16.msra.mxu0 %v2917
        %3089 = vmatpush.bf16.msra.mxu0 %v2913
        %3090 = vmatpush.bf16.msra.mxu0 %v2909
        %3091 = vmatpush.bf16.msra.mxu0 %v2905
        %3092 = vmatpush.bf16.msra.mxu0 %v2901
        %3093 = vmatpush.bf16.msra.mxu0 %v2897
        %3094 = vmatpush.bf16.msra.mxu0 %v2893
        %3095 = vmatpush.bf16.msra.mxu0 %v2889
        %3096 = vmatmul.bf16.gmra.mxu0 %v1299
        %v3097 = vpop.f32.mrf.mxu0
        %v3098 = vadd.f32 %v3085, %v3097
        %v3099 = vpop.f32.mrf.mxu0
        %3100 = vdwg.mxu0
        %3101 = vmatpush.bf16.msra.mxu0 %v2822
        %3102 = vmatpush.bf16.msra.mxu0 %v2818
        %3103 = vmatpush.bf16.msra.mxu0 %v2814
        %3104 = vmatpush.bf16.msra.mxu0 %v2810
        %3105 = vmatpush.bf16.msra.mxu0 %v2806
        %3106 = vmatpush.bf16.msra.mxu0 %v2802
        %3107 = vmatpush.bf16.msra.mxu0 %v2798
        %3108 = vmatpush.bf16.msra.mxu0 %v2794
        %3109 = vmatmul.bf16.gmra.mxu0 %v1296
        %v3110 = vpop.f32.mrf.mxu0
        %v3111 = vadd.f32 %v2302, %v3110
        %v3112 = vpop.f32.mrf.mxu0
        %3113 = vdwg.mxu0
        %3114 = vmatpush.bf16.msra.mxu0 %v2854
        %3115 = vmatpush.bf16.msra.mxu0 %v2850
        %3116 = vmatpush.bf16.msra.mxu0 %v2846
        %3117 = vmatpush.bf16.msra.mxu0 %v2842
        %3118 = vmatpush.bf16.msra.mxu0 %v2838
        %3119 = vmatpush.bf16.msra.mxu0 %v2834
        %3120 = vmatpush.bf16.msra.mxu0 %v2830
        %3121 = vmatpush.bf16.msra.mxu0 %v2826
        %3122 = vmatmul.bf16.gmra.mxu0 %v1297
        %v3123 = vpop.f32.mrf.mxu0
        %v3124 = vadd.f32 %v3111, %v3123
        %v3125 = vpop.f32.mrf.mxu0
        %3126 = vdwg.mxu0
        %3127 = vmatpush.bf16.msra.mxu0 %v2886
        %3128 = vmatpush.bf16.msra.mxu0 %v2882
        %3129 = vmatpush.bf16.msra.mxu0 %v2878
        %3130 = vmatpush.bf16.msra.mxu0 %v2874
        %3131 = vmatpush.bf16.msra.mxu0 %v2870
        %3132 = vmatpush.bf16.msra.mxu0 %v2866
        %3133 = vmatpush.bf16.msra.mxu0 %v2862
        %3134 = vmatpush.bf16.msra.mxu0 %v2858
        %3135 = vmatmul.bf16.gmra.mxu0 %v1298
        %v3136 = vpop.f32.mrf.mxu0
        %v3137 = vadd.f32 %v3124, %v3136
        %v3138 = vpop.f32.mrf.mxu0
        %3139 = vdwg.mxu0
        %3140 = vmatpush.bf16.msra.mxu0 %v2918
        %3141 = vmatpush.bf16.msra.mxu0 %v2914
        %3142 = vmatpush.bf16.msra.mxu0 %v2910
        %3143 = vmatpush.bf16.msra.mxu0 %v2906
        %3144 = vmatpush.bf16.msra.mxu0 %v2902
        %3145 = vmatpush.bf16.msra.mxu0 %v2898
        %3146 = vmatpush.bf16.msra.mxu0 %v2894
        %3147 = vmatpush.bf16.msra.mxu0 %v2890
        %3148 = vmatmul.bf16.gmra.mxu0 %v1299
        %v3149 = vpop.f32.mrf.mxu0
        %v3150 = vadd.f32 %v3137, %v3149
        %v3151 = vpop.f32.mrf.mxu0
        %3152 = vdwg.mxu0
        %3153 = vmatpush.bf16.msra.mxu0 %v2823
        %3154 = vmatpush.bf16.msra.mxu0 %v2819
        %3155 = vmatpush.bf16.msra.mxu0 %v2815
        %3156 = vmatpush.bf16.msra.mxu0 %v2811
        %3157 = vmatpush.bf16.msra.mxu0 %v2807
        %3158 = vmatpush.bf16.msra.mxu0 %v2803
        %3159 = vmatpush.bf16.msra.mxu0 %v2799
        %3160 = vmatpush.bf16.msra.mxu0 %v2795
        %3161 = vmatmul.bf16.gmra.mxu0 %v1296
        %v3162 = vpop.f32.mrf.mxu0
        %v3163 = vadd.f32 %v2354, %v3162
        %v3164 = vpop.f32.mrf.mxu0
        %3165 = vdwg.mxu0
        %3166 = vmatpush.bf16.msra.mxu0 %v2855
        %3167 = vmatpush.bf16.msra.mxu0 %v2851
        %3168 = vmatpush.bf16.msra.mxu0 %v2847
        %3169 = vmatpush.bf16.msra.mxu0 %v2843
        %3170 = vmatpush.bf16.msra.mxu0 %v2839
        %3171 = vmatpush.bf16.msra.mxu0 %v2835
        %3172 = vmatpush.bf16.msra.mxu0 %v2831
        %3173 = vmatpush.bf16.msra.mxu0 %v2827
        %3174 = vmatmul.bf16.gmra.mxu0 %v1297
        %v3175 = vpop.f32.mrf.mxu0
        %v3176 = vadd.f32 %v3163, %v3175
        %v3177 = vpop.f32.mrf.mxu0
        %3178 = vdwg.mxu0
        %3179 = vmatpush.bf16.msra.mxu0 %v2887
        %3180 = vmatpush.bf16.msra.mxu0 %v2883
        %3181 = vmatpush.bf16.msra.mxu0 %v2879
        %3182 = vmatpush.bf16.msra.mxu0 %v2875
        %3183 = vmatpush.bf16.msra.mxu0 %v2871
        %3184 = vmatpush.bf16.msra.mxu0 %v2867
        %3185 = vmatpush.bf16.msra.mxu0 %v2863
        %3186 = vmatpush.bf16.msra.mxu0 %v2859
        %3187 = vmatmul.bf16.gmra.mxu0 %v1298
        %v3188 = vpop.f32.mrf.mxu0
        %v3189 = vadd.f32 %v3176, %v3188
        %v3190 = vpop.f32.mrf.mxu0
        %3191 = vdwg.mxu0
        %3192 = vmatpush.bf16.msra.mxu0 %v2919
        %3193 = vmatpush.bf16.msra.mxu0 %v2915
        %3194 = vmatpush.bf16.msra.mxu0 %v2911
        %3195 = vmatpush.bf16.msra.mxu0 %v2907
        %3196 = vmatpush.bf16.msra.mxu0 %v2903
        %3197 = vmatpush.bf16.msra.mxu0 %v2899
        %3198 = vmatpush.bf16.msra.mxu0 %v2895
        %3199 = vmatpush.bf16.msra.mxu0 %v2891
        %3200 = vmatmul.bf16.gmra.mxu0 %v1299
        %v3201 = vpop.f32.mrf.mxu0
        %v3202 = vadd.f32 %v3189, %v3201
        %v3203 = vpop.f32.mrf.mxu0
        %3204 = vdwg.mxu0
        %3205 = vmatpush.bf16.msra.mxu0 %v2824
        %3206 = vmatpush.bf16.msra.mxu0 %v2820
        %3207 = vmatpush.bf16.msra.mxu0 %v2816
        %3208 = vmatpush.bf16.msra.mxu0 %v2812
        %3209 = vmatpush.bf16.msra.mxu0 %v2808
        %3210 = vmatpush.bf16.msra.mxu0 %v2804
        %3211 = vmatpush.bf16.msra.mxu0 %v2800
        %3212 = vmatpush.bf16.msra.mxu0 %v2796
        %3213 = vmatmul.bf16.gmra.mxu0 %v1296
        %v3214 = vpop.f32.mrf.mxu0
        %v3215 = vadd.f32 %v2406, %v3214
        %v3216 = vpop.f32.mrf.mxu0
        %3217 = vdwg.mxu0
        %3218 = vmatpush.bf16.msra.mxu0 %v2856
        %3219 = vmatpush.bf16.msra.mxu0 %v2852
        %3220 = vmatpush.bf16.msra.mxu0 %v2848
        %3221 = vmatpush.bf16.msra.mxu0 %v2844
        %3222 = vmatpush.bf16.msra.mxu0 %v2840
        %3223 = vmatpush.bf16.msra.mxu0 %v2836
        %3224 = vmatpush.bf16.msra.mxu0 %v2832
        %3225 = vmatpush.bf16.msra.mxu0 %v2828
        %3226 = vmatmul.bf16.gmra.mxu0 %v1297
        %v3227 = vpop.f32.mrf.mxu0
        %v3228 = vadd.f32 %v3215, %v3227
        %v3229 = vpop.f32.mrf.mxu0
        %3230 = vdwg.mxu0
        %3231 = vmatpush.bf16.msra.mxu0 %v2888
        %3232 = vmatpush.bf16.msra.mxu0 %v2884
        %3233 = vmatpush.bf16.msra.mxu0 %v2880
        %3234 = vmatpush.bf16.msra.mxu0 %v2876
        %3235 = vmatpush.bf16.msra.mxu0 %v2872
        %3236 = vmatpush.bf16.msra.mxu0 %v2868
        %3237 = vmatpush.bf16.msra.mxu0 %v2864
        %3238 = vmatpush.bf16.msra.mxu0 %v2860
        %3239 = vmatmul.bf16.gmra.mxu0 %v1298
        %v3240 = vpop.f32.mrf.mxu0
        %v3241 = vadd.f32 %v3228, %v3240
        %v3242 = vpop.f32.mrf.mxu0
        %3243 = vdwg.mxu0
        %3244 = vmatpush.bf16.msra.mxu0 %v2920
        %3245 = vmatpush.bf16.msra.mxu0 %v2916
        %3246 = vmatpush.bf16.msra.mxu0 %v2912
        %3247 = vmatpush.bf16.msra.mxu0 %v2908
        %3248 = vmatpush.bf16.msra.mxu0 %v2904
        %3249 = vmatpush.bf16.msra.mxu0 %v2900
        %3250 = vmatpush.bf16.msra.mxu0 %v2896
        %3251 = vmatpush.bf16.msra.mxu0 %v2892
        %3252 = vmatmul.bf16.gmra.mxu0 %v1299
        %v3253 = vpop.f32.mrf.mxu0
        %v3254 = vadd.f32 %v3241, %v3253
        %v3255 = vpop.f32.mrf.mxu0
        %3256 = vdwg.mxu0
        %v3257 = vpack.c.bf16 %v1242, %v1242
        %v3258 = vpack.c.bf16 %v1243, %v1243
        %v3259 = vpack.c.bf16 %v1244, %v1244
        %v3260 = vpack.c.bf16 %v1245, %v1245
        %s3261 = scalar_lea.vmem [#allocation11], 2048
        %v3262 = vld [vmem:[%s3261] sm:$0xff]
        %v3263 = vld [vmem:[%s3261 + $0x8] sm:$0xff]
        %v3264 = vld [vmem:[%s3261 + $0x10] sm:$0xff]
        %v3265 = vld [vmem:[%s3261 + $0x18] sm:$0xff]
        %v3266 = vld [vmem:[%s3261 + $0x20] sm:$0xff]
        %v3267 = vld [vmem:[%s3261 + $0x28] sm:$0xff]
        %v3268 = vld [vmem:[%s3261 + $0x30] sm:$0xff]
        %v3269 = vld [vmem:[%s3261 + $0x38] sm:$0xff]
        %v3270 = vld [vmem:[%s3261 + $0x40] sm:$0xff]
        %v3271 = vld [vmem:[%s3261 + $0x48] sm:$0xff]
        %v3272 = vld [vmem:[%s3261 + $0x50] sm:$0xff]
        %v3273 = vld [vmem:[%s3261 + $0x58] sm:$0xff]
        %v3274 = vld [vmem:[%s3261 + $0x60] sm:$0xff]
        %v3275 = vld [vmem:[%s3261 + $0x68] sm:$0xff]
        %v3276 = vld [vmem:[%s3261 + $0x70] sm:$0xff]
        %v3277 = vld [vmem:[%s3261 + $0x78] sm:$0xff]
        %v3278 = vld [vmem:[%s3261 + $0x80] sm:$0xff]
        %v3279 = vld [vmem:[%s3261 + $0x88] sm:$0xff]
        %v3280 = vld [vmem:[%s3261 + $0x90] sm:$0xff]
        %v3281 = vld [vmem:[%s3261 + $0x98] sm:$0xff]
        %v3282 = vld [vmem:[%s3261 + $0xa0] sm:$0xff]
        %v3283 = vld [vmem:[%s3261 + $0xa8] sm:$0xff]
        %v3284 = vld [vmem:[%s3261 + $0xb0] sm:$0xff]
        %v3285 = vld [vmem:[%s3261 + $0xb8] sm:$0xff]
        %v3286 = vld [vmem:[%s3261 + $0xc0] sm:$0xff]
        %v3287 = vld [vmem:[%s3261 + $0xc8] sm:$0xff]
        %v3288 = vld [vmem:[%s3261 + $0xd0] sm:$0xff]
        %v3289 = vld [vmem:[%s3261 + $0xd8] sm:$0xff]
        %v3290 = vld [vmem:[%s3261 + $0xe0] sm:$0xff]
        %v3291 = vld [vmem:[%s3261 + $0xe8] sm:$0xff]
        %v3292 = vld [vmem:[%s3261 + $0xf0] sm:$0xff]
        %v3293 = vld [vmem:[%s3261 + $0xf8] sm:$0xff]
        %v3294 = vld [vmem:[%s3261 + $0x100] sm:$0xff]
        %v3295 = vld [vmem:[%s3261 + $0x108] sm:$0xff]
        %v3296 = vld [vmem:[%s3261 + $0x110] sm:$0xff]
        %v3297 = vld [vmem:[%s3261 + $0x118] sm:$0xff]
        %v3298 = vld [vmem:[%s3261 + $0x120] sm:$0xff]
        %v3299 = vld [vmem:[%s3261 + $0x128] sm:$0xff]
        %v3300 = vld [vmem:[%s3261 + $0x130] sm:$0xff]
        %v3301 = vld [vmem:[%s3261 + $0x138] sm:$0xff]
        %v3302 = vld [vmem:[%s3261 + $0x140] sm:$0xff]
        %v3303 = vld [vmem:[%s3261 + $0x148] sm:$0xff]
        %v3304 = vld [vmem:[%s3261 + $0x150] sm:$0xff]
        %v3305 = vld [vmem:[%s3261 + $0x158] sm:$0xff]
        %v3306 = vld [vmem:[%s3261 + $0x160] sm:$0xff]
        %v3307 = vld [vmem:[%s3261 + $0x168] sm:$0xff]
        %v3308 = vld [vmem:[%s3261 + $0x170] sm:$0xff]
        %v3309 = vld [vmem:[%s3261 + $0x178] sm:$0xff]
        %v3310 = vld [vmem:[%s3261 + $0x180] sm:$0xff]
        %v3311 = vld [vmem:[%s3261 + $0x188] sm:$0xff]
        %v3312 = vld [vmem:[%s3261 + $0x190] sm:$0xff]
        %v3313 = vld [vmem:[%s3261 + $0x198] sm:$0xff]
        %v3314 = vld [vmem:[%s3261 + $0x1a0] sm:$0xff]
        %v3315 = vld [vmem:[%s3261 + $0x1a8] sm:$0xff]
        %v3316 = vld [vmem:[%s3261 + $0x1b0] sm:$0xff]
        %v3317 = vld [vmem:[%s3261 + $0x1b8] sm:$0xff]
        %v3318 = vld [vmem:[%s3261 + $0x1c0] sm:$0xff]
        %v3319 = vld [vmem:[%s3261 + $0x1c8] sm:$0xff]
        %v3320 = vld [vmem:[%s3261 + $0x1d0] sm:$0xff]
        %v3321 = vld [vmem:[%s3261 + $0x1d8] sm:$0xff]
        %v3322 = vld [vmem:[%s3261 + $0x1e0] sm:$0xff]
        %v3323 = vld [vmem:[%s3261 + $0x1e8] sm:$0xff]
        %v3324 = vld [vmem:[%s3261 + $0x1f0] sm:$0xff]
        %v3325 = vld [vmem:[%s3261 + $0x1f8] sm:$0xff]
        %v3326 = vld [vmem:[%s3261 + $0x200] sm:$0xff]
        %v3327 = vld [vmem:[%s3261 + $0x208] sm:$0xff]
        %v3328 = vld [vmem:[%s3261 + $0x210] sm:$0xff]
        %v3329 = vld [vmem:[%s3261 + $0x218] sm:$0xff]
        %v3330 = vld [vmem:[%s3261 + $0x220] sm:$0xff]
        %v3331 = vld [vmem:[%s3261 + $0x228] sm:$0xff]
        %v3332 = vld [vmem:[%s3261 + $0x230] sm:$0xff]
        %v3333 = vld [vmem:[%s3261 + $0x238] sm:$0xff]
        %v3334 = vld [vmem:[%s3261 + $0x240] sm:$0xff]
        %v3335 = vld [vmem:[%s3261 + $0x248] sm:$0xff]
        %v3336 = vld [vmem:[%s3261 + $0x250] sm:$0xff]
        %v3337 = vld [vmem:[%s3261 + $0x258] sm:$0xff]
        %v3338 = vld [vmem:[%s3261 + $0x260] sm:$0xff]
        %v3339 = vld [vmem:[%s3261 + $0x268] sm:$0xff]
        %v3340 = vld [vmem:[%s3261 + $0x270] sm:$0xff]
        %v3341 = vld [vmem:[%s3261 + $0x278] sm:$0xff]
        %v3342 = vld [vmem:[%s3261 + $0x280] sm:$0xff]
        %v3343 = vld [vmem:[%s3261 + $0x288] sm:$0xff]
        %v3344 = vld [vmem:[%s3261 + $0x290] sm:$0xff]
        %v3345 = vld [vmem:[%s3261 + $0x298] sm:$0xff]
        %v3346 = vld [vmem:[%s3261 + $0x2a0] sm:$0xff]
        %v3347 = vld [vmem:[%s3261 + $0x2a8] sm:$0xff]
        %v3348 = vld [vmem:[%s3261 + $0x2b0] sm:$0xff]
        %v3349 = vld [vmem:[%s3261 + $0x2b8] sm:$0xff]
        %v3350 = vld [vmem:[%s3261 + $0x2c0] sm:$0xff]
        %v3351 = vld [vmem:[%s3261 + $0x2c8] sm:$0xff]
        %v3352 = vld [vmem:[%s3261 + $0x2d0] sm:$0xff]
        %v3353 = vld [vmem:[%s3261 + $0x2d8] sm:$0xff]
        %v3354 = vld [vmem:[%s3261 + $0x2e0] sm:$0xff]
        %v3355 = vld [vmem:[%s3261 + $0x2e8] sm:$0xff]
        %v3356 = vld [vmem:[%s3261 + $0x2f0] sm:$0xff]
        %v3357 = vld [vmem:[%s3261 + $0x2f8] sm:$0xff]
        %v3358 = vld [vmem:[%s3261 + $0x300] sm:$0xff]
        %v3359 = vld [vmem:[%s3261 + $0x308] sm:$0xff]
        %v3360 = vld [vmem:[%s3261 + $0x310] sm:$0xff]
        %v3361 = vld [vmem:[%s3261 + $0x318] sm:$0xff]
        %v3362 = vld [vmem:[%s3261 + $0x320] sm:$0xff]
        %v3363 = vld [vmem:[%s3261 + $0x328] sm:$0xff]
        %v3364 = vld [vmem:[%s3261 + $0x330] sm:$0xff]
        %v3365 = vld [vmem:[%s3261 + $0x338] sm:$0xff]
        %v3366 = vld [vmem:[%s3261 + $0x340] sm:$0xff]
        %v3367 = vld [vmem:[%s3261 + $0x348] sm:$0xff]
        %v3368 = vld [vmem:[%s3261 + $0x350] sm:$0xff]
        %v3369 = vld [vmem:[%s3261 + $0x358] sm:$0xff]
        %v3370 = vld [vmem:[%s3261 + $0x360] sm:$0xff]
        %v3371 = vld [vmem:[%s3261 + $0x368] sm:$0xff]
        %v3372 = vld [vmem:[%s3261 + $0x370] sm:$0xff]
        %v3373 = vld [vmem:[%s3261 + $0x378] sm:$0xff]
        %v3374 = vld [vmem:[%s3261 + $0x380] sm:$0xff]
        %v3375 = vld [vmem:[%s3261 + $0x388] sm:$0xff]
        %v3376 = vld [vmem:[%s3261 + $0x390] sm:$0xff]
        %v3377 = vld [vmem:[%s3261 + $0x398] sm:$0xff]
        %v3378 = vld [vmem:[%s3261 + $0x3a0] sm:$0xff]
        %v3379 = vld [vmem:[%s3261 + $0x3a8] sm:$0xff]
        %v3380 = vld [vmem:[%s3261 + $0x3b0] sm:$0xff]
        %v3381 = vld [vmem:[%s3261 + $0x3b8] sm:$0xff]
        %v3382 = vld [vmem:[%s3261 + $0x3c0] sm:$0xff]
        %v3383 = vld [vmem:[%s3261 + $0x3c8] sm:$0xff]
        %v3384 = vld [vmem:[%s3261 + $0x3d0] sm:$0xff]
        %v3385 = vld [vmem:[%s3261 + $0x3d8] sm:$0xff]
        %v3386 = vld [vmem:[%s3261 + $0x3e0] sm:$0xff]
        %v3387 = vld [vmem:[%s3261 + $0x3e8] sm:$0xff]
        %v3388 = vld [vmem:[%s3261 + $0x3f0] sm:$0xff]
        %v3389 = vld [vmem:[%s3261 + $0x3f8] sm:$0xff]
        %v3518 = vunpack.c.l.b16 %v3262
        %v3519 = vunpack.c.h.b16 %v3262
        %v3520 = vunpack.c.l.b16 %v3263
        %v3521 = vunpack.c.h.b16 %v3263
        %v3522 = vunpack.c.l.b16 %v3264
        %v3523 = vunpack.c.h.b16 %v3264
        %v3524 = vunpack.c.l.b16 %v3265
        %v3525 = vunpack.c.h.b16 %v3265
        %v3526 = vunpack.c.l.b16 %v3266
        %v3527 = vunpack.c.h.b16 %v3266
        %v3528 = vunpack.c.l.b16 %v3267
        %v3529 = vunpack.c.h.b16 %v3267
        %v3530 = vunpack.c.l.b16 %v3268
        %v3531 = vunpack.c.h.b16 %v3268
        %v3532 = vunpack.c.l.b16 %v3269
        %v3533 = vunpack.c.h.b16 %v3269
        %v3534 = vunpack.c.l.b16 %v3270
        %v3535 = vunpack.c.h.b16 %v3270
        %v3536 = vunpack.c.l.b16 %v3271
        %v3537 = vunpack.c.h.b16 %v3271
        %v3538 = vunpack.c.l.b16 %v3272
        %v3539 = vunpack.c.h.b16 %v3272
        %v3540 = vunpack.c.l.b16 %v3273
        %v3541 = vunpack.c.h.b16 %v3273
        %v3542 = vunpack.c.l.b16 %v3274
        %v3543 = vunpack.c.h.b16 %v3274
        %v3544 = vunpack.c.l.b16 %v3275
        %v3545 = vunpack.c.h.b16 %v3275
        %v3546 = vunpack.c.l.b16 %v3276
        %v3547 = vunpack.c.h.b16 %v3276
        %v3548 = vunpack.c.l.b16 %v3277
        %v3549 = vunpack.c.h.b16 %v3277
        %v3550 = vunpack.c.l.b16 %v3278
        %v3551 = vunpack.c.h.b16 %v3278
        %v3552 = vunpack.c.l.b16 %v3279
        %v3553 = vunpack.c.h.b16 %v3279
        %v3554 = vunpack.c.l.b16 %v3280
        %v3555 = vunpack.c.h.b16 %v3280
        %v3556 = vunpack.c.l.b16 %v3281
        %v3557 = vunpack.c.h.b16 %v3281
        %v3558 = vunpack.c.l.b16 %v3282
        %v3559 = vunpack.c.h.b16 %v3282
        %v3560 = vunpack.c.l.b16 %v3283
        %v3561 = vunpack.c.h.b16 %v3283
        %v3562 = vunpack.c.l.b16 %v3284
        %v3563 = vunpack.c.h.b16 %v3284
        %v3564 = vunpack.c.l.b16 %v3285
        %v3565 = vunpack.c.h.b16 %v3285
        %v3566 = vunpack.c.l.b16 %v3286
        %v3567 = vunpack.c.h.b16 %v3286
        %v3568 = vunpack.c.l.b16 %v3287
        %v3569 = vunpack.c.h.b16 %v3287
        %v3570 = vunpack.c.l.b16 %v3288
        %v3571 = vunpack.c.h.b16 %v3288
        %v3572 = vunpack.c.l.b16 %v3289
        %v3573 = vunpack.c.h.b16 %v3289
        %v3574 = vunpack.c.l.b16 %v3290
        %v3575 = vunpack.c.h.b16 %v3290
        %v3576 = vunpack.c.l.b16 %v3291
        %v3577 = vunpack.c.h.b16 %v3291
        %v3578 = vunpack.c.l.b16 %v3292
        %v3579 = vunpack.c.h.b16 %v3292
        %v3580 = vunpack.c.l.b16 %v3293
        %v3581 = vunpack.c.h.b16 %v3293
        %v3582 = vunpack.c.l.b16 %v3294
        %v3583 = vunpack.c.h.b16 %v3294
        %v3584 = vunpack.c.l.b16 %v3295
        %v3585 = vunpack.c.h.b16 %v3295
        %v3586 = vunpack.c.l.b16 %v3296
        %v3587 = vunpack.c.h.b16 %v3296
        %v3588 = vunpack.c.l.b16 %v3297
        %v3589 = vunpack.c.h.b16 %v3297
        %v3590 = vunpack.c.l.b16 %v3298
        %v3591 = vunpack.c.h.b16 %v3298
        %v3592 = vunpack.c.l.b16 %v3299
        %v3593 = vunpack.c.h.b16 %v3299
        %v3594 = vunpack.c.l.b16 %v3300
        %v3595 = vunpack.c.h.b16 %v3300
        %v3596 = vunpack.c.l.b16 %v3301
        %v3597 = vunpack.c.h.b16 %v3301
        %v3598 = vunpack.c.l.b16 %v3302
        %v3599 = vunpack.c.h.b16 %v3302
        %v3600 = vunpack.c.l.b16 %v3303
        %v3601 = vunpack.c.h.b16 %v3303
        %v3602 = vunpack.c.l.b16 %v3304
        %v3603 = vunpack.c.h.b16 %v3304
        %v3604 = vunpack.c.l.b16 %v3305
        %v3605 = vunpack.c.h.b16 %v3305
        %v3606 = vunpack.c.l.b16 %v3306
        %v3607 = vunpack.c.h.b16 %v3306
        %v3608 = vunpack.c.l.b16 %v3307
        %v3609 = vunpack.c.h.b16 %v3307
        %v3610 = vunpack.c.l.b16 %v3308
        %v3611 = vunpack.c.h.b16 %v3308
        %v3612 = vunpack.c.l.b16 %v3309
        %v3613 = vunpack.c.h.b16 %v3309
        %v3614 = vunpack.c.l.b16 %v3310
        %v3615 = vunpack.c.h.b16 %v3310
        %v3616 = vunpack.c.l.b16 %v3311
        %v3617 = vunpack.c.h.b16 %v3311
        %v3618 = vunpack.c.l.b16 %v3312
        %v3619 = vunpack.c.h.b16 %v3312
        %v3620 = vunpack.c.l.b16 %v3313
        %v3621 = vunpack.c.h.b16 %v3313
        %v3622 = vunpack.c.l.b16 %v3314
        %v3623 = vunpack.c.h.b16 %v3314
        %v3624 = vunpack.c.l.b16 %v3315
        %v3625 = vunpack.c.h.b16 %v3315
        %v3626 = vunpack.c.l.b16 %v3316
        %v3627 = vunpack.c.h.b16 %v3316
        %v3628 = vunpack.c.l.b16 %v3317
        %v3629 = vunpack.c.h.b16 %v3317
        %v3630 = vunpack.c.l.b16 %v3318
        %v3631 = vunpack.c.h.b16 %v3318
        %v3632 = vunpack.c.l.b16 %v3319
        %v3633 = vunpack.c.h.b16 %v3319
        %v3634 = vunpack.c.l.b16 %v3320
        %v3635 = vunpack.c.h.b16 %v3320
        %v3636 = vunpack.c.l.b16 %v3321
        %v3637 = vunpack.c.h.b16 %v3321
        %v3638 = vunpack.c.l.b16 %v3322
        %v3639 = vunpack.c.h.b16 %v3322
        %v3640 = vunpack.c.l.b16 %v3323
        %v3641 = vunpack.c.h.b16 %v3323
        %v3642 = vunpack.c.l.b16 %v3324
        %v3643 = vunpack.c.h.b16 %v3324
        %v3644 = vunpack.c.l.b16 %v3325
        %v3645 = vunpack.c.h.b16 %v3325
        %v3646 = vunpack.c.l.b16 %v3326
        %v3647 = vunpack.c.h.b16 %v3326
        %v3648 = vunpack.c.l.b16 %v3327
        %v3649 = vunpack.c.h.b16 %v3327
        %v3650 = vunpack.c.l.b16 %v3328
        %v3651 = vunpack.c.h.b16 %v3328
        %v3652 = vunpack.c.l.b16 %v3329
        %v3653 = vunpack.c.h.b16 %v3329
        %v3654 = vunpack.c.l.b16 %v3330
        %v3655 = vunpack.c.h.b16 %v3330
        %v3656 = vunpack.c.l.b16 %v3331
        %v3657 = vunpack.c.h.b16 %v3331
        %v3658 = vunpack.c.l.b16 %v3332
        %v3659 = vunpack.c.h.b16 %v3332
        %v3660 = vunpack.c.l.b16 %v3333
        %v3661 = vunpack.c.h.b16 %v3333
        %v3662 = vunpack.c.l.b16 %v3334
        %v3663 = vunpack.c.h.b16 %v3334
        %v3664 = vunpack.c.l.b16 %v3335
        %v3665 = vunpack.c.h.b16 %v3335
        %v3666 = vunpack.c.l.b16 %v3336
        %v3667 = vunpack.c.h.b16 %v3336
        %v3668 = vunpack.c.l.b16 %v3337
        %v3669 = vunpack.c.h.b16 %v3337
        %v3670 = vunpack.c.l.b16 %v3338
        %v3671 = vunpack.c.h.b16 %v3338
        %v3672 = vunpack.c.l.b16 %v3339
        %v3673 = vunpack.c.h.b16 %v3339
        %v3674 = vunpack.c.l.b16 %v3340
        %v3675 = vunpack.c.h.b16 %v3340
        %v3676 = vunpack.c.l.b16 %v3341
        %v3677 = vunpack.c.h.b16 %v3341
        %v3678 = vunpack.c.l.b16 %v3342
        %v3679 = vunpack.c.h.b16 %v3342
        %v3680 = vunpack.c.l.b16 %v3343
        %v3681 = vunpack.c.h.b16 %v3343
        %v3682 = vunpack.c.l.b16 %v3344
        %v3683 = vunpack.c.h.b16 %v3344
        %v3684 = vunpack.c.l.b16 %v3345
        %v3685 = vunpack.c.h.b16 %v3345
        %v3686 = vunpack.c.l.b16 %v3346
        %v3687 = vunpack.c.h.b16 %v3346
        %v3688 = vunpack.c.l.b16 %v3347
        %v3689 = vunpack.c.h.b16 %v3347
        %v3690 = vunpack.c.l.b16 %v3348
        %v3691 = vunpack.c.h.b16 %v3348
        %v3692 = vunpack.c.l.b16 %v3349
        %v3693 = vunpack.c.h.b16 %v3349
        %v3694 = vunpack.c.l.b16 %v3350
        %v3695 = vunpack.c.h.b16 %v3350
        %v3696 = vunpack.c.l.b16 %v3351
        %v3697 = vunpack.c.h.b16 %v3351
        %v3698 = vunpack.c.l.b16 %v3352
        %v3699 = vunpack.c.h.b16 %v3352
        %v3700 = vunpack.c.l.b16 %v3353
        %v3701 = vunpack.c.h.b16 %v3353
        %v3702 = vunpack.c.l.b16 %v3354
        %v3703 = vunpack.c.h.b16 %v3354
        %v3704 = vunpack.c.l.b16 %v3355
        %v3705 = vunpack.c.h.b16 %v3355
        %v3706 = vunpack.c.l.b16 %v3356
        %v3707 = vunpack.c.h.b16 %v3356
        %v3708 = vunpack.c.l.b16 %v3357
        %v3709 = vunpack.c.h.b16 %v3357
        %v3710 = vunpack.c.l.b16 %v3358
        %v3711 = vunpack.c.h.b16 %v3358
        %v3712 = vunpack.c.l.b16 %v3359
        %v3713 = vunpack.c.h.b16 %v3359
        %v3714 = vunpack.c.l.b16 %v3360
        %v3715 = vunpack.c.h.b16 %v3360
        %v3716 = vunpack.c.l.b16 %v3361
        %v3717 = vunpack.c.h.b16 %v3361
        %v3718 = vunpack.c.l.b16 %v3362
        %v3719 = vunpack.c.h.b16 %v3362
        %v3720 = vunpack.c.l.b16 %v3363
        %v3721 = vunpack.c.h.b16 %v3363
        %v3722 = vunpack.c.l.b16 %v3364
        %v3723 = vunpack.c.h.b16 %v3364
        %v3724 = vunpack.c.l.b16 %v3365
        %v3725 = vunpack.c.h.b16 %v3365
        %v3726 = vunpack.c.l.b16 %v3366
        %v3727 = vunpack.c.h.b16 %v3366
        %v3728 = vunpack.c.l.b16 %v3367
        %v3729 = vunpack.c.h.b16 %v3367
        %v3730 = vunpack.c.l.b16 %v3368
        %v3731 = vunpack.c.h.b16 %v3368
        %v3732 = vunpack.c.l.b16 %v3369
        %v3733 = vunpack.c.h.b16 %v3369
        %v3734 = vunpack.c.l.b16 %v3370
        %v3735 = vunpack.c.h.b16 %v3370
        %v3736 = vunpack.c.l.b16 %v3371
        %v3737 = vunpack.c.h.b16 %v3371
        %v3738 = vunpack.c.l.b16 %v3372
        %v3739 = vunpack.c.h.b16 %v3372
        %v3740 = vunpack.c.l.b16 %v3373
        %v3741 = vunpack.c.h.b16 %v3373
        %v3742 = vunpack.c.l.b16 %v3374
        %v3743 = vunpack.c.h.b16 %v3374
        %v3744 = vunpack.c.l.b16 %v3375
        %v3745 = vunpack.c.h.b16 %v3375
        %v3746 = vunpack.c.l.b16 %v3376
        %v3747 = vunpack.c.h.b16 %v3376
        %v3748 = vunpack.c.l.b16 %v3377
        %v3749 = vunpack.c.h.b16 %v3377
        %v3750 = vunpack.c.l.b16 %v3378
        %v3751 = vunpack.c.h.b16 %v3378
        %v3752 = vunpack.c.l.b16 %v3379
        %v3753 = vunpack.c.h.b16 %v3379
        %v3754 = vunpack.c.l.b16 %v3380
        %v3755 = vunpack.c.h.b16 %v3380
        %v3756 = vunpack.c.l.b16 %v3381
        %v3757 = vunpack.c.h.b16 %v3381
        %v3758 = vunpack.c.l.b16 %v3382
        %v3759 = vunpack.c.h.b16 %v3382
        %v3760 = vunpack.c.l.b16 %v3383
        %v3761 = vunpack.c.h.b16 %v3383
        %v3762 = vunpack.c.l.b16 %v3384
        %v3763 = vunpack.c.h.b16 %v3384
        %v3764 = vunpack.c.l.b16 %v3385
        %v3765 = vunpack.c.h.b16 %v3385
        %v3766 = vunpack.c.l.b16 %v3386
        %v3767 = vunpack.c.h.b16 %v3386
        %v3768 = vunpack.c.l.b16 %v3387
        %v3769 = vunpack.c.h.b16 %v3387
        %v3770 = vunpack.c.l.b16 %v3388
        %v3771 = vunpack.c.h.b16 %v3388
        %v3772 = vunpack.c.l.b16 %v3389
        %v3773 = vunpack.c.h.b16 %v3389
        %v3774 = vpack.c.b16 %v3522, %v3518
        %v3775 = vpack.c.b16 %v3523, %v3519
        %v3776 = vpack.c.b16 %v3524, %v3520
        %v3777 = vpack.c.b16 %v3525, %v3521
        %v3778 = vpack.c.b16 %v3530, %v3526
        %v3779 = vpack.c.b16 %v3531, %v3527
        %v3780 = vpack.c.b16 %v3532, %v3528
        %v3781 = vpack.c.b16 %v3533, %v3529
        %v3782 = vpack.c.b16 %v3538, %v3534
        %v3783 = vpack.c.b16 %v3539, %v3535
        %v3784 = vpack.c.b16 %v3540, %v3536
        %v3785 = vpack.c.b16 %v3541, %v3537
        %v3786 = vpack.c.b16 %v3546, %v3542
        %v3787 = vpack.c.b16 %v3547, %v3543
        %v3788 = vpack.c.b16 %v3548, %v3544
        %v3789 = vpack.c.b16 %v3549, %v3545
        %v3790 = vpack.c.b16 %v3554, %v3550
        %v3791 = vpack.c.b16 %v3555, %v3551
        %v3792 = vpack.c.b16 %v3556, %v3552
        %v3793 = vpack.c.b16 %v3557, %v3553
        %v3794 = vpack.c.b16 %v3562, %v3558
        %v3795 = vpack.c.b16 %v3563, %v3559
        %v3796 = vpack.c.b16 %v3564, %v3560
        %v3797 = vpack.c.b16 %v3565, %v3561
        %v3798 = vpack.c.b16 %v3570, %v3566
        %v3799 = vpack.c.b16 %v3571, %v3567
        %v3800 = vpack.c.b16 %v3572, %v3568
        %v3801 = vpack.c.b16 %v3573, %v3569
        %v3802 = vpack.c.b16 %v3578, %v3574
        %v3803 = vpack.c.b16 %v3579, %v3575
        %v3804 = vpack.c.b16 %v3580, %v3576
        %v3805 = vpack.c.b16 %v3581, %v3577
        %v3806 = vpack.c.b16 %v3586, %v3582
        %v3807 = vpack.c.b16 %v3587, %v3583
        %v3808 = vpack.c.b16 %v3588, %v3584
        %v3809 = vpack.c.b16 %v3589, %v3585
        %v3810 = vpack.c.b16 %v3594, %v3590
        %v3811 = vpack.c.b16 %v3595, %v3591
        %v3812 = vpack.c.b16 %v3596, %v3592
        %v3813 = vpack.c.b16 %v3597, %v3593
        %v3814 = vpack.c.b16 %v3602, %v3598
        %v3815 = vpack.c.b16 %v3603, %v3599
        %v3816 = vpack.c.b16 %v3604, %v3600
        %v3817 = vpack.c.b16 %v3605, %v3601
        %v3818 = vpack.c.b16 %v3610, %v3606
        %v3819 = vpack.c.b16 %v3611, %v3607
        %v3820 = vpack.c.b16 %v3612, %v3608
        %v3821 = vpack.c.b16 %v3613, %v3609
        %v3822 = vpack.c.b16 %v3618, %v3614
        %v3823 = vpack.c.b16 %v3619, %v3615
        %v3824 = vpack.c.b16 %v3620, %v3616
        %v3825 = vpack.c.b16 %v3621, %v3617
        %v3826 = vpack.c.b16 %v3626, %v3622
        %v3827 = vpack.c.b16 %v3627, %v3623
        %v3828 = vpack.c.b16 %v3628, %v3624
        %v3829 = vpack.c.b16 %v3629, %v3625
        %v3830 = vpack.c.b16 %v3634, %v3630
        %v3831 = vpack.c.b16 %v3635, %v3631
        %v3832 = vpack.c.b16 %v3636, %v3632
        %v3833 = vpack.c.b16 %v3637, %v3633
        %v3834 = vpack.c.b16 %v3642, %v3638
        %v3835 = vpack.c.b16 %v3643, %v3639
        %v3836 = vpack.c.b16 %v3644, %v3640
        %v3837 = vpack.c.b16 %v3645, %v3641
        %v3838 = vpack.c.b16 %v3650, %v3646
        %v3839 = vpack.c.b16 %v3651, %v3647
        %v3840 = vpack.c.b16 %v3652, %v3648
        %v3841 = vpack.c.b16 %v3653, %v3649
        %v3842 = vpack.c.b16 %v3658, %v3654
        %v3843 = vpack.c.b16 %v3659, %v3655
        %v3844 = vpack.c.b16 %v3660, %v3656
        %v3845 = vpack.c.b16 %v3661, %v3657
        %v3846 = vpack.c.b16 %v3666, %v3662
        %v3847 = vpack.c.b16 %v3667, %v3663
        %v3848 = vpack.c.b16 %v3668, %v3664
        %v3849 = vpack.c.b16 %v3669, %v3665
        %v3850 = vpack.c.b16 %v3674, %v3670
        %v3851 = vpack.c.b16 %v3675, %v3671
        %v3852 = vpack.c.b16 %v3676, %v3672
        %v3853 = vpack.c.b16 %v3677, %v3673
        %v3854 = vpack.c.b16 %v3682, %v3678
        %v3855 = vpack.c.b16 %v3683, %v3679
        %v3856 = vpack.c.b16 %v3684, %v3680
        %v3857 = vpack.c.b16 %v3685, %v3681
        %v3858 = vpack.c.b16 %v3690, %v3686
        %v3859 = vpack.c.b16 %v3691, %v3687
        %v3860 = vpack.c.b16 %v3692, %v3688
        %v3861 = vpack.c.b16 %v3693, %v3689
        %v3862 = vpack.c.b16 %v3698, %v3694
        %v3863 = vpack.c.b16 %v3699, %v3695
        %v3864 = vpack.c.b16 %v3700, %v3696
        %v3865 = vpack.c.b16 %v3701, %v3697
        %v3866 = vpack.c.b16 %v3706, %v3702
        %v3867 = vpack.c.b16 %v3707, %v3703
        %v3868 = vpack.c.b16 %v3708, %v3704
        %v3869 = vpack.c.b16 %v3709, %v3705
        %v3870 = vpack.c.b16 %v3714, %v3710
        %v3871 = vpack.c.b16 %v3715, %v3711
        %v3872 = vpack.c.b16 %v3716, %v3712
        %v3873 = vpack.c.b16 %v3717, %v3713
        %v3874 = vpack.c.b16 %v3722, %v3718
        %v3875 = vpack.c.b16 %v3723, %v3719
        %v3876 = vpack.c.b16 %v3724, %v3720
        %v3877 = vpack.c.b16 %v3725, %v3721
        %v3878 = vpack.c.b16 %v3730, %v3726
        %v3879 = vpack.c.b16 %v3731, %v3727
        %v3880 = vpack.c.b16 %v3732, %v3728
        %v3881 = vpack.c.b16 %v3733, %v3729
        %v3882 = vpack.c.b16 %v3738, %v3734
        %v3883 = vpack.c.b16 %v3739, %v3735
        %v3884 = vpack.c.b16 %v3740, %v3736
        %v3885 = vpack.c.b16 %v3741, %v3737
        %v3886 = vpack.c.b16 %v3746, %v3742
        %v3887 = vpack.c.b16 %v3747, %v3743
        %v3888 = vpack.c.b16 %v3748, %v3744
        %v3889 = vpack.c.b16 %v3749, %v3745
        %v3890 = vpack.c.b16 %v3754, %v3750
        %v3891 = vpack.c.b16 %v3755, %v3751
        %v3892 = vpack.c.b16 %v3756, %v3752
        %v3893 = vpack.c.b16 %v3757, %v3753
        %v3894 = vpack.c.b16 %v3762, %v3758
        %v3895 = vpack.c.b16 %v3763, %v3759
        %v3896 = vpack.c.b16 %v3764, %v3760
        %v3897 = vpack.c.b16 %v3765, %v3761
        %v3898 = vpack.c.b16 %v3770, %v3766
        %v3899 = vpack.c.b16 %v3771, %v3767
        %v3900 = vpack.c.b16 %v3772, %v3768
        %v3901 = vpack.c.b16 %v3773, %v3769
        %4030 = vmatpush.bf16.msra.mxu0 %v3802
        %4031 = vmatpush.bf16.msra.mxu0 %v3798
        %4032 = vmatpush.bf16.msra.mxu0 %v3794
        %4033 = vmatpush.bf16.msra.mxu0 %v3790
        %4034 = vmatpush.bf16.msra.mxu0 %v3786
        %4035 = vmatpush.bf16.msra.mxu0 %v3782
        %4036 = vmatpush.bf16.msra.mxu0 %v3778
        %4037 = vmatpush.bf16.msra.mxu0 %v3774
        %4038 = vmatmul.bf16.gmra.mxu0 %v3257
        %v4039 = vpop.f32.mrf.mxu0
        %v4040 = vadd.f32 0.0, %v4039
        %v4041 = vpop.f32.mrf.mxu0
        %4042 = vdwg.mxu0
        %4043 = vmatpush.bf16.msra.mxu0 %v3834
        %4044 = vmatpush.bf16.msra.mxu0 %v3830
        %4045 = vmatpush.bf16.msra.mxu0 %v3826
        %4046 = vmatpush.bf16.msra.mxu0 %v3822
        %4047 = vmatpush.bf16.msra.mxu0 %v3818
        %4048 = vmatpush.bf16.msra.mxu0 %v3814
        %4049 = vmatpush.bf16.msra.mxu0 %v3810
        %4050 = vmatpush.bf16.msra.mxu0 %v3806
        %4051 = vmatmul.bf16.gmra.mxu0 %v3258
        %v4052 = vpop.f32.mrf.mxu0
        %v4053 = vadd.f32 %v4040, %v4052
        %v4054 = vpop.f32.mrf.mxu0
        %4055 = vdwg.mxu0
        %4056 = vmatpush.bf16.msra.mxu0 %v3866
        %4057 = vmatpush.bf16.msra.mxu0 %v3862
        %4058 = vmatpush.bf16.msra.mxu0 %v3858
        %4059 = vmatpush.bf16.msra.mxu0 %v3854
        %4060 = vmatpush.bf16.msra.mxu0 %v3850
        %4061 = vmatpush.bf16.msra.mxu0 %v3846
        %4062 = vmatpush.bf16.msra.mxu0 %v3842
        %4063 = vmatpush.bf16.msra.mxu0 %v3838
        %4064 = vmatmul.bf16.gmra.mxu0 %v3259
        %v4065 = vpop.f32.mrf.mxu0
        %v4066 = vadd.f32 %v4053, %v4065
        %v4067 = vpop.f32.mrf.mxu0
        %4068 = vdwg.mxu0
        %4069 = vmatpush.bf16.msra.mxu0 %v3898
        %4070 = vmatpush.bf16.msra.mxu0 %v3894
        %4071 = vmatpush.bf16.msra.mxu0 %v3890
        %4072 = vmatpush.bf16.msra.mxu0 %v3886
        %4073 = vmatpush.bf16.msra.mxu0 %v3882
        %4074 = vmatpush.bf16.msra.mxu0 %v3878
        %4075 = vmatpush.bf16.msra.mxu0 %v3874
        %4076 = vmatpush.bf16.msra.mxu0 %v3870
        %4077 = vmatmul.bf16.gmra.mxu0 %v3260
        %v4078 = vpop.f32.mrf.mxu0
        %v4079 = vadd.f32 %v4066, %v4078
        %v4080 = vpop.f32.mrf.mxu0
        %4081 = vdwg.mxu0
        %4082 = vmatpush.bf16.msra.mxu0 %v3803
        %4083 = vmatpush.bf16.msra.mxu0 %v3799
        %4084 = vmatpush.bf16.msra.mxu0 %v3795
        %4085 = vmatpush.bf16.msra.mxu0 %v3791
        %4086 = vmatpush.bf16.msra.mxu0 %v3787
        %4087 = vmatpush.bf16.msra.mxu0 %v3783
        %4088 = vmatpush.bf16.msra.mxu0 %v3779
        %4089 = vmatpush.bf16.msra.mxu0 %v3775
        %4090 = vmatmul.bf16.gmra.mxu0 %v3257
        %v4091 = vpop.f32.mrf.mxu0
        %v4092 = vadd.f32 0.0, %v4091
        %v4093 = vpop.f32.mrf.mxu0
        %4094 = vdwg.mxu0
        %4095 = vmatpush.bf16.msra.mxu0 %v3835
        %4096 = vmatpush.bf16.msra.mxu0 %v3831
        %4097 = vmatpush.bf16.msra.mxu0 %v3827
        %4098 = vmatpush.bf16.msra.mxu0 %v3823
        %4099 = vmatpush.bf16.msra.mxu0 %v3819
        %4100 = vmatpush.bf16.msra.mxu0 %v3815
        %4101 = vmatpush.bf16.msra.mxu0 %v3811
        %4102 = vmatpush.bf16.msra.mxu0 %v3807
        %4103 = vmatmul.bf16.gmra.mxu0 %v3258
        %v4104 = vpop.f32.mrf.mxu0
        %v4105 = vadd.f32 %v4092, %v4104
        %v4106 = vpop.f32.mrf.mxu0
        %4107 = vdwg.mxu0
        %4108 = vmatpush.bf16.msra.mxu0 %v3867
        %4109 = vmatpush.bf16.msra.mxu0 %v3863
        %4110 = vmatpush.bf16.msra.mxu0 %v3859
        %4111 = vmatpush.bf16.msra.mxu0 %v3855
        %4112 = vmatpush.bf16.msra.mxu0 %v3851
        %4113 = vmatpush.bf16.msra.mxu0 %v3847
        %4114 = vmatpush.bf16.msra.mxu0 %v3843
        %4115 = vmatpush.bf16.msra.mxu0 %v3839
        %4116 = vmatmul.bf16.gmra.mxu0 %v3259
        %v4117 = vpop.f32.mrf.mxu0
        %v4118 = vadd.f32 %v4105, %v4117
        %v4119 = vpop.f32.mrf.mxu0
        %4120 = vdwg.mxu0
        %4121 = vmatpush.bf16.msra.mxu0 %v3899
        %4122 = vmatpush.bf16.msra.mxu0 %v3895
        %4123 = vmatpush.bf16.msra.mxu0 %v3891
        %4124 = vmatpush.bf16.msra.mxu0 %v3887
        %4125 = vmatpush.bf16.msra.mxu0 %v3883
        %4126 = vmatpush.bf16.msra.mxu0 %v3879
        %4127 = vmatpush.bf16.msra.mxu0 %v3875
        %4128 = vmatpush.bf16.msra.mxu0 %v3871
        %4129 = vmatmul.bf16.gmra.mxu0 %v3260
        %v4130 = vpop.f32.mrf.mxu0
        %v4131 = vadd.f32 %v4118, %v4130
        %v4132 = vpop.f32.mrf.mxu0
        %4133 = vdwg.mxu0
        %4134 = vmatpush.bf16.msra.mxu0 %v3804
        %4135 = vmatpush.bf16.msra.mxu0 %v3800
        %4136 = vmatpush.bf16.msra.mxu0 %v3796
        %4137 = vmatpush.bf16.msra.mxu0 %v3792
        %4138 = vmatpush.bf16.msra.mxu0 %v3788
        %4139 = vmatpush.bf16.msra.mxu0 %v3784
        %4140 = vmatpush.bf16.msra.mxu0 %v3780
        %4141 = vmatpush.bf16.msra.mxu0 %v3776
        %4142 = vmatmul.bf16.gmra.mxu0 %v3257
        %v4143 = vpop.f32.mrf.mxu0
        %v4144 = vadd.f32 0.0, %v4143
        %v4145 = vpop.f32.mrf.mxu0
        %4146 = vdwg.mxu0
        %4147 = vmatpush.bf16.msra.mxu0 %v3836
        %4148 = vmatpush.bf16.msra.mxu0 %v3832
        %4149 = vmatpush.bf16.msra.mxu0 %v3828
        %4150 = vmatpush.bf16.msra.mxu0 %v3824
        %4151 = vmatpush.bf16.msra.mxu0 %v3820
        %4152 = vmatpush.bf16.msra.mxu0 %v3816
        %4153 = vmatpush.bf16.msra.mxu0 %v3812
        %4154 = vmatpush.bf16.msra.mxu0 %v3808
        %4155 = vmatmul.bf16.gmra.mxu0 %v3258
        %v4156 = vpop.f32.mrf.mxu0
        %v4157 = vadd.f32 %v4144, %v4156
        %v4158 = vpop.f32.mrf.mxu0
        %4159 = vdwg.mxu0
        %4160 = vmatpush.bf16.msra.mxu0 %v3868
        %4161 = vmatpush.bf16.msra.mxu0 %v3864
        %4162 = vmatpush.bf16.msra.mxu0 %v3860
        %4163 = vmatpush.bf16.msra.mxu0 %v3856
        %4164 = vmatpush.bf16.msra.mxu0 %v3852
        %4165 = vmatpush.bf16.msra.mxu0 %v3848
        %4166 = vmatpush.bf16.msra.mxu0 %v3844
        %4167 = vmatpush.bf16.msra.mxu0 %v3840
        %4168 = vmatmul.bf16.gmra.mxu0 %v3259
        %v4169 = vpop.f32.mrf.mxu0
        %v4170 = vadd.f32 %v4157, %v4169
        %v4171 = vpop.f32.mrf.mxu0
        %4172 = vdwg.mxu0
        %4173 = vmatpush.bf16.msra.mxu0 %v3900
        %4174 = vmatpush.bf16.msra.mxu0 %v3896
        %4175 = vmatpush.bf16.msra.mxu0 %v3892
        %4176 = vmatpush.bf16.msra.mxu0 %v3888
        %4177 = vmatpush.bf16.msra.mxu0 %v3884
        %4178 = vmatpush.bf16.msra.mxu0 %v3880
        %4179 = vmatpush.bf16.msra.mxu0 %v3876
        %4180 = vmatpush.bf16.msra.mxu0 %v3872
        %4181 = vmatmul.bf16.gmra.mxu0 %v3260
        %v4182 = vpop.f32.mrf.mxu0
        %v4183 = vadd.f32 %v4170, %v4182
        %v4184 = vpop.f32.mrf.mxu0
        %4185 = vdwg.mxu0
        %4186 = vmatpush.bf16.msra.mxu0 %v3805
        %4187 = vmatpush.bf16.msra.mxu0 %v3801
        %4188 = vmatpush.bf16.msra.mxu0 %v3797
        %4189 = vmatpush.bf16.msra.mxu0 %v3793
        %4190 = vmatpush.bf16.msra.mxu0 %v3789
        %4191 = vmatpush.bf16.msra.mxu0 %v3785
        %4192 = vmatpush.bf16.msra.mxu0 %v3781
        %4193 = vmatpush.bf16.msra.mxu0 %v3777
        %4194 = vmatmul.bf16.gmra.mxu0 %v3257
        %v4195 = vpop.f32.mrf.mxu0
        %v4196 = vadd.f32 0.0, %v4195
        %v4197 = vpop.f32.mrf.mxu0
        %4198 = vdwg.mxu0
        %4199 = vmatpush.bf16.msra.mxu0 %v3837
        %4200 = vmatpush.bf16.msra.mxu0 %v3833
        %4201 = vmatpush.bf16.msra.mxu0 %v3829
        %4202 = vmatpush.bf16.msra.mxu0 %v3825
        %4203 = vmatpush.bf16.msra.mxu0 %v3821
        %4204 = vmatpush.bf16.msra.mxu0 %v3817
        %4205 = vmatpush.bf16.msra.mxu0 %v3813
        %4206 = vmatpush.bf16.msra.mxu0 %v3809
        %4207 = vmatmul.bf16.gmra.mxu0 %v3258
        %v4208 = vpop.f32.mrf.mxu0
        %v4209 = vadd.f32 %v4196, %v4208
        %v4210 = vpop.f32.mrf.mxu0
        %4211 = vdwg.mxu0
        %4212 = vmatpush.bf16.msra.mxu0 %v3869
        %4213 = vmatpush.bf16.msra.mxu0 %v3865
        %4214 = vmatpush.bf16.msra.mxu0 %v3861
        %4215 = vmatpush.bf16.msra.mxu0 %v3857
        %4216 = vmatpush.bf16.msra.mxu0 %v3853
        %4217 = vmatpush.bf16.msra.mxu0 %v3849
        %4218 = vmatpush.bf16.msra.mxu0 %v3845
        %4219 = vmatpush.bf16.msra.mxu0 %v3841
        %4220 = vmatmul.bf16.gmra.mxu0 %v3259
        %v4221 = vpop.f32.mrf.mxu0
        %v4222 = vadd.f32 %v4209, %v4221
        %v4223 = vpop.f32.mrf.mxu0
        %4224 = vdwg.mxu0
        %4225 = vmatpush.bf16.msra.mxu0 %v3901
        %4226 = vmatpush.bf16.msra.mxu0 %v3897
        %4227 = vmatpush.bf16.msra.mxu0 %v3893
        %4228 = vmatpush.bf16.msra.mxu0 %v3889
        %4229 = vmatpush.bf16.msra.mxu0 %v3885
        %4230 = vmatpush.bf16.msra.mxu0 %v3881
        %4231 = vmatpush.bf16.msra.mxu0 %v3877
        %4232 = vmatpush.bf16.msra.mxu0 %v3873
        %4233 = vmatmul.bf16.gmra.mxu0 %v3260
        %v4234 = vpop.f32.mrf.mxu0
        %v4235 = vadd.f32 %v4222, %v4234
        %v4236 = vpop.f32.mrf.mxu0
        %4237 = vdwg.mxu0
        %v4238 = vadd.f32 %v3098, %v4079
        %v4239 = vadd.f32 %v3150, %v4131
        %v4240 = vadd.f32 %v3202, %v4183
        %v4241 = vadd.f32 %v3254, %v4235
        %v4242 = vpack.c.bf16 %v1246, %v1246
        %v4243 = vpack.c.bf16 %v1247, %v1247
        %v4244 = vpack.c.bf16 %v1248, %v1248
        %v4245 = vpack.c.bf16 %v1249, %v1249
        %s4246 = scalar_lea.vmem [#allocation11], 3072
        %v4247 = vld [vmem:[%s4246] sm:$0xff]
        %v4248 = vld [vmem:[%s4246 + $0x8] sm:$0xff]
        %v4249 = vld [vmem:[%s4246 + $0x10] sm:$0xff]
        %v4250 = vld [vmem:[%s4246 + $0x18] sm:$0xff]
        %v4251 = vld [vmem:[%s4246 + $0x20] sm:$0xff]
        %v4252 = vld [vmem:[%s4246 + $0x28] sm:$0xff]
        %v4253 = vld [vmem:[%s4246 + $0x30] sm:$0xff]
        %v4254 = vld [vmem:[%s4246 + $0x38] sm:$0xff]
        %v4255 = vld [vmem:[%s4246 + $0x40] sm:$0xff]
        %v4256 = vld [vmem:[%s4246 + $0x48] sm:$0xff]
        %v4257 = vld [vmem:[%s4246 + $0x50] sm:$0xff]
        %v4258 = vld [vmem:[%s4246 + $0x58] sm:$0xff]
        %v4259 = vld [vmem:[%s4246 + $0x60] sm:$0xff]
        %v4260 = vld [vmem:[%s4246 + $0x68] sm:$0xff]
        %v4261 = vld [vmem:[%s4246 + $0x70] sm:$0xff]
        %v4262 = vld [vmem:[%s4246 + $0x78] sm:$0xff]
        %v4263 = vld [vmem:[%s4246 + $0x80] sm:$0xff]
        %v4264 = vld [vmem:[%s4246 + $0x88] sm:$0xff]
        %v4265 = vld [vmem:[%s4246 + $0x90] sm:$0xff]
        %v4266 = vld [vmem:[%s4246 + $0x98] sm:$0xff]
        %v4267 = vld [vmem:[%s4246 + $0xa0] sm:$0xff]
        %v4268 = vld [vmem:[%s4246 + $0xa8] sm:$0xff]
        %v4269 = vld [vmem:[%s4246 + $0xb0] sm:$0xff]
        %v4270 = vld [vmem:[%s4246 + $0xb8] sm:$0xff]
        %v4271 = vld [vmem:[%s4246 + $0xc0] sm:$0xff]
        %v4272 = vld [vmem:[%s4246 + $0xc8] sm:$0xff]
        %v4273 = vld [vmem:[%s4246 + $0xd0] sm:$0xff]
        %v4274 = vld [vmem:[%s4246 + $0xd8] sm:$0xff]
        %v4275 = vld [vmem:[%s4246 + $0xe0] sm:$0xff]
        %v4276 = vld [vmem:[%s4246 + $0xe8] sm:$0xff]
        %v4277 = vld [vmem:[%s4246 + $0xf0] sm:$0xff]
        %v4278 = vld [vmem:[%s4246 + $0xf8] sm:$0xff]
        %v4279 = vld [vmem:[%s4246 + $0x100] sm:$0xff]
        %v4280 = vld [vmem:[%s4246 + $0x108] sm:$0xff]
        %v4281 = vld [vmem:[%s4246 + $0x110] sm:$0xff]
        %v4282 = vld [vmem:[%s4246 + $0x118] sm:$0xff]
        %v4283 = vld [vmem:[%s4246 + $0x120] sm:$0xff]
        %v4284 = vld [vmem:[%s4246 + $0x128] sm:$0xff]
        %v4285 = vld [vmem:[%s4246 + $0x130] sm:$0xff]
        %v4286 = vld [vmem:[%s4246 + $0x138] sm:$0xff]
        %v4287 = vld [vmem:[%s4246 + $0x140] sm:$0xff]
        %v4288 = vld [vmem:[%s4246 + $0x148] sm:$0xff]
        %v4289 = vld [vmem:[%s4246 + $0x150] sm:$0xff]
        %v4290 = vld [vmem:[%s4246 + $0x158] sm:$0xff]
        %v4291 = vld [vmem:[%s4246 + $0x160] sm:$0xff]
        %v4292 = vld [vmem:[%s4246 + $0x168] sm:$0xff]
        %v4293 = vld [vmem:[%s4246 + $0x170] sm:$0xff]
        %v4294 = vld [vmem:[%s4246 + $0x178] sm:$0xff]
        %v4295 = vld [vmem:[%s4246 + $0x180] sm:$0xff]
        %v4296 = vld [vmem:[%s4246 + $0x188] sm:$0xff]
        %v4297 = vld [vmem:[%s4246 + $0x190] sm:$0xff]
        %v4298 = vld [vmem:[%s4246 + $0x198] sm:$0xff]
        %v4299 = vld [vmem:[%s4246 + $0x1a0] sm:$0xff]
        %v4300 = vld [vmem:[%s4246 + $0x1a8] sm:$0xff]
        %v4301 = vld [vmem:[%s4246 + $0x1b0] sm:$0xff]
        %v4302 = vld [vmem:[%s4246 + $0x1b8] sm:$0xff]
        %v4303 = vld [vmem:[%s4246 + $0x1c0] sm:$0xff]
        %v4304 = vld [vmem:[%s4246 + $0x1c8] sm:$0xff]
        %v4305 = vld [vmem:[%s4246 + $0x1d0] sm:$0xff]
        %v4306 = vld [vmem:[%s4246 + $0x1d8] sm:$0xff]
        %v4307 = vld [vmem:[%s4246 + $0x1e0] sm:$0xff]
        %v4308 = vld [vmem:[%s4246 + $0x1e8] sm:$0xff]
        %v4309 = vld [vmem:[%s4246 + $0x1f0] sm:$0xff]
        %v4310 = vld [vmem:[%s4246 + $0x1f8] sm:$0xff]
        %v4311 = vld [vmem:[%s4246 + $0x200] sm:$0xff]
        %v4312 = vld [vmem:[%s4246 + $0x208] sm:$0xff]
        %v4313 = vld [vmem:[%s4246 + $0x210] sm:$0xff]
        %v4314 = vld [vmem:[%s4246 + $0x218] sm:$0xff]
        %v4315 = vld [vmem:[%s4246 + $0x220] sm:$0xff]
        %v4316 = vld [vmem:[%s4246 + $0x228] sm:$0xff]
        %v4317 = vld [vmem:[%s4246 + $0x230] sm:$0xff]
        %v4318 = vld [vmem:[%s4246 + $0x238] sm:$0xff]
        %v4319 = vld [vmem:[%s4246 + $0x240] sm:$0xff]
        %v4320 = vld [vmem:[%s4246 + $0x248] sm:$0xff]
        %v4321 = vld [vmem:[%s4246 + $0x250] sm:$0xff]
        %v4322 = vld [vmem:[%s4246 + $0x258] sm:$0xff]
        %v4323 = vld [vmem:[%s4246 + $0x260] sm:$0xff]
        %v4324 = vld [vmem:[%s4246 + $0x268] sm:$0xff]
        %v4325 = vld [vmem:[%s4246 + $0x270] sm:$0xff]
        %v4326 = vld [vmem:[%s4246 + $0x278] sm:$0xff]
        %v4327 = vld [vmem:[%s4246 + $0x280] sm:$0xff]
        %v4328 = vld [vmem:[%s4246 + $0x288] sm:$0xff]
        %v4329 = vld [vmem:[%s4246 + $0x290] sm:$0xff]
        %v4330 = vld [vmem:[%s4246 + $0x298] sm:$0xff]
        %v4331 = vld [vmem:[%s4246 + $0x2a0] sm:$0xff]
        %v4332 = vld [vmem:[%s4246 + $0x2a8] sm:$0xff]
        %v4333 = vld [vmem:[%s4246 + $0x2b0] sm:$0xff]
        %v4334 = vld [vmem:[%s4246 + $0x2b8] sm:$0xff]
        %v4335 = vld [vmem:[%s4246 + $0x2c0] sm:$0xff]
        %v4336 = vld [vmem:[%s4246 + $0x2c8] sm:$0xff]
        %v4337 = vld [vmem:[%s4246 + $0x2d0] sm:$0xff]
        %v4338 = vld [vmem:[%s4246 + $0x2d8] sm:$0xff]
        %v4339 = vld [vmem:[%s4246 + $0x2e0] sm:$0xff]
        %v4340 = vld [vmem:[%s4246 + $0x2e8] sm:$0xff]
        %v4341 = vld [vmem:[%s4246 + $0x2f0] sm:$0xff]
        %v4342 = vld [vmem:[%s4246 + $0x2f8] sm:$0xff]
        %v4343 = vld [vmem:[%s4246 + $0x300] sm:$0xff]
        %v4344 = vld [vmem:[%s4246 + $0x308] sm:$0xff]
        %v4345 = vld [vmem:[%s4246 + $0x310] sm:$0xff]
        %v4346 = vld [vmem:[%s4246 + $0x318] sm:$0xff]
        %v4347 = vld [vmem:[%s4246 + $0x320] sm:$0xff]
        %v4348 = vld [vmem:[%s4246 + $0x328] sm:$0xff]
        %v4349 = vld [vmem:[%s4246 + $0x330] sm:$0xff]
        %v4350 = vld [vmem:[%s4246 + $0x338] sm:$0xff]
        %v4351 = vld [vmem:[%s4246 + $0x340] sm:$0xff]
        %v4352 = vld [vmem:[%s4246 + $0x348] sm:$0xff]
        %v4353 = vld [vmem:[%s4246 + $0x350] sm:$0xff]
        %v4354 = vld [vmem:[%s4246 + $0x358] sm:$0xff]
        %v4355 = vld [vmem:[%s4246 + $0x360] sm:$0xff]
        %v4356 = vld [vmem:[%s4246 + $0x368] sm:$0xff]
        %v4357 = vld [vmem:[%s4246 + $0x370] sm:$0xff]
        %v4358 = vld [vmem:[%s4246 + $0x378] sm:$0xff]
        %v4359 = vld [vmem:[%s4246 + $0x380] sm:$0xff]
        %v4360 = vld [vmem:[%s4246 + $0x388] sm:$0xff]
        %v4361 = vld [vmem:[%s4246 + $0x390] sm:$0xff]
        %v4362 = vld [vmem:[%s4246 + $0x398] sm:$0xff]
        %v4363 = vld [vmem:[%s4246 + $0x3a0] sm:$0xff]
        %v4364 = vld [vmem:[%s4246 + $0x3a8] sm:$0xff]
        %v4365 = vld [vmem:[%s4246 + $0x3b0] sm:$0xff]
        %v4366 = vld [vmem:[%s4246 + $0x3b8] sm:$0xff]
        %v4367 = vld [vmem:[%s4246 + $0x3c0] sm:$0xff]
        %v4368 = vld [vmem:[%s4246 + $0x3c8] sm:$0xff]
        %v4369 = vld [vmem:[%s4246 + $0x3d0] sm:$0xff]
        %v4370 = vld [vmem:[%s4246 + $0x3d8] sm:$0xff]
        %v4371 = vld [vmem:[%s4246 + $0x3e0] sm:$0xff]
        %v4372 = vld [vmem:[%s4246 + $0x3e8] sm:$0xff]
        %v4373 = vld [vmem:[%s4246 + $0x3f0] sm:$0xff]
        %v4374 = vld [vmem:[%s4246 + $0x3f8] sm:$0xff]
        %v4503 = vunpack.c.l.b16 %v4247
        %v4504 = vunpack.c.h.b16 %v4247
        %v4505 = vunpack.c.l.b16 %v4248
        %v4506 = vunpack.c.h.b16 %v4248
        %v4507 = vunpack.c.l.b16 %v4249
        %v4508 = vunpack.c.h.b16 %v4249
        %v4509 = vunpack.c.l.b16 %v4250
        %v4510 = vunpack.c.h.b16 %v4250
        %v4511 = vunpack.c.l.b16 %v4251
        %v4512 = vunpack.c.h.b16 %v4251
        %v4513 = vunpack.c.l.b16 %v4252
        %v4514 = vunpack.c.h.b16 %v4252
        %v4515 = vunpack.c.l.b16 %v4253
        %v4516 = vunpack.c.h.b16 %v4253
        %v4517 = vunpack.c.l.b16 %v4254
        %v4518 = vunpack.c.h.b16 %v4254
        %v4519 = vunpack.c.l.b16 %v4255
        %v4520 = vunpack.c.h.b16 %v4255
        %v4521 = vunpack.c.l.b16 %v4256
        %v4522 = vunpack.c.h.b16 %v4256
        %v4523 = vunpack.c.l.b16 %v4257
        %v4524 = vunpack.c.h.b16 %v4257
        %v4525 = vunpack.c.l.b16 %v4258
        %v4526 = vunpack.c.h.b16 %v4258
        %v4527 = vunpack.c.l.b16 %v4259
        %v4528 = vunpack.c.h.b16 %v4259
        %v4529 = vunpack.c.l.b16 %v4260
        %v4530 = vunpack.c.h.b16 %v4260
        %v4531 = vunpack.c.l.b16 %v4261
        %v4532 = vunpack.c.h.b16 %v4261
        %v4533 = vunpack.c.l.b16 %v4262
        %v4534 = vunpack.c.h.b16 %v4262
        %v4535 = vunpack.c.l.b16 %v4263
        %v4536 = vunpack.c.h.b16 %v4263
        %v4537 = vunpack.c.l.b16 %v4264
        %v4538 = vunpack.c.h.b16 %v4264
        %v4539 = vunpack.c.l.b16 %v4265
        %v4540 = vunpack.c.h.b16 %v4265
        %v4541 = vunpack.c.l.b16 %v4266
        %v4542 = vunpack.c.h.b16 %v4266
        %v4543 = vunpack.c.l.b16 %v4267
        %v4544 = vunpack.c.h.b16 %v4267
        %v4545 = vunpack.c.l.b16 %v4268
        %v4546 = vunpack.c.h.b16 %v4268
        %v4547 = vunpack.c.l.b16 %v4269
        %v4548 = vunpack.c.h.b16 %v4269
        %v4549 = vunpack.c.l.b16 %v4270
        %v4550 = vunpack.c.h.b16 %v4270
        %v4551 = vunpack.c.l.b16 %v4271
        %v4552 = vunpack.c.h.b16 %v4271
        %v4553 = vunpack.c.l.b16 %v4272
        %v4554 = vunpack.c.h.b16 %v4272
        %v4555 = vunpack.c.l.b16 %v4273
        %v4556 = vunpack.c.h.b16 %v4273
        %v4557 = vunpack.c.l.b16 %v4274
        %v4558 = vunpack.c.h.b16 %v4274
        %v4559 = vunpack.c.l.b16 %v4275
        %v4560 = vunpack.c.h.b16 %v4275
        %v4561 = vunpack.c.l.b16 %v4276
        %v4562 = vunpack.c.h.b16 %v4276
        %v4563 = vunpack.c.l.b16 %v4277
        %v4564 = vunpack.c.h.b16 %v4277
        %v4565 = vunpack.c.l.b16 %v4278
        %v4566 = vunpack.c.h.b16 %v4278
        %v4567 = vunpack.c.l.b16 %v4279
        %v4568 = vunpack.c.h.b16 %v4279
        %v4569 = vunpack.c.l.b16 %v4280
        %v4570 = vunpack.c.h.b16 %v4280
        %v4571 = vunpack.c.l.b16 %v4281
        %v4572 = vunpack.c.h.b16 %v4281
        %v4573 = vunpack.c.l.b16 %v4282
        %v4574 = vunpack.c.h.b16 %v4282
        %v4575 = vunpack.c.l.b16 %v4283
        %v4576 = vunpack.c.h.b16 %v4283
        %v4577 = vunpack.c.l.b16 %v4284
        %v4578 = vunpack.c.h.b16 %v4284
        %v4579 = vunpack.c.l.b16 %v4285
        %v4580 = vunpack.c.h.b16 %v4285
        %v4581 = vunpack.c.l.b16 %v4286
        %v4582 = vunpack.c.h.b16 %v4286
        %v4583 = vunpack.c.l.b16 %v4287
        %v4584 = vunpack.c.h.b16 %v4287
        %v4585 = vunpack.c.l.b16 %v4288
        %v4586 = vunpack.c.h.b16 %v4288
        %v4587 = vunpack.c.l.b16 %v4289
        %v4588 = vunpack.c.h.b16 %v4289
        %v4589 = vunpack.c.l.b16 %v4290
        %v4590 = vunpack.c.h.b16 %v4290
        %v4591 = vunpack.c.l.b16 %v4291
        %v4592 = vunpack.c.h.b16 %v4291
        %v4593 = vunpack.c.l.b16 %v4292
        %v4594 = vunpack.c.h.b16 %v4292
        %v4595 = vunpack.c.l.b16 %v4293
        %v4596 = vunpack.c.h.b16 %v4293
        %v4597 = vunpack.c.l.b16 %v4294
        %v4598 = vunpack.c.h.b16 %v4294
        %v4599 = vunpack.c.l.b16 %v4295
        %v4600 = vunpack.c.h.b16 %v4295
        %v4601 = vunpack.c.l.b16 %v4296
        %v4602 = vunpack.c.h.b16 %v4296
        %v4603 = vunpack.c.l.b16 %v4297
        %v4604 = vunpack.c.h.b16 %v4297
        %v4605 = vunpack.c.l.b16 %v4298
        %v4606 = vunpack.c.h.b16 %v4298
        %v4607 = vunpack.c.l.b16 %v4299
        %v4608 = vunpack.c.h.b16 %v4299
        %v4609 = vunpack.c.l.b16 %v4300
        %v4610 = vunpack.c.h.b16 %v4300
        %v4611 = vunpack.c.l.b16 %v4301
        %v4612 = vunpack.c.h.b16 %v4301
        %v4613 = vunpack.c.l.b16 %v4302
        %v4614 = vunpack.c.h.b16 %v4302
        %v4615 = vunpack.c.l.b16 %v4303
        %v4616 = vunpack.c.h.b16 %v4303
        %v4617 = vunpack.c.l.b16 %v4304
        %v4618 = vunpack.c.h.b16 %v4304
        %v4619 = vunpack.c.l.b16 %v4305
        %v4620 = vunpack.c.h.b16 %v4305
        %v4621 = vunpack.c.l.b16 %v4306
        %v4622 = vunpack.c.h.b16 %v4306
        %v4623 = vunpack.c.l.b16 %v4307
        %v4624 = vunpack.c.h.b16 %v4307
        %v4625 = vunpack.c.l.b16 %v4308
        %v4626 = vunpack.c.h.b16 %v4308
        %v4627 = vunpack.c.l.b16 %v4309
        %v4628 = vunpack.c.h.b16 %v4309
        %v4629 = vunpack.c.l.b16 %v4310
        %v4630 = vunpack.c.h.b16 %v4310
        %v4631 = vunpack.c.l.b16 %v4311
        %v4632 = vunpack.c.h.b16 %v4311
        %v4633 = vunpack.c.l.b16 %v4312
        %v4634 = vunpack.c.h.b16 %v4312
        %v4635 = vunpack.c.l.b16 %v4313
        %v4636 = vunpack.c.h.b16 %v4313
        %v4637 = vunpack.c.l.b16 %v4314
        %v4638 = vunpack.c.h.b16 %v4314
        %v4639 = vunpack.c.l.b16 %v4315
        %v4640 = vunpack.c.h.b16 %v4315
        %v4641 = vunpack.c.l.b16 %v4316
        %v4642 = vunpack.c.h.b16 %v4316
        %v4643 = vunpack.c.l.b16 %v4317
        %v4644 = vunpack.c.h.b16 %v4317
        %v4645 = vunpack.c.l.b16 %v4318
        %v4646 = vunpack.c.h.b16 %v4318
        %v4647 = vunpack.c.l.b16 %v4319
        %v4648 = vunpack.c.h.b16 %v4319
        %v4649 = vunpack.c.l.b16 %v4320
        %v4650 = vunpack.c.h.b16 %v4320
        %v4651 = vunpack.c.l.b16 %v4321
        %v4652 = vunpack.c.h.b16 %v4321
        %v4653 = vunpack.c.l.b16 %v4322
        %v4654 = vunpack.c.h.b16 %v4322
        %v4655 = vunpack.c.l.b16 %v4323
        %v4656 = vunpack.c.h.b16 %v4323
        %v4657 = vunpack.c.l.b16 %v4324
        %v4658 = vunpack.c.h.b16 %v4324
        %v4659 = vunpack.c.l.b16 %v4325
        %v4660 = vunpack.c.h.b16 %v4325
        %v4661 = vunpack.c.l.b16 %v4326
        %v4662 = vunpack.c.h.b16 %v4326
        %v4663 = vunpack.c.l.b16 %v4327
        %v4664 = vunpack.c.h.b16 %v4327
        %v4665 = vunpack.c.l.b16 %v4328
        %v4666 = vunpack.c.h.b16 %v4328
        %v4667 = vunpack.c.l.b16 %v4329
        %v4668 = vunpack.c.h.b16 %v4329
        %v4669 = vunpack.c.l.b16 %v4330
        %v4670 = vunpack.c.h.b16 %v4330
        %v4671 = vunpack.c.l.b16 %v4331
        %v4672 = vunpack.c.h.b16 %v4331
        %v4673 = vunpack.c.l.b16 %v4332
        %v4674 = vunpack.c.h.b16 %v4332
        %v4675 = vunpack.c.l.b16 %v4333
        %v4676 = vunpack.c.h.b16 %v4333
        %v4677 = vunpack.c.l.b16 %v4334
        %v4678 = vunpack.c.h.b16 %v4334
        %v4679 = vunpack.c.l.b16 %v4335
        %v4680 = vunpack.c.h.b16 %v4335
        %v4681 = vunpack.c.l.b16 %v4336
        %v4682 = vunpack.c.h.b16 %v4336
        %v4683 = vunpack.c.l.b16 %v4337
        %v4684 = vunpack.c.h.b16 %v4337
        %v4685 = vunpack.c.l.b16 %v4338
        %v4686 = vunpack.c.h.b16 %v4338
        %v4687 = vunpack.c.l.b16 %v4339
        %v4688 = vunpack.c.h.b16 %v4339
        %v4689 = vunpack.c.l.b16 %v4340
        %v4690 = vunpack.c.h.b16 %v4340
        %v4691 = vunpack.c.l.b16 %v4341
        %v4692 = vunpack.c.h.b16 %v4341
        %v4693 = vunpack.c.l.b16 %v4342
        %v4694 = vunpack.c.h.b16 %v4342
        %v4695 = vunpack.c.l.b16 %v4343
        %v4696 = vunpack.c.h.b16 %v4343
        %v4697 = vunpack.c.l.b16 %v4344
        %v4698 = vunpack.c.h.b16 %v4344
        %v4699 = vunpack.c.l.b16 %v4345
        %v4700 = vunpack.c.h.b16 %v4345
        %v4701 = vunpack.c.l.b16 %v4346
        %v4702 = vunpack.c.h.b16 %v4346
        %v4703 = vunpack.c.l.b16 %v4347
        %v4704 = vunpack.c.h.b16 %v4347
        %v4705 = vunpack.c.l.b16 %v4348
        %v4706 = vunpack.c.h.b16 %v4348
        %v4707 = vunpack.c.l.b16 %v4349
        %v4708 = vunpack.c.h.b16 %v4349
        %v4709 = vunpack.c.l.b16 %v4350
        %v4710 = vunpack.c.h.b16 %v4350
        %v4711 = vunpack.c.l.b16 %v4351
        %v4712 = vunpack.c.h.b16 %v4351
        %v4713 = vunpack.c.l.b16 %v4352
        %v4714 = vunpack.c.h.b16 %v4352
        %v4715 = vunpack.c.l.b16 %v4353
        %v4716 = vunpack.c.h.b16 %v4353
        %v4717 = vunpack.c.l.b16 %v4354
        %v4718 = vunpack.c.h.b16 %v4354
        %v4719 = vunpack.c.l.b16 %v4355
        %v4720 = vunpack.c.h.b16 %v4355
        %v4721 = vunpack.c.l.b16 %v4356
        %v4722 = vunpack.c.h.b16 %v4356
        %v4723 = vunpack.c.l.b16 %v4357
        %v4724 = vunpack.c.h.b16 %v4357
        %v4725 = vunpack.c.l.b16 %v4358
        %v4726 = vunpack.c.h.b16 %v4358
        %v4727 = vunpack.c.l.b16 %v4359
        %v4728 = vunpack.c.h.b16 %v4359
        %v4729 = vunpack.c.l.b16 %v4360
        %v4730 = vunpack.c.h.b16 %v4360
        %v4731 = vunpack.c.l.b16 %v4361
        %v4732 = vunpack.c.h.b16 %v4361
        %v4733 = vunpack.c.l.b16 %v4362
        %v4734 = vunpack.c.h.b16 %v4362
        %v4735 = vunpack.c.l.b16 %v4363
        %v4736 = vunpack.c.h.b16 %v4363
        %v4737 = vunpack.c.l.b16 %v4364
        %v4738 = vunpack.c.h.b16 %v4364
        %v4739 = vunpack.c.l.b16 %v4365
        %v4740 = vunpack.c.h.b16 %v4365
        %v4741 = vunpack.c.l.b16 %v4366
        %v4742 = vunpack.c.h.b16 %v4366
        %v4743 = vunpack.c.l.b16 %v4367
        %v4744 = vunpack.c.h.b16 %v4367
        %v4745 = vunpack.c.l.b16 %v4368
        %v4746 = vunpack.c.h.b16 %v4368
        %v4747 = vunpack.c.l.b16 %v4369
        %v4748 = vunpack.c.h.b16 %v4369
        %v4749 = vunpack.c.l.b16 %v4370
        %v4750 = vunpack.c.h.b16 %v4370
        %v4751 = vunpack.c.l.b16 %v4371
        %v4752 = vunpack.c.h.b16 %v4371
        %v4753 = vunpack.c.l.b16 %v4372
        %v4754 = vunpack.c.h.b16 %v4372
        %v4755 = vunpack.c.l.b16 %v4373
        %v4756 = vunpack.c.h.b16 %v4373
        %v4757 = vunpack.c.l.b16 %v4374
        %v4758 = vunpack.c.h.b16 %v4374
        %v4759 = vpack.c.b16 %v4507, %v4503
        %v4760 = vpack.c.b16 %v4508, %v4504
        %v4761 = vpack.c.b16 %v4509, %v4505
        %v4762 = vpack.c.b16 %v4510, %v4506
        %v4763 = vpack.c.b16 %v4515, %v4511
        %v4764 = vpack.c.b16 %v4516, %v4512
        %v4765 = vpack.c.b16 %v4517, %v4513
        %v4766 = vpack.c.b16 %v4518, %v4514
        %v4767 = vpack.c.b16 %v4523, %v4519
        %v4768 = vpack.c.b16 %v4524, %v4520
        %v4769 = vpack.c.b16 %v4525, %v4521
        %v4770 = vpack.c.b16 %v4526, %v4522
        %v4771 = vpack.c.b16 %v4531, %v4527
        %v4772 = vpack.c.b16 %v4532, %v4528
        %v4773 = vpack.c.b16 %v4533, %v4529
        %v4774 = vpack.c.b16 %v4534, %v4530
        %v4775 = vpack.c.b16 %v4539, %v4535
        %v4776 = vpack.c.b16 %v4540, %v4536
        %v4777 = vpack.c.b16 %v4541, %v4537
        %v4778 = vpack.c.b16 %v4542, %v4538
        %v4779 = vpack.c.b16 %v4547, %v4543
        %v4780 = vpack.c.b16 %v4548, %v4544
        %v4781 = vpack.c.b16 %v4549, %v4545
        %v4782 = vpack.c.b16 %v4550, %v4546
        %v4783 = vpack.c.b16 %v4555, %v4551
        %v4784 = vpack.c.b16 %v4556, %v4552
        %v4785 = vpack.c.b16 %v4557, %v4553
        %v4786 = vpack.c.b16 %v4558, %v4554
        %v4787 = vpack.c.b16 %v4563, %v4559
        %v4788 = vpack.c.b16 %v4564, %v4560
        %v4789 = vpack.c.b16 %v4565, %v4561
        %v4790 = vpack.c.b16 %v4566, %v4562
        %v4791 = vpack.c.b16 %v4571, %v4567
        %v4792 = vpack.c.b16 %v4572, %v4568
        %v4793 = vpack.c.b16 %v4573, %v4569
        %v4794 = vpack.c.b16 %v4574, %v4570
        %v4795 = vpack.c.b16 %v4579, %v4575
        %v4796 = vpack.c.b16 %v4580, %v4576
        %v4797 = vpack.c.b16 %v4581, %v4577
        %v4798 = vpack.c.b16 %v4582, %v4578
        %v4799 = vpack.c.b16 %v4587, %v4583
        %v4800 = vpack.c.b16 %v4588, %v4584
        %v4801 = vpack.c.b16 %v4589, %v4585
        %v4802 = vpack.c.b16 %v4590, %v4586
        %v4803 = vpack.c.b16 %v4595, %v4591
        %v4804 = vpack.c.b16 %v4596, %v4592
        %v4805 = vpack.c.b16 %v4597, %v4593
        %v4806 = vpack.c.b16 %v4598, %v4594
        %v4807 = vpack.c.b16 %v4603, %v4599
        %v4808 = vpack.c.b16 %v4604, %v4600
        %v4809 = vpack.c.b16 %v4605, %v4601
        %v4810 = vpack.c.b16 %v4606, %v4602
        %v4811 = vpack.c.b16 %v4611, %v4607
        %v4812 = vpack.c.b16 %v4612, %v4608
        %v4813 = vpack.c.b16 %v4613, %v4609
        %v4814 = vpack.c.b16 %v4614, %v4610
        %v4815 = vpack.c.b16 %v4619, %v4615
        %v4816 = vpack.c.b16 %v4620, %v4616
        %v4817 = vpack.c.b16 %v4621, %v4617
        %v4818 = vpack.c.b16 %v4622, %v4618
        %v4819 = vpack.c.b16 %v4627, %v4623
        %v4820 = vpack.c.b16 %v4628, %v4624
        %v4821 = vpack.c.b16 %v4629, %v4625
        %v4822 = vpack.c.b16 %v4630, %v4626
        %v4823 = vpack.c.b16 %v4635, %v4631
        %v4824 = vpack.c.b16 %v4636, %v4632
        %v4825 = vpack.c.b16 %v4637, %v4633
        %v4826 = vpack.c.b16 %v4638, %v4634
        %v4827 = vpack.c.b16 %v4643, %v4639
        %v4828 = vpack.c.b16 %v4644, %v4640
        %v4829 = vpack.c.b16 %v4645, %v4641
        %v4830 = vpack.c.b16 %v4646, %v4642
        %v4831 = vpack.c.b16 %v4651, %v4647
        %v4832 = vpack.c.b16 %v4652, %v4648
        %v4833 = vpack.c.b16 %v4653, %v4649
        %v4834 = vpack.c.b16 %v4654, %v4650
        %v4835 = vpack.c.b16 %v4659, %v4655
        %v4836 = vpack.c.b16 %v4660, %v4656
        %v4837 = vpack.c.b16 %v4661, %v4657
        %v4838 = vpack.c.b16 %v4662, %v4658
        %v4839 = vpack.c.b16 %v4667, %v4663
        %v4840 = vpack.c.b16 %v4668, %v4664
        %v4841 = vpack.c.b16 %v4669, %v4665
        %v4842 = vpack.c.b16 %v4670, %v4666
        %v4843 = vpack.c.b16 %v4675, %v4671
        %v4844 = vpack.c.b16 %v4676, %v4672
        %v4845 = vpack.c.b16 %v4677, %v4673
        %v4846 = vpack.c.b16 %v4678, %v4674
        %v4847 = vpack.c.b16 %v4683, %v4679
        %v4848 = vpack.c.b16 %v4684, %v4680
        %v4849 = vpack.c.b16 %v4685, %v4681
        %v4850 = vpack.c.b16 %v4686, %v4682
        %v4851 = vpack.c.b16 %v4691, %v4687
        %v4852 = vpack.c.b16 %v4692, %v4688
        %v4853 = vpack.c.b16 %v4693, %v4689
        %v4854 = vpack.c.b16 %v4694, %v4690
        %v4855 = vpack.c.b16 %v4699, %v4695
        %v4856 = vpack.c.b16 %v4700, %v4696
        %v4857 = vpack.c.b16 %v4701, %v4697
        %v4858 = vpack.c.b16 %v4702, %v4698
        %v4859 = vpack.c.b16 %v4707, %v4703
        %v4860 = vpack.c.b16 %v4708, %v4704
        %v4861 = vpack.c.b16 %v4709, %v4705
        %v4862 = vpack.c.b16 %v4710, %v4706
        %v4863 = vpack.c.b16 %v4715, %v4711
        %v4864 = vpack.c.b16 %v4716, %v4712
        %v4865 = vpack.c.b16 %v4717, %v4713
        %v4866 = vpack.c.b16 %v4718, %v4714
        %v4867 = vpack.c.b16 %v4723, %v4719
        %v4868 = vpack.c.b16 %v4724, %v4720
        %v4869 = vpack.c.b16 %v4725, %v4721
        %v4870 = vpack.c.b16 %v4726, %v4722
        %v4871 = vpack.c.b16 %v4731, %v4727
        %v4872 = vpack.c.b16 %v4732, %v4728
        %v4873 = vpack.c.b16 %v4733, %v4729
        %v4874 = vpack.c.b16 %v4734, %v4730
        %v4875 = vpack.c.b16 %v4739, %v4735
        %v4876 = vpack.c.b16 %v4740, %v4736
        %v4877 = vpack.c.b16 %v4741, %v4737
        %v4878 = vpack.c.b16 %v4742, %v4738
        %v4879 = vpack.c.b16 %v4747, %v4743
        %v4880 = vpack.c.b16 %v4748, %v4744
        %v4881 = vpack.c.b16 %v4749, %v4745
        %v4882 = vpack.c.b16 %v4750, %v4746
        %v4883 = vpack.c.b16 %v4755, %v4751
        %v4884 = vpack.c.b16 %v4756, %v4752
        %v4885 = vpack.c.b16 %v4757, %v4753
        %v4886 = vpack.c.b16 %v4758, %v4754
        %5015 = vmatpush.bf16.msra.mxu0 %v4787
        %5016 = vmatpush.bf16.msra.mxu0 %v4783
        %5017 = vmatpush.bf16.msra.mxu0 %v4779
        %5018 = vmatpush.bf16.msra.mxu0 %v4775
        %5019 = vmatpush.bf16.msra.mxu0 %v4771
        %5020 = vmatpush.bf16.msra.mxu0 %v4767
        %5021 = vmatpush.bf16.msra.mxu0 %v4763
        %5022 = vmatpush.bf16.msra.mxu0 %v4759
        %5023 = vmatmul.bf16.gmra.mxu0 %v4242
        %v5024 = vpop.f32.mrf.mxu0
        %v5025 = vadd.f32 0.0, %v5024
        %v5026 = vpop.f32.mrf.mxu0
        %5027 = vdwg.mxu0
        %5028 = vmatpush.bf16.msra.mxu0 %v4819
        %5029 = vmatpush.bf16.msra.mxu0 %v4815
        %5030 = vmatpush.bf16.msra.mxu0 %v4811
        %5031 = vmatpush.bf16.msra.mxu0 %v4807
        %5032 = vmatpush.bf16.msra.mxu0 %v4803
        %5033 = vmatpush.bf16.msra.mxu0 %v4799
        %5034 = vmatpush.bf16.msra.mxu0 %v4795
        %5035 = vmatpush.bf16.msra.mxu0 %v4791
        %5036 = vmatmul.bf16.gmra.mxu0 %v4243
        %v5037 = vpop.f32.mrf.mxu0
        %v5038 = vadd.f32 %v5025, %v5037
        %v5039 = vpop.f32.mrf.mxu0
        %5040 = vdwg.mxu0
        %5041 = vmatpush.bf16.msra.mxu0 %v4851
        %5042 = vmatpush.bf16.msra.mxu0 %v4847
        %5043 = vmatpush.bf16.msra.mxu0 %v4843
        %5044 = vmatpush.bf16.msra.mxu0 %v4839
        %5045 = vmatpush.bf16.msra.mxu0 %v4835
        %5046 = vmatpush.bf16.msra.mxu0 %v4831
        %5047 = vmatpush.bf16.msra.mxu0 %v4827
        %5048 = vmatpush.bf16.msra.mxu0 %v4823
        %5049 = vmatmul.bf16.gmra.mxu0 %v4244
        %v5050 = vpop.f32.mrf.mxu0
        %v5051 = vadd.f32 %v5038, %v5050
        %v5052 = vpop.f32.mrf.mxu0
        %5053 = vdwg.mxu0
        %5054 = vmatpush.bf16.msra.mxu0 %v4883
        %5055 = vmatpush.bf16.msra.mxu0 %v4879
        %5056 = vmatpush.bf16.msra.mxu0 %v4875
        %5057 = vmatpush.bf16.msra.mxu0 %v4871
        %5058 = vmatpush.bf16.msra.mxu0 %v4867
        %5059 = vmatpush.bf16.msra.mxu0 %v4863
        %5060 = vmatpush.bf16.msra.mxu0 %v4859
        %5061 = vmatpush.bf16.msra.mxu0 %v4855
        %5062 = vmatmul.bf16.gmra.mxu0 %v4245
        %v5063 = vpop.f32.mrf.mxu0
        %v5064 = vadd.f32 %v5051, %v5063
        %v5065 = vpop.f32.mrf.mxu0
        %5066 = vdwg.mxu0
        %5067 = vmatpush.bf16.msra.mxu0 %v4788
        %5068 = vmatpush.bf16.msra.mxu0 %v4784
        %5069 = vmatpush.bf16.msra.mxu0 %v4780
        %5070 = vmatpush.bf16.msra.mxu0 %v4776
        %5071 = vmatpush.bf16.msra.mxu0 %v4772
        %5072 = vmatpush.bf16.msra.mxu0 %v4768
        %5073 = vmatpush.bf16.msra.mxu0 %v4764
        %5074 = vmatpush.bf16.msra.mxu0 %v4760
        %5075 = vmatmul.bf16.gmra.mxu0 %v4242
        %v5076 = vpop.f32.mrf.mxu0
        %v5077 = vadd.f32 0.0, %v5076
        %v5078 = vpop.f32.mrf.mxu0
        %5079 = vdwg.mxu0
        %5080 = vmatpush.bf16.msra.mxu0 %v4820
        %5081 = vmatpush.bf16.msra.mxu0 %v4816
        %5082 = vmatpush.bf16.msra.mxu0 %v4812
        %5083 = vmatpush.bf16.msra.mxu0 %v4808
        %5084 = vmatpush.bf16.msra.mxu0 %v4804
        %5085 = vmatpush.bf16.msra.mxu0 %v4800
        %5086 = vmatpush.bf16.msra.mxu0 %v4796
        %5087 = vmatpush.bf16.msra.mxu0 %v4792
        %5088 = vmatmul.bf16.gmra.mxu0 %v4243
        %v5089 = vpop.f32.mrf.mxu0
        %v5090 = vadd.f32 %v5077, %v5089
        %v5091 = vpop.f32.mrf.mxu0
        %5092 = vdwg.mxu0
        %5093 = vmatpush.bf16.msra.mxu0 %v4852
        %5094 = vmatpush.bf16.msra.mxu0 %v4848
        %5095 = vmatpush.bf16.msra.mxu0 %v4844
        %5096 = vmatpush.bf16.msra.mxu0 %v4840
        %5097 = vmatpush.bf16.msra.mxu0 %v4836
        %5098 = vmatpush.bf16.msra.mxu0 %v4832
        %5099 = vmatpush.bf16.msra.mxu0 %v4828
        %5100 = vmatpush.bf16.msra.mxu0 %v4824
        %5101 = vmatmul.bf16.gmra.mxu0 %v4244
        %v5102 = vpop.f32.mrf.mxu0
        %v5103 = vadd.f32 %v5090, %v5102
        %v5104 = vpop.f32.mrf.mxu0
        %5105 = vdwg.mxu0
        %5106 = vmatpush.bf16.msra.mxu0 %v4884
        %5107 = vmatpush.bf16.msra.mxu0 %v4880
        %5108 = vmatpush.bf16.msra.mxu0 %v4876
        %5109 = vmatpush.bf16.msra.mxu0 %v4872
        %5110 = vmatpush.bf16.msra.mxu0 %v4868
        %5111 = vmatpush.bf16.msra.mxu0 %v4864
        %5112 = vmatpush.bf16.msra.mxu0 %v4860
        %5113 = vmatpush.bf16.msra.mxu0 %v4856
        %5114 = vmatmul.bf16.gmra.mxu0 %v4245
        %v5115 = vpop.f32.mrf.mxu0
        %v5116 = vadd.f32 %v5103, %v5115
        %v5117 = vpop.f32.mrf.mxu0
        %5118 = vdwg.mxu0
        %5119 = vmatpush.bf16.msra.mxu0 %v4789
        %5120 = vmatpush.bf16.msra.mxu0 %v4785
        %5121 = vmatpush.bf16.msra.mxu0 %v4781
        %5122 = vmatpush.bf16.msra.mxu0 %v4777
        %5123 = vmatpush.bf16.msra.mxu0 %v4773
        %5124 = vmatpush.bf16.msra.mxu0 %v4769
        %5125 = vmatpush.bf16.msra.mxu0 %v4765
        %5126 = vmatpush.bf16.msra.mxu0 %v4761
        %5127 = vmatmul.bf16.gmra.mxu0 %v4242
        %v5128 = vpop.f32.mrf.mxu0
        %v5129 = vadd.f32 0.0, %v5128
        %v5130 = vpop.f32.mrf.mxu0
        %5131 = vdwg.mxu0
        %5132 = vmatpush.bf16.msra.mxu0 %v4821
        %5133 = vmatpush.bf16.msra.mxu0 %v4817
        %5134 = vmatpush.bf16.msra.mxu0 %v4813
        %5135 = vmatpush.bf16.msra.mxu0 %v4809
        %5136 = vmatpush.bf16.msra.mxu0 %v4805
        %5137 = vmatpush.bf16.msra.mxu0 %v4801
        %5138 = vmatpush.bf16.msra.mxu0 %v4797
        %5139 = vmatpush.bf16.msra.mxu0 %v4793
        %5140 = vmatmul.bf16.gmra.mxu0 %v4243
        %v5141 = vpop.f32.mrf.mxu0
        %v5142 = vadd.f32 %v5129, %v5141
        %v5143 = vpop.f32.mrf.mxu0
        %5144 = vdwg.mxu0
        %5145 = vmatpush.bf16.msra.mxu0 %v4853
        %5146 = vmatpush.bf16.msra.mxu0 %v4849
        %5147 = vmatpush.bf16.msra.mxu0 %v4845
        %5148 = vmatpush.bf16.msra.mxu0 %v4841
        %5149 = vmatpush.bf16.msra.mxu0 %v4837
        %5150 = vmatpush.bf16.msra.mxu0 %v4833
        %5151 = vmatpush.bf16.msra.mxu0 %v4829
        %5152 = vmatpush.bf16.msra.mxu0 %v4825
        %5153 = vmatmul.bf16.gmra.mxu0 %v4244
        %v5154 = vpop.f32.mrf.mxu0
        %v5155 = vadd.f32 %v5142, %v5154
        %v5156 = vpop.f32.mrf.mxu0
        %5157 = vdwg.mxu0
        %5158 = vmatpush.bf16.msra.mxu0 %v4885
        %5159 = vmatpush.bf16.msra.mxu0 %v4881
        %5160 = vmatpush.bf16.msra.mxu0 %v4877
        %5161 = vmatpush.bf16.msra.mxu0 %v4873
        %5162 = vmatpush.bf16.msra.mxu0 %v4869
        %5163 = vmatpush.bf16.msra.mxu0 %v4865
        %5164 = vmatpush.bf16.msra.mxu0 %v4861
        %5165 = vmatpush.bf16.msra.mxu0 %v4857
        %5166 = vmatmul.bf16.gmra.mxu0 %v4245
        %v5167 = vpop.f32.mrf.mxu0
        %v5168 = vadd.f32 %v5155, %v5167
        %v5169 = vpop.f32.mrf.mxu0
        %5170 = vdwg.mxu0
        %5171 = vmatpush.bf16.msra.mxu0 %v4790
        %5172 = vmatpush.bf16.msra.mxu0 %v4786
        %5173 = vmatpush.bf16.msra.mxu0 %v4782
        %5174 = vmatpush.bf16.msra.mxu0 %v4778
        %5175 = vmatpush.bf16.msra.mxu0 %v4774
        %5176 = vmatpush.bf16.msra.mxu0 %v4770
        %5177 = vmatpush.bf16.msra.mxu0 %v4766
        %5178 = vmatpush.bf16.msra.mxu0 %v4762
        %5179 = vmatmul.bf16.gmra.mxu0 %v4242
        %v5180 = vpop.f32.mrf.mxu0
        %v5181 = vadd.f32 0.0, %v5180
        %v5182 = vpop.f32.mrf.mxu0
        %5183 = vdwg.mxu0
        %5184 = vmatpush.bf16.msra.mxu0 %v4822
        %5185 = vmatpush.bf16.msra.mxu0 %v4818
        %5186 = vmatpush.bf16.msra.mxu0 %v4814
        %5187 = vmatpush.bf16.msra.mxu0 %v4810
        %5188 = vmatpush.bf16.msra.mxu0 %v4806
        %5189 = vmatpush.bf16.msra.mxu0 %v4802
        %5190 = vmatpush.bf16.msra.mxu0 %v4798
        %5191 = vmatpush.bf16.msra.mxu0 %v4794
        %5192 = vmatmul.bf16.gmra.mxu0 %v4243
        %v5193 = vpop.f32.mrf.mxu0
        %v5194 = vadd.f32 %v5181, %v5193
        %v5195 = vpop.f32.mrf.mxu0
        %5196 = vdwg.mxu0
        %5197 = vmatpush.bf16.msra.mxu0 %v4854
        %5198 = vmatpush.bf16.msra.mxu0 %v4850
        %5199 = vmatpush.bf16.msra.mxu0 %v4846
        %5200 = vmatpush.bf16.msra.mxu0 %v4842
        %5201 = vmatpush.bf16.msra.mxu0 %v4838
        %5202 = vmatpush.bf16.msra.mxu0 %v4834
        %5203 = vmatpush.bf16.msra.mxu0 %v4830
        %5204 = vmatpush.bf16.msra.mxu0 %v4826
        %5205 = vmatmul.bf16.gmra.mxu0 %v4244
        %v5206 = vpop.f32.mrf.mxu0
        %v5207 = vadd.f32 %v5194, %v5206
        %v5208 = vpop.f32.mrf.mxu0
        %5209 = vdwg.mxu0
        %5210 = vmatpush.bf16.msra.mxu0 %v4886
        %5211 = vmatpush.bf16.msra.mxu0 %v4882
        %5212 = vmatpush.bf16.msra.mxu0 %v4878
        %5213 = vmatpush.bf16.msra.mxu0 %v4874
        %5214 = vmatpush.bf16.msra.mxu0 %v4870
        %5215 = vmatpush.bf16.msra.mxu0 %v4866
        %5216 = vmatpush.bf16.msra.mxu0 %v4862
        %5217 = vmatpush.bf16.msra.mxu0 %v4858
        %5218 = vmatmul.bf16.gmra.mxu0 %v4245
        %v5219 = vpop.f32.mrf.mxu0
        %v5220 = vadd.f32 %v5207, %v5219
        %v5221 = vpop.f32.mrf.mxu0
        %5222 = vdwg.mxu0
        %v5223 = vadd.f32 %v4238, %v5064
        %v5224 = vadd.f32 %v4239, %v5116
        %v5225 = vadd.f32 %v4240, %v5168
        %v5226 = vadd.f32 %v4241, %v5220
        %v5227 = vpack.c.bf16 %v1292, %v1292
        %v5228 = vpack.c.bf16 %v1293, %v1293
        %v5229 = vpack.c.bf16 %v1294, %v1294
        %v5230 = vpack.c.bf16 %v1295, %v1295
        %s5231 = scalar_lea.vmem [#allocation11], 4096
        %v5232 = vld [vmem:[%s5231] sm:$0xff]
        %v5233 = vld [vmem:[%s5231 + $0x8] sm:$0xff]
        %v5234 = vld [vmem:[%s5231 + $0x10] sm:$0xff]
        %v5235 = vld [vmem:[%s5231 + $0x18] sm:$0xff]
        %v5236 = vld [vmem:[%s5231 + $0x20] sm:$0xff]
        %v5237 = vld [vmem:[%s5231 + $0x28] sm:$0xff]
        %v5238 = vld [vmem:[%s5231 + $0x30] sm:$0xff]
        %v5239 = vld [vmem:[%s5231 + $0x38] sm:$0xff]
        %v5240 = vld [vmem:[%s5231 + $0x40] sm:$0xff]
        %v5241 = vld [vmem:[%s5231 + $0x48] sm:$0xff]
        %v5242 = vld [vmem:[%s5231 + $0x50] sm:$0xff]
        %v5243 = vld [vmem:[%s5231 + $0x58] sm:$0xff]
        %v5244 = vld [vmem:[%s5231 + $0x60] sm:$0xff]
        %v5245 = vld [vmem:[%s5231 + $0x68] sm:$0xff]
        %v5246 = vld [vmem:[%s5231 + $0x70] sm:$0xff]
        %v5247 = vld [vmem:[%s5231 + $0x78] sm:$0xff]
        %v5248 = vld [vmem:[%s5231 + $0x80] sm:$0xff]
        %v5249 = vld [vmem:[%s5231 + $0x88] sm:$0xff]
        %v5250 = vld [vmem:[%s5231 + $0x90] sm:$0xff]
        %v5251 = vld [vmem:[%s5231 + $0x98] sm:$0xff]
        %v5252 = vld [vmem:[%s5231 + $0xa0] sm:$0xff]
        %v5253 = vld [vmem:[%s5231 + $0xa8] sm:$0xff]
        %v5254 = vld [vmem:[%s5231 + $0xb0] sm:$0xff]
        %v5255 = vld [vmem:[%s5231 + $0xb8] sm:$0xff]
        %v5256 = vld [vmem:[%s5231 + $0xc0] sm:$0xff]
        %v5257 = vld [vmem:[%s5231 + $0xc8] sm:$0xff]
        %v5258 = vld [vmem:[%s5231 + $0xd0] sm:$0xff]
        %v5259 = vld [vmem:[%s5231 + $0xd8] sm:$0xff]
        %v5260 = vld [vmem:[%s5231 + $0xe0] sm:$0xff]
        %v5261 = vld [vmem:[%s5231 + $0xe8] sm:$0xff]
        %v5262 = vld [vmem:[%s5231 + $0xf0] sm:$0xff]
        %v5263 = vld [vmem:[%s5231 + $0xf8] sm:$0xff]
        %v5264 = vld [vmem:[%s5231 + $0x100] sm:$0xff]
        %v5265 = vld [vmem:[%s5231 + $0x108] sm:$0xff]
        %v5266 = vld [vmem:[%s5231 + $0x110] sm:$0xff]
        %v5267 = vld [vmem:[%s5231 + $0x118] sm:$0xff]
        %v5268 = vld [vmem:[%s5231 + $0x120] sm:$0xff]
        %v5269 = vld [vmem:[%s5231 + $0x128] sm:$0xff]
        %v5270 = vld [vmem:[%s5231 + $0x130] sm:$0xff]
        %v5271 = vld [vmem:[%s5231 + $0x138] sm:$0xff]
        %v5272 = vld [vmem:[%s5231 + $0x140] sm:$0xff]
        %v5273 = vld [vmem:[%s5231 + $0x148] sm:$0xff]
        %v5274 = vld [vmem:[%s5231 + $0x150] sm:$0xff]
        %v5275 = vld [vmem:[%s5231 + $0x158] sm:$0xff]
        %v5276 = vld [vmem:[%s5231 + $0x160] sm:$0xff]
        %v5277 = vld [vmem:[%s5231 + $0x168] sm:$0xff]
        %v5278 = vld [vmem:[%s5231 + $0x170] sm:$0xff]
        %v5279 = vld [vmem:[%s5231 + $0x178] sm:$0xff]
        %v5280 = vld [vmem:[%s5231 + $0x180] sm:$0xff]
        %v5281 = vld [vmem:[%s5231 + $0x188] sm:$0xff]
        %v5282 = vld [vmem:[%s5231 + $0x190] sm:$0xff]
        %v5283 = vld [vmem:[%s5231 + $0x198] sm:$0xff]
        %v5284 = vld [vmem:[%s5231 + $0x1a0] sm:$0xff]
        %v5285 = vld [vmem:[%s5231 + $0x1a8] sm:$0xff]
        %v5286 = vld [vmem:[%s5231 + $0x1b0] sm:$0xff]
        %v5287 = vld [vmem:[%s5231 + $0x1b8] sm:$0xff]
        %v5288 = vld [vmem:[%s5231 + $0x1c0] sm:$0xff]
        %v5289 = vld [vmem:[%s5231 + $0x1c8] sm:$0xff]
        %v5290 = vld [vmem:[%s5231 + $0x1d0] sm:$0xff]
        %v5291 = vld [vmem:[%s5231 + $0x1d8] sm:$0xff]
        %v5292 = vld [vmem:[%s5231 + $0x1e0] sm:$0xff]
        %v5293 = vld [vmem:[%s5231 + $0x1e8] sm:$0xff]
        %v5294 = vld [vmem:[%s5231 + $0x1f0] sm:$0xff]
        %v5295 = vld [vmem:[%s5231 + $0x1f8] sm:$0xff]
        %v5296 = vld [vmem:[%s5231 + $0x200] sm:$0xff]
        %v5297 = vld [vmem:[%s5231 + $0x208] sm:$0xff]
        %v5298 = vld [vmem:[%s5231 + $0x210] sm:$0xff]
        %v5299 = vld [vmem:[%s5231 + $0x218] sm:$0xff]
        %v5300 = vld [vmem:[%s5231 + $0x220] sm:$0xff]
        %v5301 = vld [vmem:[%s5231 + $0x228] sm:$0xff]
        %v5302 = vld [vmem:[%s5231 + $0x230] sm:$0xff]
        %v5303 = vld [vmem:[%s5231 + $0x238] sm:$0xff]
        %v5304 = vld [vmem:[%s5231 + $0x240] sm:$0xff]
        %v5305 = vld [vmem:[%s5231 + $0x248] sm:$0xff]
        %v5306 = vld [vmem:[%s5231 + $0x250] sm:$0xff]
        %v5307 = vld [vmem:[%s5231 + $0x258] sm:$0xff]
        %v5308 = vld [vmem:[%s5231 + $0x260] sm:$0xff]
        %v5309 = vld [vmem:[%s5231 + $0x268] sm:$0xff]
        %v5310 = vld [vmem:[%s5231 + $0x270] sm:$0xff]
        %v5311 = vld [vmem:[%s5231 + $0x278] sm:$0xff]
        %v5312 = vld [vmem:[%s5231 + $0x280] sm:$0xff]
        %v5313 = vld [vmem:[%s5231 + $0x288] sm:$0xff]
        %v5314 = vld [vmem:[%s5231 + $0x290] sm:$0xff]
        %v5315 = vld [vmem:[%s5231 + $0x298] sm:$0xff]
        %v5316 = vld [vmem:[%s5231 + $0x2a0] sm:$0xff]
        %v5317 = vld [vmem:[%s5231 + $0x2a8] sm:$0xff]
        %v5318 = vld [vmem:[%s5231 + $0x2b0] sm:$0xff]
        %v5319 = vld [vmem:[%s5231 + $0x2b8] sm:$0xff]
        %v5320 = vld [vmem:[%s5231 + $0x2c0] sm:$0xff]
        %v5321 = vld [vmem:[%s5231 + $0x2c8] sm:$0xff]
        %v5322 = vld [vmem:[%s5231 + $0x2d0] sm:$0xff]
        %v5323 = vld [vmem:[%s5231 + $0x2d8] sm:$0xff]
        %v5324 = vld [vmem:[%s5231 + $0x2e0] sm:$0xff]
        %v5325 = vld [vmem:[%s5231 + $0x2e8] sm:$0xff]
        %v5326 = vld [vmem:[%s5231 + $0x2f0] sm:$0xff]
        %v5327 = vld [vmem:[%s5231 + $0x2f8] sm:$0xff]
        %v5328 = vld [vmem:[%s5231 + $0x300] sm:$0xff]
        %v5329 = vld [vmem:[%s5231 + $0x308] sm:$0xff]
        %v5330 = vld [vmem:[%s5231 + $0x310] sm:$0xff]
        %v5331 = vld [vmem:[%s5231 + $0x318] sm:$0xff]
        %v5332 = vld [vmem:[%s5231 + $0x320] sm:$0xff]
        %v5333 = vld [vmem:[%s5231 + $0x328] sm:$0xff]
        %v5334 = vld [vmem:[%s5231 + $0x330] sm:$0xff]
        %v5335 = vld [vmem:[%s5231 + $0x338] sm:$0xff]
        %v5336 = vld [vmem:[%s5231 + $0x340] sm:$0xff]
        %v5337 = vld [vmem:[%s5231 + $0x348] sm:$0xff]
        %v5338 = vld [vmem:[%s5231 + $0x350] sm:$0xff]
        %v5339 = vld [vmem:[%s5231 + $0x358] sm:$0xff]
        %v5340 = vld [vmem:[%s5231 + $0x360] sm:$0xff]
        %v5341 = vld [vmem:[%s5231 + $0x368] sm:$0xff]
        %v5342 = vld [vmem:[%s5231 + $0x370] sm:$0xff]
        %v5343 = vld [vmem:[%s5231 + $0x378] sm:$0xff]
        %v5344 = vld [vmem:[%s5231 + $0x380] sm:$0xff]
        %v5345 = vld [vmem:[%s5231 + $0x388] sm:$0xff]
        %v5346 = vld [vmem:[%s5231 + $0x390] sm:$0xff]
        %v5347 = vld [vmem:[%s5231 + $0x398] sm:$0xff]
        %v5348 = vld [vmem:[%s5231 + $0x3a0] sm:$0xff]
        %v5349 = vld [vmem:[%s5231 + $0x3a8] sm:$0xff]
        %v5350 = vld [vmem:[%s5231 + $0x3b0] sm:$0xff]
        %v5351 = vld [vmem:[%s5231 + $0x3b8] sm:$0xff]
        %v5352 = vld [vmem:[%s5231 + $0x3c0] sm:$0xff]
        %v5353 = vld [vmem:[%s5231 + $0x3c8] sm:$0xff]
        %v5354 = vld [vmem:[%s5231 + $0x3d0] sm:$0xff]
        %v5355 = vld [vmem:[%s5231 + $0x3d8] sm:$0xff]
        %v5356 = vld [vmem:[%s5231 + $0x3e0] sm:$0xff]
        %v5357 = vld [vmem:[%s5231 + $0x3e8] sm:$0xff]
        %v5358 = vld [vmem:[%s5231 + $0x3f0] sm:$0xff]
        %v5359 = vld [vmem:[%s5231 + $0x3f8] sm:$0xff]
        %v5488 = vunpack.c.l.b16 %v5232
        %v5489 = vunpack.c.h.b16 %v5232
        %v5490 = vunpack.c.l.b16 %v5233
        %v5491 = vunpack.c.h.b16 %v5233
        %v5492 = vunpack.c.l.b16 %v5234
        %v5493 = vunpack.c.h.b16 %v5234
        %v5494 = vunpack.c.l.b16 %v5235
        %v5495 = vunpack.c.h.b16 %v5235
        %v5496 = vunpack.c.l.b16 %v5236
        %v5497 = vunpack.c.h.b16 %v5236
        %v5498 = vunpack.c.l.b16 %v5237
        %v5499 = vunpack.c.h.b16 %v5237
        %v5500 = vunpack.c.l.b16 %v5238
        %v5501 = vunpack.c.h.b16 %v5238
        %v5502 = vunpack.c.l.b16 %v5239
        %v5503 = vunpack.c.h.b16 %v5239
        %v5504 = vunpack.c.l.b16 %v5240
        %v5505 = vunpack.c.h.b16 %v5240
        %v5506 = vunpack.c.l.b16 %v5241
        %v5507 = vunpack.c.h.b16 %v5241
        %v5508 = vunpack.c.l.b16 %v5242
        %v5509 = vunpack.c.h.b16 %v5242
        %v5510 = vunpack.c.l.b16 %v5243
        %v5511 = vunpack.c.h.b16 %v5243
        %v5512 = vunpack.c.l.b16 %v5244
        %v5513 = vunpack.c.h.b16 %v5244
        %v5514 = vunpack.c.l.b16 %v5245
        %v5515 = vunpack.c.h.b16 %v5245
        %v5516 = vunpack.c.l.b16 %v5246
        %v5517 = vunpack.c.h.b16 %v5246
        %v5518 = vunpack.c.l.b16 %v5247
        %v5519 = vunpack.c.h.b16 %v5247
        %v5520 = vunpack.c.l.b16 %v5248
        %v5521 = vunpack.c.h.b16 %v5248
        %v5522 = vunpack.c.l.b16 %v5249
        %v5523 = vunpack.c.h.b16 %v5249
        %v5524 = vunpack.c.l.b16 %v5250
        %v5525 = vunpack.c.h.b16 %v5250
        %v5526 = vunpack.c.l.b16 %v5251
        %v5527 = vunpack.c.h.b16 %v5251
        %v5528 = vunpack.c.l.b16 %v5252
        %v5529 = vunpack.c.h.b16 %v5252
        %v5530 = vunpack.c.l.b16 %v5253
        %v5531 = vunpack.c.h.b16 %v5253
        %v5532 = vunpack.c.l.b16 %v5254
        %v5533 = vunpack.c.h.b16 %v5254
        %v5534 = vunpack.c.l.b16 %v5255
        %v5535 = vunpack.c.h.b16 %v5255
        %v5536 = vunpack.c.l.b16 %v5256
        %v5537 = vunpack.c.h.b16 %v5256
        %v5538 = vunpack.c.l.b16 %v5257
        %v5539 = vunpack.c.h.b16 %v5257
        %v5540 = vunpack.c.l.b16 %v5258
        %v5541 = vunpack.c.h.b16 %v5258
        %v5542 = vunpack.c.l.b16 %v5259
        %v5543 = vunpack.c.h.b16 %v5259
        %v5544 = vunpack.c.l.b16 %v5260
        %v5545 = vunpack.c.h.b16 %v5260
        %v5546 = vunpack.c.l.b16 %v5261
        %v5547 = vunpack.c.h.b16 %v5261
        %v5548 = vunpack.c.l.b16 %v5262
        %v5549 = vunpack.c.h.b16 %v5262
        %v5550 = vunpack.c.l.b16 %v5263
        %v5551 = vunpack.c.h.b16 %v5263
        %v5552 = vunpack.c.l.b16 %v5264
        %v5553 = vunpack.c.h.b16 %v5264
        %v5554 = vunpack.c.l.b16 %v5265
        %v5555 = vunpack.c.h.b16 %v5265
        %v5556 = vunpack.c.l.b16 %v5266
        %v5557 = vunpack.c.h.b16 %v5266
        %v5558 = vunpack.c.l.b16 %v5267
        %v5559 = vunpack.c.h.b16 %v5267
        %v5560 = vunpack.c.l.b16 %v5268
        %v5561 = vunpack.c.h.b16 %v5268
        %v5562 = vunpack.c.l.b16 %v5269
        %v5563 = vunpack.c.h.b16 %v5269
        %v5564 = vunpack.c.l.b16 %v5270
        %v5565 = vunpack.c.h.b16 %v5270
        %v5566 = vunpack.c.l.b16 %v5271
        %v5567 = vunpack.c.h.b16 %v5271
        %v5568 = vunpack.c.l.b16 %v5272
        %v5569 = vunpack.c.h.b16 %v5272
        %v5570 = vunpack.c.l.b16 %v5273
        %v5571 = vunpack.c.h.b16 %v5273
        %v5572 = vunpack.c.l.b16 %v5274
        %v5573 = vunpack.c.h.b16 %v5274
        %v5574 = vunpack.c.l.b16 %v5275
        %v5575 = vunpack.c.h.b16 %v5275
        %v5576 = vunpack.c.l.b16 %v5276
        %v5577 = vunpack.c.h.b16 %v5276
        %v5578 = vunpack.c.l.b16 %v5277
        %v5579 = vunpack.c.h.b16 %v5277
        %v5580 = vunpack.c.l.b16 %v5278
        %v5581 = vunpack.c.h.b16 %v5278
        %v5582 = vunpack.c.l.b16 %v5279
        %v5583 = vunpack.c.h.b16 %v5279
        %v5584 = vunpack.c.l.b16 %v5280
        %v5585 = vunpack.c.h.b16 %v5280
        %v5586 = vunpack.c.l.b16 %v5281
        %v5587 = vunpack.c.h.b16 %v5281
        %v5588 = vunpack.c.l.b16 %v5282
        %v5589 = vunpack.c.h.b16 %v5282
        %v5590 = vunpack.c.l.b16 %v5283
        %v5591 = vunpack.c.h.b16 %v5283
        %v5592 = vunpack.c.l.b16 %v5284
        %v5593 = vunpack.c.h.b16 %v5284
        %v5594 = vunpack.c.l.b16 %v5285
        %v5595 = vunpack.c.h.b16 %v5285
        %v5596 = vunpack.c.l.b16 %v5286
        %v5597 = vunpack.c.h.b16 %v5286
        %v5598 = vunpack.c.l.b16 %v5287
        %v5599 = vunpack.c.h.b16 %v5287
        %v5600 = vunpack.c.l.b16 %v5288
        %v5601 = vunpack.c.h.b16 %v5288
        %v5602 = vunpack.c.l.b16 %v5289
        %v5603 = vunpack.c.h.b16 %v5289
        %v5604 = vunpack.c.l.b16 %v5290
        %v5605 = vunpack.c.h.b16 %v5290
        %v5606 = vunpack.c.l.b16 %v5291
        %v5607 = vunpack.c.h.b16 %v5291
        %v5608 = vunpack.c.l.b16 %v5292
        %v5609 = vunpack.c.h.b16 %v5292
        %v5610 = vunpack.c.l.b16 %v5293
        %v5611 = vunpack.c.h.b16 %v5293
        %v5612 = vunpack.c.l.b16 %v5294
        %v5613 = vunpack.c.h.b16 %v5294
        %v5614 = vunpack.c.l.b16 %v5295
        %v5615 = vunpack.c.h.b16 %v5295
        %v5616 = vunpack.c.l.b16 %v5296
        %v5617 = vunpack.c.h.b16 %v5296
        %v5618 = vunpack.c.l.b16 %v5297
        %v5619 = vunpack.c.h.b16 %v5297
        %v5620 = vunpack.c.l.b16 %v5298
        %v5621 = vunpack.c.h.b16 %v5298
        %v5622 = vunpack.c.l.b16 %v5299
        %v5623 = vunpack.c.h.b16 %v5299
        %v5624 = vunpack.c.l.b16 %v5300
        %v5625 = vunpack.c.h.b16 %v5300
        %v5626 = vunpack.c.l.b16 %v5301
        %v5627 = vunpack.c.h.b16 %v5301
        %v5628 = vunpack.c.l.b16 %v5302
        %v5629 = vunpack.c.h.b16 %v5302
        %v5630 = vunpack.c.l.b16 %v5303
        %v5631 = vunpack.c.h.b16 %v5303
        %v5632 = vunpack.c.l.b16 %v5304
        %v5633 = vunpack.c.h.b16 %v5304
        %v5634 = vunpack.c.l.b16 %v5305
        %v5635 = vunpack.c.h.b16 %v5305
        %v5636 = vunpack.c.l.b16 %v5306
        %v5637 = vunpack.c.h.b16 %v5306
        %v5638 = vunpack.c.l.b16 %v5307
        %v5639 = vunpack.c.h.b16 %v5307
        %v5640 = vunpack.c.l.b16 %v5308
        %v5641 = vunpack.c.h.b16 %v5308
        %v5642 = vunpack.c.l.b16 %v5309
        %v5643 = vunpack.c.h.b16 %v5309
        %v5644 = vunpack.c.l.b16 %v5310
        %v5645 = vunpack.c.h.b16 %v5310
        %v5646 = vunpack.c.l.b16 %v5311
        %v5647 = vunpack.c.h.b16 %v5311
        %v5648 = vunpack.c.l.b16 %v5312
        %v5649 = vunpack.c.h.b16 %v5312
        %v5650 = vunpack.c.l.b16 %v5313
        %v5651 = vunpack.c.h.b16 %v5313
        %v5652 = vunpack.c.l.b16 %v5314
        %v5653 = vunpack.c.h.b16 %v5314
        %v5654 = vunpack.c.l.b16 %v5315
        %v5655 = vunpack.c.h.b16 %v5315
        %v5656 = vunpack.c.l.b16 %v5316
        %v5657 = vunpack.c.h.b16 %v5316
        %v5658 = vunpack.c.l.b16 %v5317
        %v5659 = vunpack.c.h.b16 %v5317
        %v5660 = vunpack.c.l.b16 %v5318
        %v5661 = vunpack.c.h.b16 %v5318
        %v5662 = vunpack.c.l.b16 %v5319
        %v5663 = vunpack.c.h.b16 %v5319
        %v5664 = vunpack.c.l.b16 %v5320
        %v5665 = vunpack.c.h.b16 %v5320
        %v5666 = vunpack.c.l.b16 %v5321
        %v5667 = vunpack.c.h.b16 %v5321
        %v5668 = vunpack.c.l.b16 %v5322
        %v5669 = vunpack.c.h.b16 %v5322
        %v5670 = vunpack.c.l.b16 %v5323
        %v5671 = vunpack.c.h.b16 %v5323
        %v5672 = vunpack.c.l.b16 %v5324
        %v5673 = vunpack.c.h.b16 %v5324
        %v5674 = vunpack.c.l.b16 %v5325
        %v5675 = vunpack.c.h.b16 %v5325
        %v5676 = vunpack.c.l.b16 %v5326
        %v5677 = vunpack.c.h.b16 %v5326
        %v5678 = vunpack.c.l.b16 %v5327
        %v5679 = vunpack.c.h.b16 %v5327
        %v5680 = vunpack.c.l.b16 %v5328
        %v5681 = vunpack.c.h.b16 %v5328
        %v5682 = vunpack.c.l.b16 %v5329
        %v5683 = vunpack.c.h.b16 %v5329
        %v5684 = vunpack.c.l.b16 %v5330
        %v5685 = vunpack.c.h.b16 %v5330
        %v5686 = vunpack.c.l.b16 %v5331
        %v5687 = vunpack.c.h.b16 %v5331
        %v5688 = vunpack.c.l.b16 %v5332
        %v5689 = vunpack.c.h.b16 %v5332
        %v5690 = vunpack.c.l.b16 %v5333
        %v5691 = vunpack.c.h.b16 %v5333
        %v5692 = vunpack.c.l.b16 %v5334
        %v5693 = vunpack.c.h.b16 %v5334
        %v5694 = vunpack.c.l.b16 %v5335
        %v5695 = vunpack.c.h.b16 %v5335
        %v5696 = vunpack.c.l.b16 %v5336
        %v5697 = vunpack.c.h.b16 %v5336
        %v5698 = vunpack.c.l.b16 %v5337
        %v5699 = vunpack.c.h.b16 %v5337
        %v5700 = vunpack.c.l.b16 %v5338
        %v5701 = vunpack.c.h.b16 %v5338
        %v5702 = vunpack.c.l.b16 %v5339
        %v5703 = vunpack.c.h.b16 %v5339
        %v5704 = vunpack.c.l.b16 %v5340
        %v5705 = vunpack.c.h.b16 %v5340
        %v5706 = vunpack.c.l.b16 %v5341
        %v5707 = vunpack.c.h.b16 %v5341
        %v5708 = vunpack.c.l.b16 %v5342
        %v5709 = vunpack.c.h.b16 %v5342
        %v5710 = vunpack.c.l.b16 %v5343
        %v5711 = vunpack.c.h.b16 %v5343
        %v5712 = vunpack.c.l.b16 %v5344
        %v5713 = vunpack.c.h.b16 %v5344
        %v5714 = vunpack.c.l.b16 %v5345
        %v5715 = vunpack.c.h.b16 %v5345
        %v5716 = vunpack.c.l.b16 %v5346
        %v5717 = vunpack.c.h.b16 %v5346
        %v5718 = vunpack.c.l.b16 %v5347
        %v5719 = vunpack.c.h.b16 %v5347
        %v5720 = vunpack.c.l.b16 %v5348
        %v5721 = vunpack.c.h.b16 %v5348
        %v5722 = vunpack.c.l.b16 %v5349
        %v5723 = vunpack.c.h.b16 %v5349
        %v5724 = vunpack.c.l.b16 %v5350
        %v5725 = vunpack.c.h.b16 %v5350
        %v5726 = vunpack.c.l.b16 %v5351
        %v5727 = vunpack.c.h.b16 %v5351
        %v5728 = vunpack.c.l.b16 %v5352
        %v5729 = vunpack.c.h.b16 %v5352
        %v5730 = vunpack.c.l.b16 %v5353
        %v5731 = vunpack.c.h.b16 %v5353
        %v5732 = vunpack.c.l.b16 %v5354
        %v5733 = vunpack.c.h.b16 %v5354
        %v5734 = vunpack.c.l.b16 %v5355
        %v5735 = vunpack.c.h.b16 %v5355
        %v5736 = vunpack.c.l.b16 %v5356
        %v5737 = vunpack.c.h.b16 %v5356
        %v5738 = vunpack.c.l.b16 %v5357
        %v5739 = vunpack.c.h.b16 %v5357
        %v5740 = vunpack.c.l.b16 %v5358
        %v5741 = vunpack.c.h.b16 %v5358
        %v5742 = vunpack.c.l.b16 %v5359
        %v5743 = vunpack.c.h.b16 %v5359
        %v5744 = vpack.c.b16 %v5492, %v5488
        %v5745 = vpack.c.b16 %v5493, %v5489
        %v5746 = vpack.c.b16 %v5494, %v5490
        %v5747 = vpack.c.b16 %v5495, %v5491
        %v5748 = vpack.c.b16 %v5500, %v5496
        %v5749 = vpack.c.b16 %v5501, %v5497
        %v5750 = vpack.c.b16 %v5502, %v5498
        %v5751 = vpack.c.b16 %v5503, %v5499
        %v5752 = vpack.c.b16 %v5508, %v5504
        %v5753 = vpack.c.b16 %v5509, %v5505
        %v5754 = vpack.c.b16 %v5510, %v5506
        %v5755 = vpack.c.b16 %v5511, %v5507
        %v5756 = vpack.c.b16 %v5516, %v5512
        %v5757 = vpack.c.b16 %v5517, %v5513
        %v5758 = vpack.c.b16 %v5518, %v5514
        %v5759 = vpack.c.b16 %v5519, %v5515
        %v5760 = vpack.c.b16 %v5524, %v5520
        %v5761 = vpack.c.b16 %v5525, %v5521
        %v5762 = vpack.c.b16 %v5526, %v5522
        %v5763 = vpack.c.b16 %v5527, %v5523
        %v5764 = vpack.c.b16 %v5532, %v5528
        %v5765 = vpack.c.b16 %v5533, %v5529
        %v5766 = vpack.c.b16 %v5534, %v5530
        %v5767 = vpack.c.b16 %v5535, %v5531
        %v5768 = vpack.c.b16 %v5540, %v5536
        %v5769 = vpack.c.b16 %v5541, %v5537
        %v5770 = vpack.c.b16 %v5542, %v5538
        %v5771 = vpack.c.b16 %v5543, %v5539
        %v5772 = vpack.c.b16 %v5548, %v5544
        %v5773 = vpack.c.b16 %v5549, %v5545
        %v5774 = vpack.c.b16 %v5550, %v5546
        %v5775 = vpack.c.b16 %v5551, %v5547
        %v5776 = vpack.c.b16 %v5556, %v5552
        %v5777 = vpack.c.b16 %v5557, %v5553
        %v5778 = vpack.c.b16 %v5558, %v5554
        %v5779 = vpack.c.b16 %v5559, %v5555
        %v5780 = vpack.c.b16 %v5564, %v5560
        %v5781 = vpack.c.b16 %v5565, %v5561
        %v5782 = vpack.c.b16 %v5566, %v5562
        %v5783 = vpack.c.b16 %v5567, %v5563
        %v5784 = vpack.c.b16 %v5572, %v5568
        %v5785 = vpack.c.b16 %v5573, %v5569
        %v5786 = vpack.c.b16 %v5574, %v5570
        %v5787 = vpack.c.b16 %v5575, %v5571
        %v5788 = vpack.c.b16 %v5580, %v5576
        %v5789 = vpack.c.b16 %v5581, %v5577
        %v5790 = vpack.c.b16 %v5582, %v5578
        %v5791 = vpack.c.b16 %v5583, %v5579
        %v5792 = vpack.c.b16 %v5588, %v5584
        %v5793 = vpack.c.b16 %v5589, %v5585
        %v5794 = vpack.c.b16 %v5590, %v5586
        %v5795 = vpack.c.b16 %v5591, %v5587
        %v5796 = vpack.c.b16 %v5596, %v5592
        %v5797 = vpack.c.b16 %v5597, %v5593
        %v5798 = vpack.c.b16 %v5598, %v5594
        %v5799 = vpack.c.b16 %v5599, %v5595
        %v5800 = vpack.c.b16 %v5604, %v5600
        %v5801 = vpack.c.b16 %v5605, %v5601
        %v5802 = vpack.c.b16 %v5606, %v5602
        %v5803 = vpack.c.b16 %v5607, %v5603
        %v5804 = vpack.c.b16 %v5612, %v5608
        %v5805 = vpack.c.b16 %v5613, %v5609
        %v5806 = vpack.c.b16 %v5614, %v5610
        %v5807 = vpack.c.b16 %v5615, %v5611
        %v5808 = vpack.c.b16 %v5620, %v5616
        %v5809 = vpack.c.b16 %v5621, %v5617
        %v5810 = vpack.c.b16 %v5622, %v5618
        %v5811 = vpack.c.b16 %v5623, %v5619
        %v5812 = vpack.c.b16 %v5628, %v5624
        %v5813 = vpack.c.b16 %v5629, %v5625
        %v5814 = vpack.c.b16 %v5630, %v5626
        %v5815 = vpack.c.b16 %v5631, %v5627
        %v5816 = vpack.c.b16 %v5636, %v5632
        %v5817 = vpack.c.b16 %v5637, %v5633
        %v5818 = vpack.c.b16 %v5638, %v5634
        %v5819 = vpack.c.b16 %v5639, %v5635
        %v5820 = vpack.c.b16 %v5644, %v5640
        %v5821 = vpack.c.b16 %v5645, %v5641
        %v5822 = vpack.c.b16 %v5646, %v5642
        %v5823 = vpack.c.b16 %v5647, %v5643
        %v5824 = vpack.c.b16 %v5652, %v5648
        %v5825 = vpack.c.b16 %v5653, %v5649
        %v5826 = vpack.c.b16 %v5654, %v5650
        %v5827 = vpack.c.b16 %v5655, %v5651
        %v5828 = vpack.c.b16 %v5660, %v5656
        %v5829 = vpack.c.b16 %v5661, %v5657
        %v5830 = vpack.c.b16 %v5662, %v5658
        %v5831 = vpack.c.b16 %v5663, %v5659
        %v5832 = vpack.c.b16 %v5668, %v5664
        %v5833 = vpack.c.b16 %v5669, %v5665
        %v5834 = vpack.c.b16 %v5670, %v5666
        %v5835 = vpack.c.b16 %v5671, %v5667
        %v5836 = vpack.c.b16 %v5676, %v5672
        %v5837 = vpack.c.b16 %v5677, %v5673
        %v5838 = vpack.c.b16 %v5678, %v5674
        %v5839 = vpack.c.b16 %v5679, %v5675
        %v5840 = vpack.c.b16 %v5684, %v5680
        %v5841 = vpack.c.b16 %v5685, %v5681
        %v5842 = vpack.c.b16 %v5686, %v5682
        %v5843 = vpack.c.b16 %v5687, %v5683
        %v5844 = vpack.c.b16 %v5692, %v5688
        %v5845 = vpack.c.b16 %v5693, %v5689
        %v5846 = vpack.c.b16 %v5694, %v5690
        %v5847 = vpack.c.b16 %v5695, %v5691
        %v5848 = vpack.c.b16 %v5700, %v5696
        %v5849 = vpack.c.b16 %v5701, %v5697
        %v5850 = vpack.c.b16 %v5702, %v5698
        %v5851 = vpack.c.b16 %v5703, %v5699
        %v5852 = vpack.c.b16 %v5708, %v5704
        %v5853 = vpack.c.b16 %v5709, %v5705
        %v5854 = vpack.c.b16 %v5710, %v5706
        %v5855 = vpack.c.b16 %v5711, %v5707
        %v5856 = vpack.c.b16 %v5716, %v5712
        %v5857 = vpack.c.b16 %v5717, %v5713
        %v5858 = vpack.c.b16 %v5718, %v5714
        %v5859 = vpack.c.b16 %v5719, %v5715
        %v5860 = vpack.c.b16 %v5724, %v5720
        %v5861 = vpack.c.b16 %v5725, %v5721
        %v5862 = vpack.c.b16 %v5726, %v5722
        %v5863 = vpack.c.b16 %v5727, %v5723
        %v5864 = vpack.c.b16 %v5732, %v5728
        %v5865 = vpack.c.b16 %v5733, %v5729
        %v5866 = vpack.c.b16 %v5734, %v5730
        %v5867 = vpack.c.b16 %v5735, %v5731
        %v5868 = vpack.c.b16 %v5740, %v5736
        %v5869 = vpack.c.b16 %v5741, %v5737
        %v5870 = vpack.c.b16 %v5742, %v5738
        %v5871 = vpack.c.b16 %v5743, %v5739
        %6000 = vmatpush.bf16.msra.mxu0 %v5772
        %6001 = vmatpush.bf16.msra.mxu0 %v5768
        %6002 = vmatpush.bf16.msra.mxu0 %v5764
        %6003 = vmatpush.bf16.msra.mxu0 %v5760
        %6004 = vmatpush.bf16.msra.mxu0 %v5756
        %6005 = vmatpush.bf16.msra.mxu0 %v5752
        %6006 = vmatpush.bf16.msra.mxu0 %v5748
        %6007 = vmatpush.bf16.msra.mxu0 %v5744
        %6008 = vmatmul.bf16.gmra.mxu0 %v5227
        %v6009 = vpop.f32.mrf.mxu0
        %v6010 = vadd.f32 0.0, %v6009
        %v6011 = vpop.f32.mrf.mxu0
        %6012 = vdwg.mxu0
        %6013 = vmatpush.bf16.msra.mxu0 %v5804
        %6014 = vmatpush.bf16.msra.mxu0 %v5800
        %6015 = vmatpush.bf16.msra.mxu0 %v5796
        %6016 = vmatpush.bf16.msra.mxu0 %v5792
        %6017 = vmatpush.bf16.msra.mxu0 %v5788
        %6018 = vmatpush.bf16.msra.mxu0 %v5784
        %6019 = vmatpush.bf16.msra.mxu0 %v5780
        %6020 = vmatpush.bf16.msra.mxu0 %v5776
        %6021 = vmatmul.bf16.gmra.mxu0 %v5228
        %v6022 = vpop.f32.mrf.mxu0
        %v6023 = vadd.f32 %v6010, %v6022
        %v6024 = vpop.f32.mrf.mxu0
        %6025 = vdwg.mxu0
        %6026 = vmatpush.bf16.msra.mxu0 %v5836
        %6027 = vmatpush.bf16.msra.mxu0 %v5832
        %6028 = vmatpush.bf16.msra.mxu0 %v5828
        %6029 = vmatpush.bf16.msra.mxu0 %v5824
        %6030 = vmatpush.bf16.msra.mxu0 %v5820
        %6031 = vmatpush.bf16.msra.mxu0 %v5816
        %6032 = vmatpush.bf16.msra.mxu0 %v5812
        %6033 = vmatpush.bf16.msra.mxu0 %v5808
        %6034 = vmatmul.bf16.gmra.mxu0 %v5229
        %v6035 = vpop.f32.mrf.mxu0
        %v6036 = vadd.f32 %v6023, %v6035
        %v6037 = vpop.f32.mrf.mxu0
        %6038 = vdwg.mxu0
        %6039 = vmatpush.bf16.msra.mxu0 %v5868
        %6040 = vmatpush.bf16.msra.mxu0 %v5864
        %6041 = vmatpush.bf16.msra.mxu0 %v5860
        %6042 = vmatpush.bf16.msra.mxu0 %v5856
        %6043 = vmatpush.bf16.msra.mxu0 %v5852
        %6044 = vmatpush.bf16.msra.mxu0 %v5848
        %6045 = vmatpush.bf16.msra.mxu0 %v5844
        %6046 = vmatpush.bf16.msra.mxu0 %v5840
        %6047 = vmatmul.bf16.gmra.mxu0 %v5230
        %v6048 = vpop.f32.mrf.mxu0
        %v6049 = vadd.f32 %v6036, %v6048
        %v6050 = vpop.f32.mrf.mxu0
        %6051 = vdwg.mxu0
        %6052 = vmatpush.bf16.msra.mxu0 %v5773
        %6053 = vmatpush.bf16.msra.mxu0 %v5769
        %6054 = vmatpush.bf16.msra.mxu0 %v5765
        %6055 = vmatpush.bf16.msra.mxu0 %v5761
        %6056 = vmatpush.bf16.msra.mxu0 %v5757
        %6057 = vmatpush.bf16.msra.mxu0 %v5753
        %6058 = vmatpush.bf16.msra.mxu0 %v5749
        %6059 = vmatpush.bf16.msra.mxu0 %v5745
        %6060 = vmatmul.bf16.gmra.mxu0 %v5227
        %v6061 = vpop.f32.mrf.mxu0
        %v6062 = vadd.f32 0.0, %v6061
        %v6063 = vpop.f32.mrf.mxu0
        %6064 = vdwg.mxu0
        %6065 = vmatpush.bf16.msra.mxu0 %v5805
        %6066 = vmatpush.bf16.msra.mxu0 %v5801
        %6067 = vmatpush.bf16.msra.mxu0 %v5797
        %6068 = vmatpush.bf16.msra.mxu0 %v5793
        %6069 = vmatpush.bf16.msra.mxu0 %v5789
        %6070 = vmatpush.bf16.msra.mxu0 %v5785
        %6071 = vmatpush.bf16.msra.mxu0 %v5781
        %6072 = vmatpush.bf16.msra.mxu0 %v5777
        %6073 = vmatmul.bf16.gmra.mxu0 %v5228
        %v6074 = vpop.f32.mrf.mxu0
        %v6075 = vadd.f32 %v6062, %v6074
        %v6076 = vpop.f32.mrf.mxu0
        %6077 = vdwg.mxu0
        %6078 = vmatpush.bf16.msra.mxu0 %v5837
        %6079 = vmatpush.bf16.msra.mxu0 %v5833
        %6080 = vmatpush.bf16.msra.mxu0 %v5829
        %6081 = vmatpush.bf16.msra.mxu0 %v5825
        %6082 = vmatpush.bf16.msra.mxu0 %v5821
        %6083 = vmatpush.bf16.msra.mxu0 %v5817
        %6084 = vmatpush.bf16.msra.mxu0 %v5813
        %6085 = vmatpush.bf16.msra.mxu0 %v5809
        %6086 = vmatmul.bf16.gmra.mxu0 %v5229
        %v6087 = vpop.f32.mrf.mxu0
        %v6088 = vadd.f32 %v6075, %v6087
        %v6089 = vpop.f32.mrf.mxu0
        %6090 = vdwg.mxu0
        %6091 = vmatpush.bf16.msra.mxu0 %v5869
        %6092 = vmatpush.bf16.msra.mxu0 %v5865
        %6093 = vmatpush.bf16.msra.mxu0 %v5861
        %6094 = vmatpush.bf16.msra.mxu0 %v5857
        %6095 = vmatpush.bf16.msra.mxu0 %v5853
        %6096 = vmatpush.bf16.msra.mxu0 %v5849
        %6097 = vmatpush.bf16.msra.mxu0 %v5845
        %6098 = vmatpush.bf16.msra.mxu0 %v5841
        %6099 = vmatmul.bf16.gmra.mxu0 %v5230
        %v6100 = vpop.f32.mrf.mxu0
        %v6101 = vadd.f32 %v6088, %v6100
        %v6102 = vpop.f32.mrf.mxu0
        %6103 = vdwg.mxu0
        %6104 = vmatpush.bf16.msra.mxu0 %v5774
        %6105 = vmatpush.bf16.msra.mxu0 %v5770
        %6106 = vmatpush.bf16.msra.mxu0 %v5766
        %6107 = vmatpush.bf16.msra.mxu0 %v5762
        %6108 = vmatpush.bf16.msra.mxu0 %v5758
        %6109 = vmatpush.bf16.msra.mxu0 %v5754
        %6110 = vmatpush.bf16.msra.mxu0 %v5750
        %6111 = vmatpush.bf16.msra.mxu0 %v5746
        %6112 = vmatmul.bf16.gmra.mxu0 %v5227
        %v6113 = vpop.f32.mrf.mxu0
        %v6114 = vadd.f32 0.0, %v6113
        %v6115 = vpop.f32.mrf.mxu0
        %6116 = vdwg.mxu0
        %6117 = vmatpush.bf16.msra.mxu0 %v5806
        %6118 = vmatpush.bf16.msra.mxu0 %v5802
        %6119 = vmatpush.bf16.msra.mxu0 %v5798
        %6120 = vmatpush.bf16.msra.mxu0 %v5794
        %6121 = vmatpush.bf16.msra.mxu0 %v5790
        %6122 = vmatpush.bf16.msra.mxu0 %v5786
        %6123 = vmatpush.bf16.msra.mxu0 %v5782
        %6124 = vmatpush.bf16.msra.mxu0 %v5778
        %6125 = vmatmul.bf16.gmra.mxu0 %v5228
        %v6126 = vpop.f32.mrf.mxu0
        %v6127 = vadd.f32 %v6114, %v6126
        %v6128 = vpop.f32.mrf.mxu0
        %6129 = vdwg.mxu0
        %6130 = vmatpush.bf16.msra.mxu0 %v5838
        %6131 = vmatpush.bf16.msra.mxu0 %v5834
        %6132 = vmatpush.bf16.msra.mxu0 %v5830
        %6133 = vmatpush.bf16.msra.mxu0 %v5826
        %6134 = vmatpush.bf16.msra.mxu0 %v5822
        %6135 = vmatpush.bf16.msra.mxu0 %v5818
        %6136 = vmatpush.bf16.msra.mxu0 %v5814
        %6137 = vmatpush.bf16.msra.mxu0 %v5810
        %6138 = vmatmul.bf16.gmra.mxu0 %v5229
        %v6139 = vpop.f32.mrf.mxu0
        %v6140 = vadd.f32 %v6127, %v6139
        %v6141 = vpop.f32.mrf.mxu0
        %6142 = vdwg.mxu0
        %6143 = vmatpush.bf16.msra.mxu0 %v5870
        %6144 = vmatpush.bf16.msra.mxu0 %v5866
        %6145 = vmatpush.bf16.msra.mxu0 %v5862
        %6146 = vmatpush.bf16.msra.mxu0 %v5858
        %6147 = vmatpush.bf16.msra.mxu0 %v5854
        %6148 = vmatpush.bf16.msra.mxu0 %v5850
        %6149 = vmatpush.bf16.msra.mxu0 %v5846
        %6150 = vmatpush.bf16.msra.mxu0 %v5842
        %6151 = vmatmul.bf16.gmra.mxu0 %v5230
        %v6152 = vpop.f32.mrf.mxu0
        %v6153 = vadd.f32 %v6140, %v6152
        %v6154 = vpop.f32.mrf.mxu0
        %6155 = vdwg.mxu0
        %6156 = vmatpush.bf16.msra.mxu0 %v5775
        %6157 = vmatpush.bf16.msra.mxu0 %v5771
        %6158 = vmatpush.bf16.msra.mxu0 %v5767
        %6159 = vmatpush.bf16.msra.mxu0 %v5763
        %6160 = vmatpush.bf16.msra.mxu0 %v5759
        %6161 = vmatpush.bf16.msra.mxu0 %v5755
        %6162 = vmatpush.bf16.msra.mxu0 %v5751
        %6163 = vmatpush.bf16.msra.mxu0 %v5747
        %6164 = vmatmul.bf16.gmra.mxu0 %v5227
        %v6165 = vpop.f32.mrf.mxu0
        %v6166 = vadd.f32 0.0, %v6165
        %v6167 = vpop.f32.mrf.mxu0
        %6168 = vdwg.mxu0
        %6169 = vmatpush.bf16.msra.mxu0 %v5807
        %6170 = vmatpush.bf16.msra.mxu0 %v5803
        %6171 = vmatpush.bf16.msra.mxu0 %v5799
        %6172 = vmatpush.bf16.msra.mxu0 %v5795
        %6173 = vmatpush.bf16.msra.mxu0 %v5791
        %6174 = vmatpush.bf16.msra.mxu0 %v5787
        %6175 = vmatpush.bf16.msra.mxu0 %v5783
        %6176 = vmatpush.bf16.msra.mxu0 %v5779
        %6177 = vmatmul.bf16.gmra.mxu0 %v5228
        %v6178 = vpop.f32.mrf.mxu0
        %v6179 = vadd.f32 %v6166, %v6178
        %v6180 = vpop.f32.mrf.mxu0
        %6181 = vdwg.mxu0
        %6182 = vmatpush.bf16.msra.mxu0 %v5839
        %6183 = vmatpush.bf16.msra.mxu0 %v5835
        %6184 = vmatpush.bf16.msra.mxu0 %v5831
        %6185 = vmatpush.bf16.msra.mxu0 %v5827
        %6186 = vmatpush.bf16.msra.mxu0 %v5823
        %6187 = vmatpush.bf16.msra.mxu0 %v5819
        %6188 = vmatpush.bf16.msra.mxu0 %v5815
        %6189 = vmatpush.bf16.msra.mxu0 %v5811
        %6190 = vmatmul.bf16.gmra.mxu0 %v5229
        %v6191 = vpop.f32.mrf.mxu0
        %v6192 = vadd.f32 %v6179, %v6191
        %v6193 = vpop.f32.mrf.mxu0
        %6194 = vdwg.mxu0
        %6195 = vmatpush.bf16.msra.mxu0 %v5871
        %6196 = vmatpush.bf16.msra.mxu0 %v5867
        %6197 = vmatpush.bf16.msra.mxu0 %v5863
        %6198 = vmatpush.bf16.msra.mxu0 %v5859
        %6199 = vmatpush.bf16.msra.mxu0 %v5855
        %6200 = vmatpush.bf16.msra.mxu0 %v5851
        %6201 = vmatpush.bf16.msra.mxu0 %v5847
        %6202 = vmatpush.bf16.msra.mxu0 %v5843
        %6203 = vmatmul.bf16.gmra.mxu0 %v5230
        %v6204 = vpop.f32.mrf.mxu0
        %v6205 = vadd.f32 %v6192, %v6204
        %v6206 = vpop.f32.mrf.mxu0
        %6207 = vdwg.mxu0
        %v6208 = vadd.f32 %v5223, %v6049
        %v6209 = vadd.f32 %v5224, %v6101
        %v6210 = vadd.f32 %v5225, %v6153
        %v6211 = vadd.f32 %v5226, %v6205
        %v6212 = vld [vmem:[#allocation13] sm:$0xf]
        %v6214 = vperm.slane %v6212, 0
        %v6215 = vperm.slane %v6212, 1
        %v6216 = vperm.slane %v6212, 2
        %v6217 = vperm.slane %v6212, 3
        %v6222 = vadd.f32 %v6208, %v6214
        %v6223 = vadd.f32 %v6209, %v6215
        %v6224 = vadd.f32 %v6210, %v6216
        %v6225 = vadd.f32 %v6211, %v6217
        %v6226 = vrot.slane %v6222, 4
        %v6227 = vadd.f32 %v6222, %v6226
        %v6228 = vrot.slane %v6227, 2
        %v6229 = vadd.f32 %v6227, %v6228
        %v6230 = vrot.slane %v6229, 1
        %v6231 = vadd.f32 %v6229, %v6230
        %v6232 = vrot.slane %v6223, 4
        %v6233 = vadd.f32 %v6223, %v6232
        %v6234 = vrot.slane %v6233, 2
        %v6235 = vadd.f32 %v6233, %v6234
        %v6236 = vrot.slane %v6235, 1
        %v6237 = vadd.f32 %v6235, %v6236
        %v6238 = vrot.slane %v6224, 4
        %v6239 = vadd.f32 %v6224, %v6238
        %v6240 = vrot.slane %v6239, 2
        %v6241 = vadd.f32 %v6239, %v6240
        %v6242 = vrot.slane %v6241, 1
        %v6243 = vadd.f32 %v6241, %v6242
        %v6244 = vrot.slane %v6225, 4
        %v6245 = vadd.f32 %v6225, %v6244
        %v6246 = vrot.slane %v6245, 2
        %v6247 = vadd.f32 %v6245, %v6246
        %v6248 = vrot.slane %v6247, 1
        %v6249 = vadd.f32 %v6247, %v6248
        %v6250 = vadd.f32 %v6231, %v6243
        %v6251 = vadd.f32 %v6237, %v6249
        %v6252 = vadd.f32 %v6250, %v6251
        %6253 = vrot.lane.b32.xlu0 %v6252, 64
        %v6254 = vpop.permute.xlu0 %6253
        %v6255 = vadd.f32 %v6252, %v6254
        %v6256 = vmul.f32 %v6255, 0.015625
        %v6257 = vperm.slane %v6256, 0
        %v6258 = vsub.f32 %v6222, %v6257
        %v6259 = vsub.f32 %v6223, %v6257
        %v6260 = vsub.f32 %v6224, %v6257
        %v6261 = vsub.f32 %v6225, %v6257
        %v6262 = vmul.f32 %v6258, %v6258
        %v6263 = vmul.f32 %v6259, %v6259
        %v6264 = vmul.f32 %v6260, %v6260
        %v6265 = vmul.f32 %v6261, %v6261
        %v6266 = vrot.slane %v6262, 4
        %v6267 = vadd.f32 %v6262, %v6266
        %v6268 = vrot.slane %v6267, 2
        %v6269 = vadd.f32 %v6267, %v6268
        %v6270 = vrot.slane %v6269, 1
        %v6271 = vadd.f32 %v6269, %v6270
        %v6272 = vrot.slane %v6263, 4
        %v6273 = vadd.f32 %v6263, %v6272
        %v6274 = vrot.slane %v6273, 2
        %v6275 = vadd.f32 %v6273, %v6274
        %v6276 = vrot.slane %v6275, 1
        %v6277 = vadd.f32 %v6275, %v6276
        %v6278 = vrot.slane %v6264, 4
        %v6279 = vadd.f32 %v6264, %v6278
        %v6280 = vrot.slane %v6279, 2
        %v6281 = vadd.f32 %v6279, %v6280
        %v6282 = vrot.slane %v6281, 1
        %v6283 = vadd.f32 %v6281, %v6282
        %v6284 = vrot.slane %v6265, 4
        %v6285 = vadd.f32 %v6265, %v6284
        %v6286 = vrot.slane %v6285, 2
        %v6287 = vadd.f32 %v6285, %v6286
        %v6288 = vrot.slane %v6287, 1
        %v6289 = vadd.f32 %v6287, %v6288
        %v6290 = vadd.f32 %v6271, %v6283
        %v6291 = vadd.f32 %v6277, %v6289
        %v6292 = vadd.f32 %v6290, %v6291
        %6293 = vrot.lane.b32.xlu0 %v6292, 64
        %v6294 = vpop.permute.xlu0 %6293
        %v6295 = vadd.f32 %v6292, %v6294
        %v6296 = vmul.f32 %v6295, 0.015625
        %v6297 = vadd.f32 %v6296, 1e-05
        %v6298 = vrsqrt.pop %v6297
        %v6299 = vmul.f32 %v6298, %v6297
        %v6300 = vmul.f32 %v6299, %v6298
        %v6301 = vmul.f32 0.5, %v6300
        %v6302 = vsub.f32 1.5, %v6301
        %v6303 = vmul.f32 %v6298, %v6302
        %vm6304 = vweird.f32 %v6297
        %vm6305 = vweird.f32 %v6298
        %vm6306 = vmor %vm6304, %vm6305
        %v6307 = vsel %vm6306, %v6298, %v6303
        %v6308 = vperm.slane %v6307, 0
        %v6309 = vmul.f32 %v6258, %v6308
        %v6310 = vmul.f32 %v6259, %v6308
        %v6311 = vmul.f32 %v6260, %v6308
        %v6312 = vmul.f32 %v6261, %v6308
        %v6313 = vld [vmem:[#allocation14] sm:$0xff]
        %v6314 = vld [vmem:[#allocation14 + $0x8] sm:$0xff]
        %v6315 = vld [vmem:[#allocation14 + $0x10] sm:$0xff]
        %v6316 = vld [vmem:[#allocation14 + $0x18] sm:$0xff]
        %v6317 = vmul.f32 %v6309, %v6313
        %v6318 = vmul.f32 %v6310, %v6314
        %v6319 = vmul.f32 %v6311, %v6315
        %v6320 = vmul.f32 %v6312, %v6316
        %v6321 = vld [vmem:[#allocation16] sm:$0xff]
        %v6322 = vld [vmem:[#allocation16 + $0x8] sm:$0xff]
        %v6323 = vld [vmem:[#allocation16 + $0x10] sm:$0xff]
        %v6324 = vld [vmem:[#allocation16 + $0x18] sm:$0xff]
        %v6325 = vadd.f32 %v6317, %v6321
        %v6326 = vadd.f32 %v6318, %v6322
        %v6327 = vadd.f32 %v6319, %v6323
        %v6328 = vadd.f32 %v6320, %v6324
        %vm6329 = vcmp.ge.f32.partialorder %v6325, 0.0
        %vm6330 = vcmp.ge.f32.partialorder %v6326, 0.0
        %vm6331 = vcmp.ge.f32.partialorder %v6327, 0.0
        %vm6332 = vcmp.ge.f32.partialorder %v6328, 0.0
        %v6333 = vmul.f32 %v6325, 0.01
        %v6334 = vmul.f32 %v6326, 0.01
        %v6335 = vmul.f32 %v6327, 0.01
        %v6336 = vmul.f32 %v6328, 0.01
        %v6337 = vsel %vm6329, %v6325, %v6333
        %v6338 = vsel %vm6330, %v6326, %v6334
        %v6339 = vsel %vm6331, %v6327, %v6335
        %v6340 = vsel %vm6332, %v6328, %v6336
        %v6341 = vpack.c.bf16 %v6337, %v6337
        %v6342 = vpack.c.bf16 %v6338, %v6338
        %v6343 = vpack.c.bf16 %v6339, %v6339
        %v6344 = vpack.c.bf16 %v6340, %v6340
        %v6345 = vld [vmem:[#allocation17] sm:$0xff]
        %v6346 = vld [vmem:[#allocation17 + $0x8] sm:$0xff]
        %v6347 = vld [vmem:[#allocation17 + $0x10] sm:$0xff]
        %v6348 = vld [vmem:[#allocation17 + $0x18] sm:$0xff]
        %v6349 = vld [vmem:[#allocation17 + $0x20] sm:$0xff]
        %v6350 = vld [vmem:[#allocation17 + $0x28] sm:$0xff]
        %v6351 = vld [vmem:[#allocation17 + $0x30] sm:$0xff]
        %v6352 = vld [vmem:[#allocation17 + $0x38] sm:$0xff]
        %v6353 = vld [vmem:[#allocation17 + $0x40] sm:$0xff]
        %v6354 = vld [vmem:[#allocation17 + $0x48] sm:$0xff]
        %v6355 = vld [vmem:[#allocation17 + $0x50] sm:$0xff]
        %v6356 = vld [vmem:[#allocation17 + $0x58] sm:$0xff]
        %v6357 = vld [vmem:[#allocation17 + $0x60] sm:$0xff]
        %v6358 = vld [vmem:[#allocation17 + $0x68] sm:$0xff]
        %v6359 = vld [vmem:[#allocation17 + $0x70] sm:$0xff]
        %v6360 = vld [vmem:[#allocation17 + $0x78] sm:$0xff]
        %v6361 = vld [vmem:[#allocation17 + $0x80] sm:$0xff]
        %v6362 = vld [vmem:[#allocation17 + $0x88] sm:$0xff]
        %v6363 = vld [vmem:[#allocation17 + $0x90] sm:$0xff]
        %v6364 = vld [vmem:[#allocation17 + $0x98] sm:$0xff]
        %v6365 = vld [vmem:[#allocation17 + $0xa0] sm:$0xff]
        %v6366 = vld [vmem:[#allocation17 + $0xa8] sm:$0xff]
        %v6367 = vld [vmem:[#allocation17 + $0xb0] sm:$0xff]
        %v6368 = vld [vmem:[#allocation17 + $0xb8] sm:$0xff]
        %v6369 = vld [vmem:[#allocation17 + $0xc0] sm:$0xff]
        %v6370 = vld [vmem:[#allocation17 + $0xc8] sm:$0xff]
        %v6371 = vld [vmem:[#allocation17 + $0xd0] sm:$0xff]
        %v6372 = vld [vmem:[#allocation17 + $0xd8] sm:$0xff]
        %v6373 = vld [vmem:[#allocation17 + $0xe0] sm:$0xff]
        %v6374 = vld [vmem:[#allocation17 + $0xe8] sm:$0xff]
        %v6375 = vld [vmem:[#allocation17 + $0xf0] sm:$0xff]
        %v6376 = vld [vmem:[#allocation17 + $0xf8] sm:$0xff]
        %v6377 = vld [vmem:[#allocation17 + $0x100] sm:$0xff]
        %v6378 = vld [vmem:[#allocation17 + $0x108] sm:$0xff]
        %v6379 = vld [vmem:[#allocation17 + $0x110] sm:$0xff]
        %v6380 = vld [vmem:[#allocation17 + $0x118] sm:$0xff]
        %v6381 = vld [vmem:[#allocation17 + $0x120] sm:$0xff]
        %v6382 = vld [vmem:[#allocation17 + $0x128] sm:$0xff]
        %v6383 = vld [vmem:[#allocation17 + $0x130] sm:$0xff]
        %v6384 = vld [vmem:[#allocation17 + $0x138] sm:$0xff]
        %v6385 = vld [vmem:[#allocation17 + $0x140] sm:$0xff]
        %v6386 = vld [vmem:[#allocation17 + $0x148] sm:$0xff]
        %v6387 = vld [vmem:[#allocation17 + $0x150] sm:$0xff]
        %v6388 = vld [vmem:[#allocation17 + $0x158] sm:$0xff]
        %v6389 = vld [vmem:[#allocation17 + $0x160] sm:$0xff]
        %v6390 = vld [vmem:[#allocation17 + $0x168] sm:$0xff]
        %v6391 = vld [vmem:[#allocation17 + $0x170] sm:$0xff]
        %v6392 = vld [vmem:[#allocation17 + $0x178] sm:$0xff]
        %v6393 = vld [vmem:[#allocation17 + $0x180] sm:$0xff]
        %v6394 = vld [vmem:[#allocation17 + $0x188] sm:$0xff]
        %v6395 = vld [vmem:[#allocation17 + $0x190] sm:$0xff]
        %v6396 = vld [vmem:[#allocation17 + $0x198] sm:$0xff]
        %v6397 = vld [vmem:[#allocation17 + $0x1a0] sm:$0xff]
        %v6398 = vld [vmem:[#allocation17 + $0x1a8] sm:$0xff]
        %v6399 = vld [vmem:[#allocation17 + $0x1b0] sm:$0xff]
        %v6400 = vld [vmem:[#allocation17 + $0x1b8] sm:$0xff]
        %v6401 = vld [vmem:[#allocation17 + $0x1c0] sm:$0xff]
        %v6402 = vld [vmem:[#allocation17 + $0x1c8] sm:$0xff]
        %v6403 = vld [vmem:[#allocation17 + $0x1d0] sm:$0xff]
        %v6404 = vld [vmem:[#allocation17 + $0x1d8] sm:$0xff]
        %v6405 = vld [vmem:[#allocation17 + $0x1e0] sm:$0xff]
        %v6406 = vld [vmem:[#allocation17 + $0x1e8] sm:$0xff]
        %v6407 = vld [vmem:[#allocation17 + $0x1f0] sm:$0xff]
        %v6408 = vld [vmem:[#allocation17 + $0x1f8] sm:$0xff]
        %v6473 = vunpack.c.l.b16 %v6345
        %v6474 = vunpack.c.h.b16 %v6345
        %v6475 = vunpack.c.l.b16 %v6346
        %v6476 = vunpack.c.h.b16 %v6346
        %v6477 = vunpack.c.l.b16 %v6347
        %v6478 = vunpack.c.h.b16 %v6347
        %v6479 = vunpack.c.l.b16 %v6348
        %v6480 = vunpack.c.h.b16 %v6348
        %v6481 = vunpack.c.l.b16 %v6349
        %v6482 = vunpack.c.h.b16 %v6349
        %v6483 = vunpack.c.l.b16 %v6350
        %v6484 = vunpack.c.h.b16 %v6350
        %v6485 = vunpack.c.l.b16 %v6351
        %v6486 = vunpack.c.h.b16 %v6351
        %v6487 = vunpack.c.l.b16 %v6352
        %v6488 = vunpack.c.h.b16 %v6352
        %v6489 = vunpack.c.l.b16 %v6353
        %v6490 = vunpack.c.h.b16 %v6353
        %v6491 = vunpack.c.l.b16 %v6354
        %v6492 = vunpack.c.h.b16 %v6354
        %v6493 = vunpack.c.l.b16 %v6355
        %v6494 = vunpack.c.h.b16 %v6355
        %v6495 = vunpack.c.l.b16 %v6356
        %v6496 = vunpack.c.h.b16 %v6356
        %v6497 = vunpack.c.l.b16 %v6357
        %v6498 = vunpack.c.h.b16 %v6357
        %v6499 = vunpack.c.l.b16 %v6358
        %v6500 = vunpack.c.h.b16 %v6358
        %v6501 = vunpack.c.l.b16 %v6359
        %v6502 = vunpack.c.h.b16 %v6359
        %v6503 = vunpack.c.l.b16 %v6360
        %v6504 = vunpack.c.h.b16 %v6360
        %v6505 = vunpack.c.l.b16 %v6361
        %v6506 = vunpack.c.h.b16 %v6361
        %v6507 = vunpack.c.l.b16 %v6362
        %v6508 = vunpack.c.h.b16 %v6362
        %v6509 = vunpack.c.l.b16 %v6363
        %v6510 = vunpack.c.h.b16 %v6363
        %v6511 = vunpack.c.l.b16 %v6364
        %v6512 = vunpack.c.h.b16 %v6364
        %v6513 = vunpack.c.l.b16 %v6365
        %v6514 = vunpack.c.h.b16 %v6365
        %v6515 = vunpack.c.l.b16 %v6366
        %v6516 = vunpack.c.h.b16 %v6366
        %v6517 = vunpack.c.l.b16 %v6367
        %v6518 = vunpack.c.h.b16 %v6367
        %v6519 = vunpack.c.l.b16 %v6368
        %v6520 = vunpack.c.h.b16 %v6368
        %v6521 = vunpack.c.l.b16 %v6369
        %v6522 = vunpack.c.h.b16 %v6369
        %v6523 = vunpack.c.l.b16 %v6370
        %v6524 = vunpack.c.h.b16 %v6370
        %v6525 = vunpack.c.l.b16 %v6371
        %v6526 = vunpack.c.h.b16 %v6371
        %v6527 = vunpack.c.l.b16 %v6372
        %v6528 = vunpack.c.h.b16 %v6372
        %v6529 = vunpack.c.l.b16 %v6373
        %v6530 = vunpack.c.h.b16 %v6373
        %v6531 = vunpack.c.l.b16 %v6374
        %v6532 = vunpack.c.h.b16 %v6374
        %v6533 = vunpack.c.l.b16 %v6375
        %v6534 = vunpack.c.h.b16 %v6375
        %v6535 = vunpack.c.l.b16 %v6376
        %v6536 = vunpack.c.h.b16 %v6376
        %v6537 = vunpack.c.l.b16 %v6377
        %v6538 = vunpack.c.h.b16 %v6377
        %v6539 = vunpack.c.l.b16 %v6378
        %v6540 = vunpack.c.h.b16 %v6378
        %v6541 = vunpack.c.l.b16 %v6379
        %v6542 = vunpack.c.h.b16 %v6379
        %v6543 = vunpack.c.l.b16 %v6380
        %v6544 = vunpack.c.h.b16 %v6380
        %v6545 = vunpack.c.l.b16 %v6381
        %v6546 = vunpack.c.h.b16 %v6381
        %v6547 = vunpack.c.l.b16 %v6382
        %v6548 = vunpack.c.h.b16 %v6382
        %v6549 = vunpack.c.l.b16 %v6383
        %v6550 = vunpack.c.h.b16 %v6383
        %v6551 = vunpack.c.l.b16 %v6384
        %v6552 = vunpack.c.h.b16 %v6384
        %v6553 = vunpack.c.l.b16 %v6385
        %v6554 = vunpack.c.h.b16 %v6385
        %v6555 = vunpack.c.l.b16 %v6386
        %v6556 = vunpack.c.h.b16 %v6386
        %v6557 = vunpack.c.l.b16 %v6387
        %v6558 = vunpack.c.h.b16 %v6387
        %v6559 = vunpack.c.l.b16 %v6388
        %v6560 = vunpack.c.h.b16 %v6388
        %v6561 = vunpack.c.l.b16 %v6389
        %v6562 = vunpack.c.h.b16 %v6389
        %v6563 = vunpack.c.l.b16 %v6390
        %v6564 = vunpack.c.h.b16 %v6390
        %v6565 = vunpack.c.l.b16 %v6391
        %v6566 = vunpack.c.h.b16 %v6391
        %v6567 = vunpack.c.l.b16 %v6392
        %v6568 = vunpack.c.h.b16 %v6392
        %v6569 = vunpack.c.l.b16 %v6393
        %v6570 = vunpack.c.h.b16 %v6393
        %v6571 = vunpack.c.l.b16 %v6394
        %v6572 = vunpack.c.h.b16 %v6394
        %v6573 = vunpack.c.l.b16 %v6395
        %v6574 = vunpack.c.h.b16 %v6395
        %v6575 = vunpack.c.l.b16 %v6396
        %v6576 = vunpack.c.h.b16 %v6396
        %v6577 = vunpack.c.l.b16 %v6397
        %v6578 = vunpack.c.h.b16 %v6397
        %v6579 = vunpack.c.l.b16 %v6398
        %v6580 = vunpack.c.h.b16 %v6398
        %v6581 = vunpack.c.l.b16 %v6399
        %v6582 = vunpack.c.h.b16 %v6399
        %v6583 = vunpack.c.l.b16 %v6400
        %v6584 = vunpack.c.h.b16 %v6400
        %v6585 = vunpack.c.l.b16 %v6401
        %v6586 = vunpack.c.h.b16 %v6401
        %v6587 = vunpack.c.l.b16 %v6402
        %v6588 = vunpack.c.h.b16 %v6402
        %v6589 = vunpack.c.l.b16 %v6403
        %v6590 = vunpack.c.h.b16 %v6403
        %v6591 = vunpack.c.l.b16 %v6404
        %v6592 = vunpack.c.h.b16 %v6404
        %v6593 = vunpack.c.l.b16 %v6405
        %v6594 = vunpack.c.h.b16 %v6405
        %v6595 = vunpack.c.l.b16 %v6406
        %v6596 = vunpack.c.h.b16 %v6406
        %v6597 = vunpack.c.l.b16 %v6407
        %v6598 = vunpack.c.h.b16 %v6407
        %v6599 = vunpack.c.l.b16 %v6408
        %v6600 = vunpack.c.h.b16 %v6408
        %v6601 = vpack.c.b16 %v6475, %v6473
        %v6602 = vpack.c.b16 %v6476, %v6474
        %v6603 = vpack.c.b16 %v6479, %v6477
        %v6604 = vpack.c.b16 %v6480, %v6478
        %v6605 = vpack.c.b16 %v6483, %v6481
        %v6606 = vpack.c.b16 %v6484, %v6482
        %v6607 = vpack.c.b16 %v6487, %v6485
        %v6608 = vpack.c.b16 %v6488, %v6486
        %v6609 = vpack.c.b16 %v6491, %v6489
        %v6610 = vpack.c.b16 %v6492, %v6490
        %v6611 = vpack.c.b16 %v6495, %v6493
        %v6612 = vpack.c.b16 %v6496, %v6494
        %v6613 = vpack.c.b16 %v6499, %v6497
        %v6614 = vpack.c.b16 %v6500, %v6498
        %v6615 = vpack.c.b16 %v6503, %v6501
        %v6616 = vpack.c.b16 %v6504, %v6502
        %v6617 = vpack.c.b16 %v6507, %v6505
        %v6618 = vpack.c.b16 %v6508, %v6506
        %v6619 = vpack.c.b16 %v6511, %v6509
        %v6620 = vpack.c.b16 %v6512, %v6510
        %v6621 = vpack.c.b16 %v6515, %v6513
        %v6622 = vpack.c.b16 %v6516, %v6514
        %v6623 = vpack.c.b16 %v6519, %v6517
        %v6624 = vpack.c.b16 %v6520, %v6518
        %v6625 = vpack.c.b16 %v6523, %v6521
        %v6626 = vpack.c.b16 %v6524, %v6522
        %v6627 = vpack.c.b16 %v6527, %v6525
        %v6628 = vpack.c.b16 %v6528, %v6526
        %v6629 = vpack.c.b16 %v6531, %v6529
        %v6630 = vpack.c.b16 %v6532, %v6530
        %v6631 = vpack.c.b16 %v6535, %v6533
        %v6632 = vpack.c.b16 %v6536, %v6534
        %v6633 = vpack.c.b16 %v6539, %v6537
        %v6634 = vpack.c.b16 %v6540, %v6538
        %v6635 = vpack.c.b16 %v6543, %v6541
        %v6636 = vpack.c.b16 %v6544, %v6542
        %v6637 = vpack.c.b16 %v6547, %v6545
        %v6638 = vpack.c.b16 %v6548, %v6546
        %v6639 = vpack.c.b16 %v6551, %v6549
        %v6640 = vpack.c.b16 %v6552, %v6550
        %v6641 = vpack.c.b16 %v6555, %v6553
        %v6642 = vpack.c.b16 %v6556, %v6554
        %v6643 = vpack.c.b16 %v6559, %v6557
        %v6644 = vpack.c.b16 %v6560, %v6558
        %v6645 = vpack.c.b16 %v6563, %v6561
        %v6646 = vpack.c.b16 %v6564, %v6562
        %v6647 = vpack.c.b16 %v6567, %v6565
        %v6648 = vpack.c.b16 %v6568, %v6566
        %v6649 = vpack.c.b16 %v6571, %v6569
        %v6650 = vpack.c.b16 %v6572, %v6570
        %v6651 = vpack.c.b16 %v6575, %v6573
        %v6652 = vpack.c.b16 %v6576, %v6574
        %v6653 = vpack.c.b16 %v6579, %v6577
        %v6654 = vpack.c.b16 %v6580, %v6578
        %v6655 = vpack.c.b16 %v6583, %v6581
        %v6656 = vpack.c.b16 %v6584, %v6582
        %v6657 = vpack.c.b16 %v6587, %v6585
        %v6658 = vpack.c.b16 %v6588, %v6586
        %v6659 = vpack.c.b16 %v6591, %v6589
        %v6660 = vpack.c.b16 %v6592, %v6590
        %v6661 = vpack.c.b16 %v6595, %v6593
        %v6662 = vpack.c.b16 %v6596, %v6594
        %v6663 = vpack.c.b16 %v6599, %v6597
        %v6664 = vpack.c.b16 %v6600, %v6598
        %6729 = vmatpush.bf16.msra.mxu0 %v6615
        %6730 = vmatpush.bf16.msra.mxu0 %v6613
        %6731 = vmatpush.bf16.msra.mxu0 %v6611
        %6732 = vmatpush.bf16.msra.mxu0 %v6609
        %6733 = vmatpush.bf16.msra.mxu0 %v6607
        %6734 = vmatpush.bf16.msra.mxu0 %v6605
        %6735 = vmatpush.bf16.msra.mxu0 %v6603
        %6736 = vmatpush.bf16.msra.mxu0 %v6601
        %6737 = vmatmul.bf16.gmra.mxu0 %v6341
        %v6738 = vpop.f32.mrf.mxu0
        %v6739 = vadd.f32 0.0, %v6738
        %v6740 = vpop.f32.mrf.mxu0
        %6741 = vdwg.mxu0
        %6742 = vmatpush.bf16.msra.mxu0 %v6631
        %6743 = vmatpush.bf16.msra.mxu0 %v6629
        %6744 = vmatpush.bf16.msra.mxu0 %v6627
        %6745 = vmatpush.bf16.msra.mxu0 %v6625
        %6746 = vmatpush.bf16.msra.mxu0 %v6623
        %6747 = vmatpush.bf16.msra.mxu0 %v6621
        %6748 = vmatpush.bf16.msra.mxu0 %v6619
        %6749 = vmatpush.bf16.msra.mxu0 %v6617
        %6750 = vmatmul.bf16.gmra.mxu0 %v6342
        %v6751 = vpop.f32.mrf.mxu0
        %v6752 = vadd.f32 %v6739, %v6751
        %v6753 = vpop.f32.mrf.mxu0
        %6754 = vdwg.mxu0
        %6755 = vmatpush.bf16.msra.mxu0 %v6647
        %6756 = vmatpush.bf16.msra.mxu0 %v6645
        %6757 = vmatpush.bf16.msra.mxu0 %v6643
        %6758 = vmatpush.bf16.msra.mxu0 %v6641
        %6759 = vmatpush.bf16.msra.mxu0 %v6639
        %6760 = vmatpush.bf16.msra.mxu0 %v6637
        %6761 = vmatpush.bf16.msra.mxu0 %v6635
        %6762 = vmatpush.bf16.msra.mxu0 %v6633
        %6763 = vmatmul.bf16.gmra.mxu0 %v6343
        %v6764 = vpop.f32.mrf.mxu0
        %v6765 = vadd.f32 %v6752, %v6764
        %v6766 = vpop.f32.mrf.mxu0
        %6767 = vdwg.mxu0
        %6768 = vmatpush.bf16.msra.mxu0 %v6663
        %6769 = vmatpush.bf16.msra.mxu0 %v6661
        %6770 = vmatpush.bf16.msra.mxu0 %v6659
        %6771 = vmatpush.bf16.msra.mxu0 %v6657
        %6772 = vmatpush.bf16.msra.mxu0 %v6655
        %6773 = vmatpush.bf16.msra.mxu0 %v6653
        %6774 = vmatpush.bf16.msra.mxu0 %v6651
        %6775 = vmatpush.bf16.msra.mxu0 %v6649
        %6776 = vmatmul.bf16.gmra.mxu0 %v6344
        %v6777 = vpop.f32.mrf.mxu0
        %v6778 = vadd.f32 %v6765, %v6777
        %v6779 = vpop.f32.mrf.mxu0
        %6780 = vdwg.mxu0
        %6781 = vmatpush.bf16.msra.mxu0 %v6616
        %6782 = vmatpush.bf16.msra.mxu0 %v6614
        %6783 = vmatpush.bf16.msra.mxu0 %v6612
        %6784 = vmatpush.bf16.msra.mxu0 %v6610
        %6785 = vmatpush.bf16.msra.mxu0 %v6608
        %6786 = vmatpush.bf16.msra.mxu0 %v6606
        %6787 = vmatpush.bf16.msra.mxu0 %v6604
        %6788 = vmatpush.bf16.msra.mxu0 %v6602
        %6789 = vmatmul.bf16.gmra.mxu0 %v6341
        %v6790 = vpop.f32.mrf.mxu0
        %v6791 = vadd.f32 0.0, %v6790
        %v6792 = vpop.f32.mrf.mxu0
        %6793 = vdwg.mxu0
        %6794 = vmatpush.bf16.msra.mxu0 %v6632
        %6795 = vmatpush.bf16.msra.mxu0 %v6630
        %6796 = vmatpush.bf16.msra.mxu0 %v6628
        %6797 = vmatpush.bf16.msra.mxu0 %v6626
        %6798 = vmatpush.bf16.msra.mxu0 %v6624
        %6799 = vmatpush.bf16.msra.mxu0 %v6622
        %6800 = vmatpush.bf16.msra.mxu0 %v6620
        %6801 = vmatpush.bf16.msra.mxu0 %v6618
        %6802 = vmatmul.bf16.gmra.mxu0 %v6342
        %v6803 = vpop.f32.mrf.mxu0
        %v6804 = vadd.f32 %v6791, %v6803
        %v6805 = vpop.f32.mrf.mxu0
        %6806 = vdwg.mxu0
        %6807 = vmatpush.bf16.msra.mxu0 %v6648
        %6808 = vmatpush.bf16.msra.mxu0 %v6646
        %6809 = vmatpush.bf16.msra.mxu0 %v6644
        %6810 = vmatpush.bf16.msra.mxu0 %v6642
        %6811 = vmatpush.bf16.msra.mxu0 %v6640
        %6812 = vmatpush.bf16.msra.mxu0 %v6638
        %6813 = vmatpush.bf16.msra.mxu0 %v6636
        %6814 = vmatpush.bf16.msra.mxu0 %v6634
        %6815 = vmatmul.bf16.gmra.mxu0 %v6343
        %v6816 = vpop.f32.mrf.mxu0
        %v6817 = vadd.f32 %v6804, %v6816
        %v6818 = vpop.f32.mrf.mxu0
        %6819 = vdwg.mxu0
        %6820 = vmatpush.bf16.msra.mxu0 %v6664
        %6821 = vmatpush.bf16.msra.mxu0 %v6662
        %6822 = vmatpush.bf16.msra.mxu0 %v6660
        %6823 = vmatpush.bf16.msra.mxu0 %v6658
        %6824 = vmatpush.bf16.msra.mxu0 %v6656
        %6825 = vmatpush.bf16.msra.mxu0 %v6654
        %6826 = vmatpush.bf16.msra.mxu0 %v6652
        %6827 = vmatpush.bf16.msra.mxu0 %v6650
        %6828 = vmatmul.bf16.gmra.mxu0 %v6344
        %v6829 = vpop.f32.mrf.mxu0
        %v6830 = vadd.f32 %v6817, %v6829
        %v6831 = vpop.f32.mrf.mxu0
        %6832 = vdwg.mxu0
        %v6833 = vld [vmem:[#allocation19] sm:$0x1]
        %v6834 = vadd.f32 %v6833, %v6778
        %6836 = vst [vmem:[#allocation1] sm:$0xff] %v6778
        %s6837 = scalar_lea.vmem [#allocation1], 1
        %v6838 = vld [vmem:[%s6837] ss:$9 sm:$0xff]
        %6839 = vrot.lane.b32.xlu0 %v6838, 96
        %v6840 = vpop.permute.xlu0 %6839
        %v6842 = vadd.f32 %v6834, %v6840
        %6843 = vst [vmem:[#allocation1] sm:$0xff] %v6778
        %s6844 = scalar_lea.vmem [#allocation1], 2
        %v6845 = vld [vmem:[%s6844] ss:$9 sm:$0xff]
        %6846 = vrot.lane.b32.xlu0 %v6845, 64
        %v6847 = vpop.permute.xlu0 %6846
        %v6849 = vadd.f32 %v6842, %v6847
        %6850 = vst [vmem:[#allocation1] sm:$0xff] %v6778
        %s6851 = scalar_lea.vmem [#allocation1], 3
        %v6852 = vld [vmem:[%s6851] ss:$9 sm:$0xff]
        %6853 = vrot.lane.b32.xlu0 %v6852, 32
        %v6854 = vpop.permute.xlu0 %6853
        %v6856 = vadd.f32 %v6849, %v6854
        %6858 = vst [vmem:[#allocation1] sm:$0xff] %v6830
        %s6859 = scalar_lea.vmem [#allocation1], 4
        %v6860 = vld [vmem:[%s6859] ss:$9 sm:$0xff]
        %v6862 = vadd.f32 %v6856, %v6860
        %6863 = vst [vmem:[#allocation1] sm:$0xff] %v6830
        %s6864 = scalar_lea.vmem [#allocation1], 5
        %v6865 = vld [vmem:[%s6864] ss:$9 sm:$0xff]
        %6866 = vrot.lane.b32.xlu0 %v6865, 96
        %v6867 = vpop.permute.xlu0 %6866
        %v6869 = vadd.f32 %v6862, %v6867
        %6870 = vst [vmem:[#allocation1] sm:$0xff] %v6830
        %s6871 = scalar_lea.vmem [#allocation1], 6
        %v6872 = vld [vmem:[%s6871] ss:$9 sm:$0xff]
        %6873 = vrot.lane.b32.xlu0 %v6872, 64
        %v6874 = vpop.permute.xlu0 %6873
        %v6876 = vadd.f32 %v6869, %v6874
        %6877 = vst [vmem:[#allocation1] sm:$0xff] %v6830
        %s6878 = scalar_lea.vmem [#allocation1], 7
        %v6879 = vld [vmem:[%s6878] ss:$9 sm:$0xff]
        %6880 = vrot.lane.b32.xlu0 %v6879, 32
        %v6881 = vpop.permute.xlu0 %6880
        %v6883 = vadd.f32 %v6876, %v6881
        %v6884 = vtanh.pop %v6883
        %vm6885 = vcmask 253952
        %6886 = vst.msk [vmem:[%s560] sm:$0x1] %vm6885, %v6884
        %s6887 = sand.u32 %s277, 1
        %s6888 = scalar_lea.sflag [#allocation4], %s6887
        %s6889 = sand.u32 %s277, 1
        %s6890 = scalar_lea.vmem [#allocation20], %s6889
        // Predicated region
        $region109: #{tpu_custom_call.1} parent=63 // pred_check
          %p6891 = pneg %p287
        $region110: #{tpu_custom_call.1} parent=63 // pred_check_branch
          %6893 = sbr.rel (%p6891) target = $region112
        $region111: #{tpu_custom_call.1} parent=63 // pred_region
          %6895 = vsyncadd %s6888, 0
          %s6896 = scalar_lea.hbm %s11, %s33
          %s6898 = sshll.u32 %s6890, 4
          %s6899 = int_to_ptr.vmem [resolvable:$true] %s6898
          %s6900 = sshll.u32 %s6896, 4
          %s6901 = int_to_ptr.hbm [resolvable:$true] %s6900
          %6903 = dma.vmem_to_hbm [thread:$0]  %s6899, 16, %s6901, %s6888
        $region112: #{tpu_custom_call.1} parent=63 // pred_fallthru
          _
      $region64: #{tpu_custom_call.1} parent=5 // pred_fallthru
        _
      %p6904 = scmp.le.s32.totalorder 2, %s28
      // Predicated region
      $region113: #{tpu_custom_call.1} parent=5 // pred_check
        %p6905 = pneg %p6904
      $region114: #{tpu_custom_call.1} parent=5 // pred_check_branch
        %6907 = sbr.rel (%p6905) target = $region116
      $region115: #{tpu_custom_call.1} parent=5 // pred_region
        %s6908 = ssub.s32 %s28, 2
        // Predicated region
        $region117: #{tpu_custom_call.1} parent=115 // pred_check
          %p6909 = pneg %p293
        $region118: #{tpu_custom_call.1} parent=115 // pred_check_branch
          %6911 = sbr.rel (%p6909) target = $region120
        $region119: #{tpu_custom_call.1} parent=115 // pred_region
          %s6912 = sand.u32 %s278, 1
          %s6913 = scalar_lea.sflag [#allocation4], %s6912
          %s6914 = sand.u32 %s278, 1
          %s6915 = scalar_lea.vmem [#allocation20], %s6914
          %6917 = dma.done %s6913, 16
        $region120: #{tpu_custom_call.1} parent=115 // pred_fallthru
          _
      $region116: #{tpu_custom_call.1} parent=5 // pred_fallthru
        _
    $region6: #{tpu_custom_call.1} parent=1 // loop_footer
      %s32 = sadd.s32 1, %s28
    $region7: #{tpu_custom_call.1} parent=1 // loop_footer_branch
      %27 = sbr.rel target = $region3
    $region8: #{tpu_custom_call.1} parent=1 // loop_exit
      _
    %6918 = vsyncpa [#allocation3], 1
    %s6919 = scalar_lea.sflag [#allocation3], 1
    %6920 = vsyncpa %s6919, 1
    %6921 = vsyncpa [#allocation6], 1
    %6922 = vsyncpa [#allocation9], 1
    %6923 = vsyncpa [#allocation12], 1
    %6924 = vsyncpa [#allocation15], 1
    %6925 = vsyncpa [#allocation18], 1
    %6926 = vsyncpa [#allocation4], 1
    %s6927 = scalar_lea.sflag [#allocation4], 1
    %6928 = vsyncpa %s6927, 1

</llo_original>
